<compile_context>
chip_gen: v7x
topology: tpu7x:2x2x1
jax: 0.10.0
libtpu: 0.0.40
codegen_flags: <defaults>
</compile_context>

<pallas_src>
import functools

import numpy as np
import jax
import jax.numpy as jnp
from jax.experimental import pallas as pl
from jax.experimental.pallas import tpu as pltpu


# ----------------------------------------------------------------------------
# Packed-weight-blob layout (shared by host packing and the kernel)
# ----------------------------------------------------------------------------
def _up8(n):
    return ((n + 7) // 8) * 8


def _blob_layout(input_size, hidden_size, num_layers):
    """Row offsets (all multiples of 8) of each parameter inside the packed
    (rows, 4H) weight blob."""
    W4 = 4 * hidden_size
    off = 0
    layout = {"layers": []}
    layout["l0_wih"] = off          # (input_size, 4H): layer-0 input weight
    off += _up8(input_size)
    for l in range(num_layers):
        ent = {}
        if l > 0:
            ent["wih_big"] = off    # (4H, 4H): rows [3H,4H) = W_ih_l.T, rest 0
            off += W4
        ent["whh_big"] = off        # (4H, 4H): rows [3H,4H) = W_hh_l.T, rest 0
        off += W4
        ent["bias"] = off           # 1 row: b_ih + b_hh
        off += 8
        layout["layers"].append(ent)
    layout["fc_w"] = off            # (4H, 4H): rows [3H,4H), cols [0,O) = fc_w.T
    off += W4
    layout["fc_b"] = off            # 1 row: cols [0,O) = fc_b
    off += 8
    layout["rows"] = off
    return layout


# ----------------------------------------------------------------------------
# Parameter init (PyTorch layout / PyTorch-style uniform init) + packing
# ----------------------------------------------------------------------------
def init_params(key, input_size, hidden_size, output_size, num_layers):
    stdv = 1.0 / np.sqrt(hidden_size)
    params = {"layers": []}
    for layer in range(num_layers):
        d_in = input_size if layer == 0 else hidden_size
        key, k1, k2, k3, k4 = jax.random.split(key, 5)
        params["layers"].append(
            {
                "w_ih": jax.random.uniform(k1, (4 * hidden_size, d_in), jnp.float32, -stdv, stdv),
                "w_hh": jax.random.uniform(k2, (4 * hidden_size, hidden_size), jnp.float32, -stdv, stdv),
                "b_ih": jax.random.uniform(k3, (4 * hidden_size,), jnp.float32, -stdv, stdv),
                "b_hh": jax.random.uniform(k4, (4 * hidden_size,), jnp.float32, -stdv, stdv),
            }
        )
    key, k5, k6 = jax.random.split(key, 3)
    params["fc_w"] = jax.random.uniform(k5, (output_size, hidden_size), jnp.float32, -stdv, stdv)
    params["fc_b"] = jax.random.uniform(k6, (output_size,), jnp.float32, -stdv, stdv)
    return params


def pack_params(params, input_size, hidden_size, output_size, num_layers):
    """Pack every weight/bias (and the FC head) into one (rows, 4H) f32 blob."""
    H, O = hidden_size, output_size
    W4 = 4 * H
    layout = _blob_layout(input_size, H, num_layers)
    blob = np.zeros((layout["rows"], W4), np.float32)
    for l, lp in enumerate(params["layers"]):
        w_ih = np.asarray(lp["w_ih"])            # (4H, d_in)  PyTorch layout
        w_hh = np.asarray(lp["w_hh"])            # (4H, H)
        b = np.asarray(lp["b_ih"]) + np.asarray(lp["b_hh"])
        ent = layout["layers"][l]
        if l == 0:
            blob[layout["l0_wih"]:layout["l0_wih"] + input_size, :] = w_ih.T
        else:
            # Zero-padded "big" input weight: only rows [3H,4H) are nonzero,
            # matching the valid lanes of the full-width hidden state.
            blob[ent["wih_big"] + 3 * H:ent["wih_big"] + 4 * H, :] = w_ih.T
        blob[ent["whh_big"] + 3 * H:ent["whh_big"] + 4 * H, :] = w_hh.T
        blob[ent["bias"], :] = b
    fc_w = np.asarray(params["fc_w"])            # (O, H)
    fc_b = np.asarray(params["fc_b"])            # (O,)
    blob[layout["fc_w"] + 3 * H:layout["fc_w"] + 4 * H, :O] = fc_w.T
    blob[layout["fc_b"], :O] = fc_b
    return jnp.asarray(blob)


# ----------------------------------------------------------------------------
# Fused Pallas kernel: all LSTM layers + every timestep + FC in one invocation
# ----------------------------------------------------------------------------
def _make_fused_kernel(T, B, D_in, H, O, L, layout):
    W4 = 4 * H

    def kernel(x_ref, w_ref, out_ref):
        f32 = jnp.float32

        # ---- hoisted layer-0 input projection: one matmul for all T steps ----
        x = x_ref[...].astype(f32)                                    # (B*T, D_in)
        r = layout["l0_wih"]
        w_ih0 = w_ref[r:r + D_in, :]                                  # (D_in, 4H)
        rb0 = layout["layers"][0]["bias"]
        b0 = w_ref[rb0:rb0 + 1, :]                                    # (1, 4H)
        xproj = jnp.dot(x, w_ih0, preferred_element_type=f32) + b0    # (B*T, 4H)
        xproj = xproj.reshape(B, T, W4)

        # ---- per-layer weights (zero-padded to 4H rows, loaded once) ----
        w_hh, w_ih, bias = [], [], []
        for l, ent in enumerate(layout["layers"]):
            r = ent["whh_big"]
            w_hh.append(w_ref[r:r + W4, :])                           # (4H, 4H)
            if l == 0:
                w_ih.append(None)
            else:
                r = ent["wih_big"]
                w_ih.append(w_ref[r:r + W4, :])                       # (4H, 4H)
            r = ent["bias"]
            bias.append(w_ref[r:r + 1, :])                            # (1, 4H)

        # Full-width state: h valid at lanes [3H,4H), c valid at lanes [H,2H).
        h = [jnp.zeros((B, W4), f32) for _ in range(L)]
        c = [jnp.zeros((B, W4), f32) for _ in range(L)]

        # Lane mask for the i*g segment (hoisted out of the loops).
        lane = jax.lax.broadcasted_iota(jnp.int32, (B, W4), 1)
        is_ig_lane = lane < H

        # ---- time/layer wavefront, fully unrolled (T, L small and static) ----
        for t in range(T):
            for l in range(L):
                if l == 0:
                    pre = xproj[:, t, :]                              # (B, 4H), incl. bias
                else:
                    # Per-step input projection from the lower layer's h at the
                    # SAME timestep (wavefront dependency, not all-T).
                    pre = jnp.dot(h[l - 1], w_ih[l],
                                  preferred_element_type=f32) + bias[l]
                gates = pre + jnp.dot(h[l], w_hh[l],
                                      preferred_element_type=f32)     # (B, 4H)

                # Gate lanes: [ i | f | g | o ], each H wide.
                sig = jax.nn.sigmoid(gates)          # full-width EUP
                tnh = jnp.tanh(gates)                # full-width EUP

                # i (lanes [0,H) of sig) * g (lanes [2H,3H) of tnh): a 2H
                # rotation is exactly half the width, so its direction is
                # irrelevant.  Mask so only the i*g segment survives.
                ig = jnp.where(is_ig_lane,
                               sig * pltpu.roll(tnh, 2 * H, axis=1), 0.0)
                # Align i*g (lanes [0,H)) with c (lanes [H,2H)).  Summing the
                # two opposite rotations (H and 3H = -H mod 4H) is rotation-
                # direction-proof: exactly one of them lands the masked i*g on
                # [H,2H); the other contributes zeros there.
                ig_aligned = (pltpu.roll(ig, H, axis=1) +
                              pltpu.roll(ig, 3 * H, axis=1))
                c[l] = sig * c[l] + ig_aligned                        # valid [H,2H)
                tc = jnp.tanh(c[l])
                h[l] = sig * pltpu.roll(tc, 2 * H, axis=1)            # valid [3H,4H)

        # ---- final Linear on the last layer's last hidden state ----
        r = layout["fc_w"]
        fc_w = w_ref[r:r + W4, :]                                     # cols [0,O) used
        r = layout["fc_b"]
        fc_b = w_ref[r:r + 1, :]
        res = jnp.dot(h[L - 1], fc_w, preferred_element_type=f32) + fc_b
        out_ref[...] = res[:, :O].astype(out_ref.dtype)

    return kernel


# ----------------------------------------------------------------------------
# Forward wrapper
# ----------------------------------------------------------------------------
@functools.partial(jax.jit, static_argnames=("hidden_size", "output_size", "num_layers"))
def lstm_kf_forward(blob, x, *, hidden_size, output_size, num_layers):
    """x: (B, T, input_size) batch_first, like the PyTorch module."""
    B, T, D_in = x.shape
    H, O, L = hidden_size, output_size, num_layers
    layout = _blob_layout(D_in, H, L)

    call = pl.pallas_call(
        _make_fused_kernel(T, B, D_in, H, O, L, layout),
        out_shape=jax.ShapeDtypeStruct((B, O), jnp.float32),
        # Whole-array operands, explicitly pinned in VMEM (footprint << 1 MiB).
        in_specs=[
            pl.BlockSpec(memory_space=pltpu.MemorySpace.VMEM),
            pl.BlockSpec(memory_space=pltpu.MemorySpace.VMEM),
        ],
        out_specs=pl.BlockSpec(memory_space=pltpu.MemorySpace.VMEM),
    )
    # Free reshape (no transpose): the kernel consumes batch-major (B*T, D_in).
    return call(x.reshape(B * T, D_in).astype(jnp.float32), blob)


# ----------------------------------------------------------------------------
# Pure-JAX reference (for correctness check)
# ----------------------------------------------------------------------------
def lstm_kf_reference(params, x):
    B = x.shape[0]
    H = params["layers"][0]["w_hh"].shape[1]
    seq = x.astype(jnp.float32)
    for lp in params["layers"]:
        w_ih_t = lp["w_ih"].T
        w_hh_t = lp["w_hh"].T
        b = lp["b_ih"] + lp["b_hh"]

        def step(carry, x_t, w_ih_t=w_ih_t, w_hh_t=w_hh_t, b=b):
            h, c = carry
            g = x_t @ w_ih_t + h @ w_hh_t + b
            i = jax.nn.sigmoid(g[:, 0 * H:1 * H])
            f = jax.nn.sigmoid(g[:, 1 * H:2 * H])
            gg = jnp.tanh(g[:, 2 * H:3 * H])
            o = jax.nn.sigmoid(g[:, 3 * H:4 * H])
            c = f * c + i * gg
            h = o * jnp.tanh(c)
            return (h, c), h

        init = (jnp.zeros((B, H), jnp.float32), jnp.zeros((B, H), jnp.float32))
        (_, _), ys = jax.lax.scan(step, init, jnp.swapaxes(seq, 0, 1))
        seq = jnp.swapaxes(ys, 0, 1)
    return seq[:, -1, :] @ params["fc_w"].T + params["fc_b"]


# ----------------------------------------------------------------------------
if __name__ == "__main__":
    # Small shapes consistent with LSTM_KF's forward.
    batch, seq_len = 2, 8
    input_size, hidden_size, output_size, num_layers = 16, 32, 4, 2
    dropout = 0.0  # eval-mode semantics: dropout is a no-op in inference

    key = jax.random.PRNGKey(0)
    key, pkey, xkey = jax.random.split(key, 3)
    params = init_params(pkey, input_size, hidden_size, output_size, num_layers)
    blob = pack_params(params, input_size, hidden_size, output_size, num_layers)
    x = jax.random.normal(xkey, (batch, seq_len, input_size), jnp.float32)

    out = lstm_kf_forward(
        blob, x,
        hidden_size=hidden_size, output_size=output_size, num_layers=num_layers,
    )
    out = jax.block_until_ready(out)

    ref = jax.block_until_ready(lstm_kf_reference(params, x))
    assert out.shape == (batch, output_size)
    np.testing.assert_allclose(np.asarray(out), np.asarray(ref), rtol=1e-4, atol=2e-5)

    print("KERNEL_OK")
</pallas_src>

<mosaic_0001>
module attributes {stable_mosaic.version = 11 : i64} {
  func.func @kernel(%arg0: memref<16x16xf32, #tpu.memory_space<vmem>>, %arg1: memref<552x128xf32, #tpu.memory_space<vmem>>, %arg2: memref<2x4xf32, #tpu.memory_space<vmem>>) attributes {dimension_semantics = [], scalar_prefetch = 0 : i64, scratch_operands = 0 : i64, tpu.core_type = #tpu.core_type<tc>} {
    %c0 = arith.constant 0 : index
    %c0_0 = arith.constant 0 : index
    %0 = vector.load %arg0[%c0, %c0_0] : memref<16x16xf32, #tpu.memory_space<vmem>>, vector<16x16xf32>
    %c0_1 = arith.constant 0 : index
    %c0_2 = arith.constant 0 : index
    %1 = vector.load %arg1[%c0_1, %c0_2] : memref<552x128xf32, #tpu.memory_space<vmem>>, vector<16x128xf32>
    %c144 = arith.constant 144 : index
    %c0_3 = arith.constant 0 : index
    %2 = vector.load %arg1[%c144, %c0_3] : memref<552x128xf32, #tpu.memory_space<vmem>>, vector<1x128xf32>
    %cst = arith.constant dense<0.000000e+00> : vector<16x128xf32>
    %3 = tpu.matmul %0, %1, %cst {dimension_numbers = #tpu.dot_dimension_numbers<[1], [0], [0], [1], [0, 0, 1, 1], [], []>} : vector<16x16xf32>, vector<16x128xf32>, vector<16x128xf32> -> vector<16x128xf32>
    %4 = vector.broadcast %2 : vector<1x128xf32> to vector<16x128xf32>
    %5 = arith.addf %3, %4 : vector<16x128xf32>
    %6 = vector.shape_cast %5 : vector<16x128xf32> to vector<2x8x128xf32>
    %c16 = arith.constant 16 : index
    %c0_4 = arith.constant 0 : index
    %7 = vector.load %arg1[%c16, %c0_4] : memref<552x128xf32, #tpu.memory_space<vmem>>, vector<128x128xf32>
    %c280 = arith.constant 280 : index
    %c0_5 = arith.constant 0 : index
    %8 = vector.load %arg1[%c280, %c0_5] : memref<552x128xf32, #tpu.memory_space<vmem>>, vector<128x128xf32>
    %c152 = arith.constant 152 : index
    %c0_6 = arith.constant 0 : index
    %9 = vector.load %arg1[%c152, %c0_6] : memref<552x128xf32, #tpu.memory_space<vmem>>, vector<128x128xf32>
    %c408 = arith.constant 408 : index
    %c0_7 = arith.constant 0 : index
    %10 = vector.load %arg1[%c408, %c0_7] : memref<552x128xf32, #tpu.memory_space<vmem>>, vector<1x128xf32>
    %cst_8 = arith.constant 0.000000e+00 : f32
    %11 = vector.broadcast %cst_8 : f32 to vector<2x128xf32>
    %cst_9 = arith.constant 0.000000e+00 : f32
    %12 = vector.broadcast %cst_9 : f32 to vector<2x128xf32>
    %cst_10 = arith.constant 0.000000e+00 : f32
    %13 = vector.broadcast %cst_10 : f32 to vector<2x128xf32>
    %cst_11 = arith.constant 0.000000e+00 : f32
    %14 = vector.broadcast %cst_11 : f32 to vector<2x128xf32>
    %15 = tpu.iota {dimensions = array<i32: 1>} : vector<2x128xi32>
    %c32_i32 = arith.constant 32 : i32
    %16 = vector.broadcast %c32_i32 : i32 to vector<2x128xi32>
    %17 = arith.cmpi slt, %15, %16 : vector<2x128xi32>
    %18 = vector.extract_strided_slice %6 {offsets = [0, 0, 0], sizes = [2, 1, 128], strides = [1, 1, 1]} : vector<2x8x128xf32> to vector<2x1x128xf32>
    %19 = vector.shape_cast %18 : vector<2x1x128xf32> to vector<2x128xf32>
    %cst_12 = arith.constant dense<0.000000e+00> : vector<2x128xf32>
    %20 = tpu.matmul %11, %7, %cst_12 {dimension_numbers = #tpu.dot_dimension_numbers<[1], [0], [0], [1], [0, 0, 1, 1], [], []>} : vector<2x128xf32>, vector<128x128xf32>, vector<2x128xf32> -> vector<2x128xf32>
    %21 = arith.addf %19, %20 : vector<2x128xf32>
    %22 = arith.negf %21 : vector<2x128xf32>
    %23 = math.exp %22 : vector<2x128xf32>
    %cst_13 = arith.constant 1.000000e+00 : f32
    %24 = vector.broadcast %cst_13 : f32 to vector<2x128xf32>
    %25 = arith.addf %24, %23 : vector<2x128xf32>
    %26 = arith.divf %24, %25 : vector<2x128xf32>
    %27 = math.tanh %21 : vector<2x128xf32>
    %c64_i32 = arith.constant 64 : i32
    %28 = tpu.dynamic_rotate %27 by %c64_i32 dim 1 : vector<2x128xf32>, i32 -> vector<2x128xf32>
    %29 = arith.mulf %26, %28 : vector<2x128xf32>
    %cst_14 = arith.constant 0.000000e+00 : f32
    %30 = vector.broadcast %cst_14 : f32 to vector<2x128xf32>
    %31 = arith.select %17, %29, %30 : vector<2x128xi1>, vector<2x128xf32>
    %c32_i32_15 = arith.constant 32 : i32
    %32 = tpu.dynamic_rotate %31 by %c32_i32_15 dim 1 : vector<2x128xf32>, i32 -> vector<2x128xf32>
    %c96_i32 = arith.constant 96 : i32
    %33 = tpu.dynamic_rotate %31 by %c96_i32 dim 1 : vector<2x128xf32>, i32 -> vector<2x128xf32>
    %34 = arith.addf %32, %33 : vector<2x128xf32>
    %35 = arith.mulf %26, %13 : vector<2x128xf32>
    %36 = arith.addf %35, %34 : vector<2x128xf32>
    %37 = math.tanh %36 : vector<2x128xf32>
    %c64_i32_16 = arith.constant 64 : i32
    %38 = tpu.dynamic_rotate %37 by %c64_i32_16 dim 1 : vector<2x128xf32>, i32 -> vector<2x128xf32>
    %39 = arith.mulf %26, %38 : vector<2x128xf32>
    %cst_17 = arith.constant dense<0.000000e+00> : vector<2x128xf32>
    %40 = tpu.matmul %39, %9, %cst_17 {dimension_numbers = #tpu.dot_dimension_numbers<[1], [0], [0], [1], [0, 0, 1, 1], [], []>} : vector<2x128xf32>, vector<128x128xf32>, vector<2x128xf32> -> vector<2x128xf32>
    %41 = vector.broadcast %10 : vector<1x128xf32> to vector<2x128xf32>
    %42 = arith.addf %40, %41 : vector<2x128xf32>
    %cst_18 = arith.constant dense<0.000000e+00> : vector<2x128xf32>
    %43 = tpu.matmul %12, %8, %cst_18 {dimension_numbers = #tpu.dot_dimension_numbers<[1], [0], [0], [1], [0, 0, 1, 1], [], []>} : vector<2x128xf32>, vector<128x128xf32>, vector<2x128xf32> -> vector<2x128xf32>
    %44 = arith.addf %42, %43 : vector<2x128xf32>
    %45 = arith.negf %44 : vector<2x128xf32>
    %46 = math.exp %45 : vector<2x128xf32>
    %cst_19 = arith.constant 1.000000e+00 : f32
    %47 = vector.broadcast %cst_19 : f32 to vector<2x128xf32>
    %48 = arith.addf %47, %46 : vector<2x128xf32>
    %49 = arith.divf %47, %48 : vector<2x128xf32>
    %50 = math.tanh %44 : vector<2x128xf32>
    %c64_i32_20 = arith.constant 64 : i32
    %51 = tpu.dynamic_rotate %50 by %c64_i32_20 dim 1 : vector<2x128xf32>, i32 -> vector<2x128xf32>
    %52 = arith.mulf %49, %51 : vector<2x128xf32>
    %cst_21 = arith.constant 0.000000e+00 : f32
    %53 = vector.broadcast %cst_21 : f32 to vector<2x128xf32>
    %54 = arith.select %17, %52, %53 : vector<2x128xi1>, vector<2x128xf32>
    %c32_i32_22 = arith.constant 32 : i32
    %55 = tpu.dynamic_rotate %54 by %c32_i32_22 dim 1 : vector<2x128xf32>, i32 -> vector<2x128xf32>
    %c96_i32_23 = arith.constant 96 : i32
    %56 = tpu.dynamic_rotate %54 by %c96_i32_23 dim 1 : vector<2x128xf32>, i32 -> vector<2x128xf32>
    %57 = arith.addf %55, %56 : vector<2x128xf32>
    %58 = arith.mulf %49, %14 : vector<2x128xf32>
    %59 = arith.addf %58, %57 : vector<2x128xf32>
    %60 = math.tanh %59 : vector<2x128xf32>
    %c64_i32_24 = arith.constant 64 : i32
    %61 = tpu.dynamic_rotate %60 by %c64_i32_24 dim 1 : vector<2x128xf32>, i32 -> vector<2x128xf32>
    %62 = arith.mulf %49, %61 : vector<2x128xf32>
    %63 = vector.extract_strided_slice %6 {offsets = [0, 1, 0], sizes = [2, 1, 128], strides = [1, 1, 1]} : vector<2x8x128xf32> to vector<2x1x128xf32>
    %64 = vector.shape_cast %63 : vector<2x1x128xf32> to vector<2x128xf32>
    %cst_25 = arith.constant dense<0.000000e+00> : vector<2x128xf32>
    %65 = tpu.matmul %39, %7, %cst_25 {dimension_numbers = #tpu.dot_dimension_numbers<[1], [0], [0], [1], [0, 0, 1, 1], [], []>} : vector<2x128xf32>, vector<128x128xf32>, vector<2x128xf32> -> vector<2x128xf32>
    %66 = arith.addf %64, %65 : vector<2x128xf32>
    %67 = arith.negf %66 : vector<2x128xf32>
    %68 = math.exp %67 : vector<2x128xf32>
    %cst_26 = arith.constant 1.000000e+00 : f32
    %69 = vector.broadcast %cst_26 : f32 to vector<2x128xf32>
    %70 = arith.addf %69, %68 : vector<2x128xf32>
    %71 = arith.divf %69, %70 : vector<2x128xf32>
    %72 = math.tanh %66 : vector<2x128xf32>
    %c64_i32_27 = arith.constant 64 : i32
    %73 = tpu.dynamic_rotate %72 by %c64_i32_27 dim 1 : vector<2x128xf32>, i32 -> vector<2x128xf32>
    %74 = arith.mulf %71, %73 : vector<2x128xf32>
    %cst_28 = arith.constant 0.000000e+00 : f32
    %75 = vector.broadcast %cst_28 : f32 to vector<2x128xf32>
    %76 = arith.select %17, %74, %75 : vector<2x128xi1>, vector<2x128xf32>
    %c32_i32_29 = arith.constant 32 : i32
    %77 = tpu.dynamic_rotate %76 by %c32_i32_29 dim 1 : vector<2x128xf32>, i32 -> vector<2x128xf32>
    %c96_i32_30 = arith.constant 96 : i32
    %78 = tpu.dynamic_rotate %76 by %c96_i32_30 dim 1 : vector<2x128xf32>, i32 -> vector<2x128xf32>
    %79 = arith.addf %77, %78 : vector<2x128xf32>
    %80 = arith.mulf %71, %36 : vector<2x128xf32>
    %81 = arith.addf %80, %79 : vector<2x128xf32>
    %82 = math.tanh %81 : vector<2x128xf32>
    %c64_i32_31 = arith.constant 64 : i32
    %83 = tpu.dynamic_rotate %82 by %c64_i32_31 dim 1 : vector<2x128xf32>, i32 -> vector<2x128xf32>
    %84 = arith.mulf %71, %83 : vector<2x128xf32>
    %cst_32 = arith.constant dense<0.000000e+00> : vector<2x128xf32>
    %85 = tpu.matmul %84, %9, %cst_32 {dimension_numbers = #tpu.dot_dimension_numbers<[1], [0], [0], [1], [0, 0, 1, 1], [], []>} : vector<2x128xf32>, vector<128x128xf32>, vector<2x128xf32> -> vector<2x128xf32>
    %86 = vector.broadcast %10 : vector<1x128xf32> to vector<2x128xf32>
    %87 = arith.addf %85, %86 : vector<2x128xf32>
    %cst_33 = arith.constant dense<0.000000e+00> : vector<2x128xf32>
    %88 = tpu.matmul %62, %8, %cst_33 {dimension_numbers = #tpu.dot_dimension_numbers<[1], [0], [0], [1], [0, 0, 1, 1], [], []>} : vector<2x128xf32>, vector<128x128xf32>, vector<2x128xf32> -> vector<2x128xf32>
    %89 = arith.addf %87, %88 : vector<2x128xf32>
    %90 = arith.negf %89 : vector<2x128xf32>
    %91 = math.exp %90 : vector<2x128xf32>
    %cst_34 = arith.constant 1.000000e+00 : f32
    %92 = vector.broadcast %cst_34 : f32 to vector<2x128xf32>
    %93 = arith.addf %92, %91 : vector<2x128xf32>
    %94 = arith.divf %92, %93 : vector<2x128xf32>
    %95 = math.tanh %89 : vector<2x128xf32>
    %c64_i32_35 = arith.constant 64 : i32
    %96 = tpu.dynamic_rotate %95 by %c64_i32_35 dim 1 : vector<2x128xf32>, i32 -> vector<2x128xf32>
    %97 = arith.mulf %94, %96 : vector<2x128xf32>
    %cst_36 = arith.constant 0.000000e+00 : f32
    %98 = vector.broadcast %cst_36 : f32 to vector<2x128xf32>
    %99 = arith.select %17, %97, %98 : vector<2x128xi1>, vector<2x128xf32>
    %c32_i32_37 = arith.constant 32 : i32
    %100 = tpu.dynamic_rotate %99 by %c32_i32_37 dim 1 : vector<2x128xf32>, i32 -> vector<2x128xf32>
    %c96_i32_38 = arith.constant 96 : i32
    %101 = tpu.dynamic_rotate %99 by %c96_i32_38 dim 1 : vector<2x128xf32>, i32 -> vector<2x128xf32>
    %102 = arith.addf %100, %101 : vector<2x128xf32>
    %103 = arith.mulf %94, %59 : vector<2x128xf32>
    %104 = arith.addf %103, %102 : vector<2x128xf32>
    %105 = math.tanh %104 : vector<2x128xf32>
    %c64_i32_39 = arith.constant 64 : i32
    %106 = tpu.dynamic_rotate %105 by %c64_i32_39 dim 1 : vector<2x128xf32>, i32 -> vector<2x128xf32>
    %107 = arith.mulf %94, %106 : vector<2x128xf32>
    %108 = vector.extract_strided_slice %6 {offsets = [0, 2, 0], sizes = [2, 1, 128], strides = [1, 1, 1]} : vector<2x8x128xf32> to vector<2x1x128xf32>
    %109 = vector.shape_cast %108 : vector<2x1x128xf32> to vector<2x128xf32>
    %cst_40 = arith.constant dense<0.000000e+00> : vector<2x128xf32>
    %110 = tpu.matmul %84, %7, %cst_40 {dimension_numbers = #tpu.dot_dimension_numbers<[1], [0], [0], [1], [0, 0, 1, 1], [], []>} : vector<2x128xf32>, vector<128x128xf32>, vector<2x128xf32> -> vector<2x128xf32>
    %111 = arith.addf %109, %110 : vector<2x128xf32>
    %112 = arith.negf %111 : vector<2x128xf32>
    %113 = math.exp %112 : vector<2x128xf32>
    %cst_41 = arith.constant 1.000000e+00 : f32
    %114 = vector.broadcast %cst_41 : f32 to vector<2x128xf32>
    %115 = arith.addf %114, %113 : vector<2x128xf32>
    %116 = arith.divf %114, %115 : vector<2x128xf32>
    %117 = math.tanh %111 : vector<2x128xf32>
    %c64_i32_42 = arith.constant 64 : i32
    %118 = tpu.dynamic_rotate %117 by %c64_i32_42 dim 1 : vector<2x128xf32>, i32 -> vector<2x128xf32>
    %119 = arith.mulf %116, %118 : vector<2x128xf32>
    %cst_43 = arith.constant 0.000000e+00 : f32
    %120 = vector.broadcast %cst_43 : f32 to vector<2x128xf32>
    %121 = arith.select %17, %119, %120 : vector<2x128xi1>, vector<2x128xf32>
    %c32_i32_44 = arith.constant 32 : i32
    %122 = tpu.dynamic_rotate %121 by %c32_i32_44 dim 1 : vector<2x128xf32>, i32 -> vector<2x128xf32>
    %c96_i32_45 = arith.constant 96 : i32
    %123 = tpu.dynamic_rotate %121 by %c96_i32_45 dim 1 : vector<2x128xf32>, i32 -> vector<2x128xf32>
    %124 = arith.addf %122, %123 : vector<2x128xf32>
    %125 = arith.mulf %116, %81 : vector<2x128xf32>
    %126 = arith.addf %125, %124 : vector<2x128xf32>
    %127 = math.tanh %126 : vector<2x128xf32>
    %c64_i32_46 = arith.constant 64 : i32
    %128 = tpu.dynamic_rotate %127 by %c64_i32_46 dim 1 : vector<2x128xf32>, i32 -> vector<2x128xf32>
    %129 = arith.mulf %116, %128 : vector<2x128xf32>
    %cst_47 = arith.constant dense<0.000000e+00> : vector<2x128xf32>
    %130 = tpu.matmul %129, %9, %cst_47 {dimension_numbers = #tpu.dot_dimension_numbers<[1], [0], [0], [1], [0, 0, 1, 1], [], []>} : vector<2x128xf32>, vector<128x128xf32>, vector<2x128xf32> -> vector<2x128xf32>
    %131 = vector.broadcast %10 : vector<1x128xf32> to vector<2x128xf32>
    %132 = arith.addf %130, %131 : vector<2x128xf32>
    %cst_48 = arith.constant dense<0.000000e+00> : vector<2x128xf32>
    %133 = tpu.matmul %107, %8, %cst_48 {dimension_numbers = #tpu.dot_dimension_numbers<[1], [0], [0], [1], [0, 0, 1, 1], [], []>} : vector<2x128xf32>, vector<128x128xf32>, vector<2x128xf32> -> vector<2x128xf32>
    %134 = arith.addf %132, %133 : vector<2x128xf32>
    %135 = arith.negf %134 : vector<2x128xf32>
    %136 = math.exp %135 : vector<2x128xf32>
    %cst_49 = arith.constant 1.000000e+00 : f32
    %137 = vector.broadcast %cst_49 : f32 to vector<2x128xf32>
    %138 = arith.addf %137, %136 : vector<2x128xf32>
    %139 = arith.divf %137, %138 : vector<2x128xf32>
    %140 = math.tanh %134 : vector<2x128xf32>
    %c64_i32_50 = arith.constant 64 : i32
    %141 = tpu.dynamic_rotate %140 by %c64_i32_50 dim 1 : vector<2x128xf32>, i32 -> vector<2x128xf32>
    %142 = arith.mulf %139, %141 : vector<2x128xf32>
    %cst_51 = arith.constant 0.000000e+00 : f32
    %143 = vector.broadcast %cst_51 : f32 to vector<2x128xf32>
    %144 = arith.select %17, %142, %143 : vector<2x128xi1>, vector<2x128xf32>
    %c32_i32_52 = arith.constant 32 : i32
    %145 = tpu.dynamic_rotate %144 by %c32_i32_52 dim 1 : vector<2x128xf32>, i32 -> vector<2x128xf32>
    %c96_i32_53 = arith.constant 96 : i32
    %146 = tpu.dynamic_rotate %144 by %c96_i32_53 dim 1 : vector<2x128xf32>, i32 -> vector<2x128xf32>
    %147 = arith.addf %145, %146 : vector<2x128xf32>
    %148 = arith.mulf %139, %104 : vector<2x128xf32>
    %149 = arith.addf %148, %147 : vector<2x128xf32>
    %150 = math.tanh %149 : vector<2x128xf32>
    %c64_i32_54 = arith.constant 64 : i32
    %151 = tpu.dynamic_rotate %150 by %c64_i32_54 dim 1 : vector<2x128xf32>, i32 -> vector<2x128xf32>
    %152 = arith.mulf %139, %151 : vector<2x128xf32>
    %153 = vector.extract_strided_slice %6 {offsets = [0, 3, 0], sizes = [2, 1, 128], strides = [1, 1, 1]} : vector<2x8x128xf32> to vector<2x1x128xf32>
    %154 = vector.shape_cast %153 : vector<2x1x128xf32> to vector<2x128xf32>
    %cst_55 = arith.constant dense<0.000000e+00> : vector<2x128xf32>
    %155 = tpu.matmul %129, %7, %cst_55 {dimension_numbers = #tpu.dot_dimension_numbers<[1], [0], [0], [1], [0, 0, 1, 1], [], []>} : vector<2x128xf32>, vector<128x128xf32>, vector<2x128xf32> -> vector<2x128xf32>
    %156 = arith.addf %154, %155 : vector<2x128xf32>
    %157 = arith.negf %156 : vector<2x128xf32>
    %158 = math.exp %157 : vector<2x128xf32>
    %cst_56 = arith.constant 1.000000e+00 : f32
    %159 = vector.broadcast %cst_56 : f32 to vector<2x128xf32>
    %160 = arith.addf %159, %158 : vector<2x128xf32>
    %161 = arith.divf %159, %160 : vector<2x128xf32>
    %162 = math.tanh %156 : vector<2x128xf32>
    %c64_i32_57 = arith.constant 64 : i32
    %163 = tpu.dynamic_rotate %162 by %c64_i32_57 dim 1 : vector<2x128xf32>, i32 -> vector<2x128xf32>
    %164 = arith.mulf %161, %163 : vector<2x128xf32>
    %cst_58 = arith.constant 0.000000e+00 : f32
    %165 = vector.broadcast %cst_58 : f32 to vector<2x128xf32>
    %166 = arith.select %17, %164, %165 : vector<2x128xi1>, vector<2x128xf32>
    %c32_i32_59 = arith.constant 32 : i32
    %167 = tpu.dynamic_rotate %166 by %c32_i32_59 dim 1 : vector<2x128xf32>, i32 -> vector<2x128xf32>
    %c96_i32_60 = arith.constant 96 : i32
    %168 = tpu.dynamic_rotate %166 by %c96_i32_60 dim 1 : vector<2x128xf32>, i32 -> vector<2x128xf32>
    %169 = arith.addf %167, %168 : vector<2x128xf32>
    %170 = arith.mulf %161, %126 : vector<2x128xf32>
    %171 = arith.addf %170, %169 : vector<2x128xf32>
    %172 = math.tanh %171 : vector<2x128xf32>
    %c64_i32_61 = arith.constant 64 : i32
    %173 = tpu.dynamic_rotate %172 by %c64_i32_61 dim 1 : vector<2x128xf32>, i32 -> vector<2x128xf32>
    %174 = arith.mulf %161, %173 : vector<2x128xf32>
    %cst_62 = arith.constant dense<0.000000e+00> : vector<2x128xf32>
    %175 = tpu.matmul %174, %9, %cst_62 {dimension_numbers = #tpu.dot_dimension_numbers<[1], [0], [0], [1], [0, 0, 1, 1], [], []>} : vector<2x128xf32>, vector<128x128xf32>, vector<2x128xf32> -> vector<2x128xf32>
    %176 = vector.broadcast %10 : vector<1x128xf32> to vector<2x128xf32>
    %177 = arith.addf %175, %176 : vector<2x128xf32>
    %cst_63 = arith.constant dense<0.000000e+00> : vector<2x128xf32>
    %178 = tpu.matmul %152, %8, %cst_63 {dimension_numbers = #tpu.dot_dimension_numbers<[1], [0], [0], [1], [0, 0, 1, 1], [], []>} : vector<2x128xf32>, vector<128x128xf32>, vector<2x128xf32> -> vector<2x128xf32>
    %179 = arith.addf %177, %178 : vector<2x128xf32>
    %180 = arith.negf %179 : vector<2x128xf32>
    %181 = math.exp %180 : vector<2x128xf32>
    %cst_64 = arith.constant 1.000000e+00 : f32
    %182 = vector.broadcast %cst_64 : f32 to vector<2x128xf32>
    %183 = arith.addf %182, %181 : vector<2x128xf32>
    %184 = arith.divf %182, %183 : vector<2x128xf32>
    %185 = math.tanh %179 : vector<2x128xf32>
    %c64_i32_65 = arith.constant 64 : i32
    %186 = tpu.dynamic_rotate %185 by %c64_i32_65 dim 1 : vector<2x128xf32>, i32 -> vector<2x128xf32>
    %187 = arith.mulf %184, %186 : vector<2x128xf32>
    %cst_66 = arith.constant 0.000000e+00 : f32
    %188 = vector.broadcast %cst_66 : f32 to vector<2x128xf32>
    %189 = arith.select %17, %187, %188 : vector<2x128xi1>, vector<2x128xf32>
    %c32_i32_67 = arith.constant 32 : i32
    %190 = tpu.dynamic_rotate %189 by %c32_i32_67 dim 1 : vector<2x128xf32>, i32 -> vector<2x128xf32>
    %c96_i32_68 = arith.constant 96 : i32
    %191 = tpu.dynamic_rotate %189 by %c96_i32_68 dim 1 : vector<2x128xf32>, i32 -> vector<2x128xf32>
    %192 = arith.addf %190, %191 : vector<2x128xf32>
    %193 = arith.mulf %184, %149 : vector<2x128xf32>
    %194 = arith.addf %193, %192 : vector<2x128xf32>
    %195 = math.tanh %194 : vector<2x128xf32>
    %c64_i32_69 = arith.constant 64 : i32
    %196 = tpu.dynamic_rotate %195 by %c64_i32_69 dim 1 : vector<2x128xf32>, i32 -> vector<2x128xf32>
    %197 = arith.mulf %184, %196 : vector<2x128xf32>
    %198 = vector.extract_strided_slice %6 {offsets = [0, 4, 0], sizes = [2, 1, 128], strides = [1, 1, 1]} : vector<2x8x128xf32> to vector<2x1x128xf32>
    %199 = vector.shape_cast %198 : vector<2x1x128xf32> to vector<2x128xf32>
    %cst_70 = arith.constant dense<0.000000e+00> : vector<2x128xf32>
    %200 = tpu.matmul %174, %7, %cst_70 {dimension_numbers = #tpu.dot_dimension_numbers<[1], [0], [0], [1], [0, 0, 1, 1], [], []>} : vector<2x128xf32>, vector<128x128xf32>, vector<2x128xf32> -> vector<2x128xf32>
    %201 = arith.addf %199, %200 : vector<2x128xf32>
    %202 = arith.negf %201 : vector<2x128xf32>
    %203 = math.exp %202 : vector<2x128xf32>
    %cst_71 = arith.constant 1.000000e+00 : f32
    %204 = vector.broadcast %cst_71 : f32 to vector<2x128xf32>
    %205 = arith.addf %204, %203 : vector<2x128xf32>
    %206 = arith.divf %204, %205 : vector<2x128xf32>
    %207 = math.tanh %201 : vector<2x128xf32>
    %c64_i32_72 = arith.constant 64 : i32
    %208 = tpu.dynamic_rotate %207 by %c64_i32_72 dim 1 : vector<2x128xf32>, i32 -> vector<2x128xf32>
    %209 = arith.mulf %206, %208 : vector<2x128xf32>
    %cst_73 = arith.constant 0.000000e+00 : f32
    %210 = vector.broadcast %cst_73 : f32 to vector<2x128xf32>
    %211 = arith.select %17, %209, %210 : vector<2x128xi1>, vector<2x128xf32>
    %c32_i32_74 = arith.constant 32 : i32
    %212 = tpu.dynamic_rotate %211 by %c32_i32_74 dim 1 : vector<2x128xf32>, i32 -> vector<2x128xf32>
    %c96_i32_75 = arith.constant 96 : i32
    %213 = tpu.dynamic_rotate %211 by %c96_i32_75 dim 1 : vector<2x128xf32>, i32 -> vector<2x128xf32>
    %214 = arith.addf %212, %213 : vector<2x128xf32>
    %215 = arith.mulf %206, %171 : vector<2x128xf32>
    %216 = arith.addf %215, %214 : vector<2x128xf32>
    %217 = math.tanh %216 : vector<2x128xf32>
    %c64_i32_76 = arith.constant 64 : i32
    %218 = tpu.dynamic_rotate %217 by %c64_i32_76 dim 1 : vector<2x128xf32>, i32 -> vector<2x128xf32>
    %219 = arith.mulf %206, %218 : vector<2x128xf32>
    %cst_77 = arith.constant dense<0.000000e+00> : vector<2x128xf32>
    %220 = tpu.matmul %219, %9, %cst_77 {dimension_numbers = #tpu.dot_dimension_numbers<[1], [0], [0], [1], [0, 0, 1, 1], [], []>} : vector<2x128xf32>, vector<128x128xf32>, vector<2x128xf32> -> vector<2x128xf32>
    %221 = vector.broadcast %10 : vector<1x128xf32> to vector<2x128xf32>
    %222 = arith.addf %220, %221 : vector<2x128xf32>
    %cst_78 = arith.constant dense<0.000000e+00> : vector<2x128xf32>
    %223 = tpu.matmul %197, %8, %cst_78 {dimension_numbers = #tpu.dot_dimension_numbers<[1], [0], [0], [1], [0, 0, 1, 1], [], []>} : vector<2x128xf32>, vector<128x128xf32>, vector<2x128xf32> -> vector<2x128xf32>
    %224 = arith.addf %222, %223 : vector<2x128xf32>
    %225 = arith.negf %224 : vector<2x128xf32>
    %226 = math.exp %225 : vector<2x128xf32>
    %cst_79 = arith.constant 1.000000e+00 : f32
    %227 = vector.broadcast %cst_79 : f32 to vector<2x128xf32>
    %228 = arith.addf %227, %226 : vector<2x128xf32>
    %229 = arith.divf %227, %228 : vector<2x128xf32>
    %230 = math.tanh %224 : vector<2x128xf32>
    %c64_i32_80 = arith.constant 64 : i32
    %231 = tpu.dynamic_rotate %230 by %c64_i32_80 dim 1 : vector<2x128xf32>, i32 -> vector<2x128xf32>
    %232 = arith.mulf %229, %231 : vector<2x128xf32>
    %cst_81 = arith.constant 0.000000e+00 : f32
    %233 = vector.broadcast %cst_81 : f32 to vector<2x128xf32>
    %234 = arith.select %17, %232, %233 : vector<2x128xi1>, vector<2x128xf32>
    %c32_i32_82 = arith.constant 32 : i32
    %235 = tpu.dynamic_rotate %234 by %c32_i32_82 dim 1 : vector<2x128xf32>, i32 -> vector<2x128xf32>
    %c96_i32_83 = arith.constant 96 : i32
    %236 = tpu.dynamic_rotate %234 by %c96_i32_83 dim 1 : vector<2x128xf32>, i32 -> vector<2x128xf32>
    %237 = arith.addf %235, %236 : vector<2x128xf32>
    %238 = arith.mulf %229, %194 : vector<2x128xf32>
    %239 = arith.addf %238, %237 : vector<2x128xf32>
    %240 = math.tanh %239 : vector<2x128xf32>
    %c64_i32_84 = arith.constant 64 : i32
    %241 = tpu.dynamic_rotate %240 by %c64_i32_84 dim 1 : vector<2x128xf32>, i32 -> vector<2x128xf32>
    %242 = arith.mulf %229, %241 : vector<2x128xf32>
    %243 = vector.extract_strided_slice %6 {offsets = [0, 5, 0], sizes = [2, 1, 128], strides = [1, 1, 1]} : vector<2x8x128xf32> to vector<2x1x128xf32>
    %244 = vector.shape_cast %243 : vector<2x1x128xf32> to vector<2x128xf32>
    %cst_85 = arith.constant dense<0.000000e+00> : vector<2x128xf32>
    %245 = tpu.matmul %219, %7, %cst_85 {dimension_numbers = #tpu.dot_dimension_numbers<[1], [0], [0], [1], [0, 0, 1, 1], [], []>} : vector<2x128xf32>, vector<128x128xf32>, vector<2x128xf32> -> vector<2x128xf32>
    %246 = arith.addf %244, %245 : vector<2x128xf32>
    %247 = arith.negf %246 : vector<2x128xf32>
    %248 = math.exp %247 : vector<2x128xf32>
    %cst_86 = arith.constant 1.000000e+00 : f32
    %249 = vector.broadcast %cst_86 : f32 to vector<2x128xf32>
    %250 = arith.addf %249, %248 : vector<2x128xf32>
    %251 = arith.divf %249, %250 : vector<2x128xf32>
    %252 = math.tanh %246 : vector<2x128xf32>
    %c64_i32_87 = arith.constant 64 : i32
    %253 = tpu.dynamic_rotate %252 by %c64_i32_87 dim 1 : vector<2x128xf32>, i32 -> vector<2x128xf32>
    %254 = arith.mulf %251, %253 : vector<2x128xf32>
    %cst_88 = arith.constant 0.000000e+00 : f32
    %255 = vector.broadcast %cst_88 : f32 to vector<2x128xf32>
    %256 = arith.select %17, %254, %255 : vector<2x128xi1>, vector<2x128xf32>
    %c32_i32_89 = arith.constant 32 : i32
    %257 = tpu.dynamic_rotate %256 by %c32_i32_89 dim 1 : vector<2x128xf32>, i32 -> vector<2x128xf32>
    %c96_i32_90 = arith.constant 96 : i32
    %258 = tpu.dynamic_rotate %256 by %c96_i32_90 dim 1 : vector<2x128xf32>, i32 -> vector<2x128xf32>
    %259 = arith.addf %257, %258 : vector<2x128xf32>
    %260 = arith.mulf %251, %216 : vector<2x128xf32>
    %261 = arith.addf %260, %259 : vector<2x128xf32>
    %262 = math.tanh %261 : vector<2x128xf32>
    %c64_i32_91 = arith.constant 64 : i32
    %263 = tpu.dynamic_rotate %262 by %c64_i32_91 dim 1 : vector<2x128xf32>, i32 -> vector<2x128xf32>
    %264 = arith.mulf %251, %263 : vector<2x128xf32>
    %cst_92 = arith.constant dense<0.000000e+00> : vector<2x128xf32>
    %265 = tpu.matmul %264, %9, %cst_92 {dimension_numbers = #tpu.dot_dimension_numbers<[1], [0], [0], [1], [0, 0, 1, 1], [], []>} : vector<2x128xf32>, vector<128x128xf32>, vector<2x128xf32> -> vector<2x128xf32>
    %266 = vector.broadcast %10 : vector<1x128xf32> to vector<2x128xf32>
    %267 = arith.addf %265, %266 : vector<2x128xf32>
    %cst_93 = arith.constant dense<0.000000e+00> : vector<2x128xf32>
    %268 = tpu.matmul %242, %8, %cst_93 {dimension_numbers = #tpu.dot_dimension_numbers<[1], [0], [0], [1], [0, 0, 1, 1], [], []>} : vector<2x128xf32>, vector<128x128xf32>, vector<2x128xf32> -> vector<2x128xf32>
    %269 = arith.addf %267, %268 : vector<2x128xf32>
    %270 = arith.negf %269 : vector<2x128xf32>
    %271 = math.exp %270 : vector<2x128xf32>
    %cst_94 = arith.constant 1.000000e+00 : f32
    %272 = vector.broadcast %cst_94 : f32 to vector<2x128xf32>
    %273 = arith.addf %272, %271 : vector<2x128xf32>
    %274 = arith.divf %272, %273 : vector<2x128xf32>
    %275 = math.tanh %269 : vector<2x128xf32>
    %c64_i32_95 = arith.constant 64 : i32
    %276 = tpu.dynamic_rotate %275 by %c64_i32_95 dim 1 : vector<2x128xf32>, i32 -> vector<2x128xf32>
    %277 = arith.mulf %274, %276 : vector<2x128xf32>
    %cst_96 = arith.constant 0.000000e+00 : f32
    %278 = vector.broadcast %cst_96 : f32 to vector<2x128xf32>
    %279 = arith.select %17, %277, %278 : vector<2x128xi1>, vector<2x128xf32>
    %c32_i32_97 = arith.constant 32 : i32
    %280 = tpu.dynamic_rotate %279 by %c32_i32_97 dim 1 : vector<2x128xf32>, i32 -> vector<2x128xf32>
    %c96_i32_98 = arith.constant 96 : i32
    %281 = tpu.dynamic_rotate %279 by %c96_i32_98 dim 1 : vector<2x128xf32>, i32 -> vector<2x128xf32>
    %282 = arith.addf %280, %281 : vector<2x128xf32>
    %283 = arith.mulf %274, %239 : vector<2x128xf32>
    %284 = arith.addf %283, %282 : vector<2x128xf32>
    %285 = math.tanh %284 : vector<2x128xf32>
    %c64_i32_99 = arith.constant 64 : i32
    %286 = tpu.dynamic_rotate %285 by %c64_i32_99 dim 1 : vector<2x128xf32>, i32 -> vector<2x128xf32>
    %287 = arith.mulf %274, %286 : vector<2x128xf32>
    %288 = vector.extract_strided_slice %6 {offsets = [0, 6, 0], sizes = [2, 1, 128], strides = [1, 1, 1]} : vector<2x8x128xf32> to vector<2x1x128xf32>
    %289 = vector.shape_cast %288 : vector<2x1x128xf32> to vector<2x128xf32>
    %cst_100 = arith.constant dense<0.000000e+00> : vector<2x128xf32>
    %290 = tpu.matmul %264, %7, %cst_100 {dimension_numbers = #tpu.dot_dimension_numbers<[1], [0], [0], [1], [0, 0, 1, 1], [], []>} : vector<2x128xf32>, vector<128x128xf32>, vector<2x128xf32> -> vector<2x128xf32>
    %291 = arith.addf %289, %290 : vector<2x128xf32>
    %292 = arith.negf %291 : vector<2x128xf32>
    %293 = math.exp %292 : vector<2x128xf32>
    %cst_101 = arith.constant 1.000000e+00 : f32
    %294 = vector.broadcast %cst_101 : f32 to vector<2x128xf32>
    %295 = arith.addf %294, %293 : vector<2x128xf32>
    %296 = arith.divf %294, %295 : vector<2x128xf32>
    %297 = math.tanh %291 : vector<2x128xf32>
    %c64_i32_102 = arith.constant 64 : i32
    %298 = tpu.dynamic_rotate %297 by %c64_i32_102 dim 1 : vector<2x128xf32>, i32 -> vector<2x128xf32>
    %299 = arith.mulf %296, %298 : vector<2x128xf32>
    %cst_103 = arith.constant 0.000000e+00 : f32
    %300 = vector.broadcast %cst_103 : f32 to vector<2x128xf32>
    %301 = arith.select %17, %299, %300 : vector<2x128xi1>, vector<2x128xf32>
    %c32_i32_104 = arith.constant 32 : i32
    %302 = tpu.dynamic_rotate %301 by %c32_i32_104 dim 1 : vector<2x128xf32>, i32 -> vector<2x128xf32>
    %c96_i32_105 = arith.constant 96 : i32
    %303 = tpu.dynamic_rotate %301 by %c96_i32_105 dim 1 : vector<2x128xf32>, i32 -> vector<2x128xf32>
    %304 = arith.addf %302, %303 : vector<2x128xf32>
    %305 = arith.mulf %296, %261 : vector<2x128xf32>
    %306 = arith.addf %305, %304 : vector<2x128xf32>
    %307 = math.tanh %306 : vector<2x128xf32>
    %c64_i32_106 = arith.constant 64 : i32
    %308 = tpu.dynamic_rotate %307 by %c64_i32_106 dim 1 : vector<2x128xf32>, i32 -> vector<2x128xf32>
    %309 = arith.mulf %296, %308 : vector<2x128xf32>
    %cst_107 = arith.constant dense<0.000000e+00> : vector<2x128xf32>
    %310 = tpu.matmul %309, %9, %cst_107 {dimension_numbers = #tpu.dot_dimension_numbers<[1], [0], [0], [1], [0, 0, 1, 1], [], []>} : vector<2x128xf32>, vector<128x128xf32>, vector<2x128xf32> -> vector<2x128xf32>
    %311 = vector.broadcast %10 : vector<1x128xf32> to vector<2x128xf32>
    %312 = arith.addf %310, %311 : vector<2x128xf32>
    %cst_108 = arith.constant dense<0.000000e+00> : vector<2x128xf32>
    %313 = tpu.matmul %287, %8, %cst_108 {dimension_numbers = #tpu.dot_dimension_numbers<[1], [0], [0], [1], [0, 0, 1, 1], [], []>} : vector<2x128xf32>, vector<128x128xf32>, vector<2x128xf32> -> vector<2x128xf32>
    %314 = arith.addf %312, %313 : vector<2x128xf32>
    %315 = arith.negf %314 : vector<2x128xf32>
    %316 = math.exp %315 : vector<2x128xf32>
    %cst_109 = arith.constant 1.000000e+00 : f32
    %317 = vector.broadcast %cst_109 : f32 to vector<2x128xf32>
    %318 = arith.addf %317, %316 : vector<2x128xf32>
    %319 = arith.divf %317, %318 : vector<2x128xf32>
    %320 = math.tanh %314 : vector<2x128xf32>
    %c64_i32_110 = arith.constant 64 : i32
    %321 = tpu.dynamic_rotate %320 by %c64_i32_110 dim 1 : vector<2x128xf32>, i32 -> vector<2x128xf32>
    %322 = arith.mulf %319, %321 : vector<2x128xf32>
    %cst_111 = arith.constant 0.000000e+00 : f32
    %323 = vector.broadcast %cst_111 : f32 to vector<2x128xf32>
    %324 = arith.select %17, %322, %323 : vector<2x128xi1>, vector<2x128xf32>
    %c32_i32_112 = arith.constant 32 : i32
    %325 = tpu.dynamic_rotate %324 by %c32_i32_112 dim 1 : vector<2x128xf32>, i32 -> vector<2x128xf32>
    %c96_i32_113 = arith.constant 96 : i32
    %326 = tpu.dynamic_rotate %324 by %c96_i32_113 dim 1 : vector<2x128xf32>, i32 -> vector<2x128xf32>
    %327 = arith.addf %325, %326 : vector<2x128xf32>
    %328 = arith.mulf %319, %284 : vector<2x128xf32>
    %329 = arith.addf %328, %327 : vector<2x128xf32>
    %330 = math.tanh %329 : vector<2x128xf32>
    %c64_i32_114 = arith.constant 64 : i32
    %331 = tpu.dynamic_rotate %330 by %c64_i32_114 dim 1 : vector<2x128xf32>, i32 -> vector<2x128xf32>
    %332 = arith.mulf %319, %331 : vector<2x128xf32>
    %333 = vector.extract_strided_slice %6 {offsets = [0, 7, 0], sizes = [2, 1, 128], strides = [1, 1, 1]} : vector<2x8x128xf32> to vector<2x1x128xf32>
    %334 = vector.shape_cast %333 : vector<2x1x128xf32> to vector<2x128xf32>
    %cst_115 = arith.constant dense<0.000000e+00> : vector<2x128xf32>
    %335 = tpu.matmul %309, %7, %cst_115 {dimension_numbers = #tpu.dot_dimension_numbers<[1], [0], [0], [1], [0, 0, 1, 1], [], []>} : vector<2x128xf32>, vector<128x128xf32>, vector<2x128xf32> -> vector<2x128xf32>
    %336 = arith.addf %334, %335 : vector<2x128xf32>
    %337 = arith.negf %336 : vector<2x128xf32>
    %338 = math.exp %337 : vector<2x128xf32>
    %cst_116 = arith.constant 1.000000e+00 : f32
    %339 = vector.broadcast %cst_116 : f32 to vector<2x128xf32>
    %340 = arith.addf %339, %338 : vector<2x128xf32>
    %341 = arith.divf %339, %340 : vector<2x128xf32>
    %342 = math.tanh %336 : vector<2x128xf32>
    %c64_i32_117 = arith.constant 64 : i32
    %343 = tpu.dynamic_rotate %342 by %c64_i32_117 dim 1 : vector<2x128xf32>, i32 -> vector<2x128xf32>
    %344 = arith.mulf %341, %343 : vector<2x128xf32>
    %cst_118 = arith.constant 0.000000e+00 : f32
    %345 = vector.broadcast %cst_118 : f32 to vector<2x128xf32>
    %346 = arith.select %17, %344, %345 : vector<2x128xi1>, vector<2x128xf32>
    %c32_i32_119 = arith.constant 32 : i32
    %347 = tpu.dynamic_rotate %346 by %c32_i32_119 dim 1 : vector<2x128xf32>, i32 -> vector<2x128xf32>
    %c96_i32_120 = arith.constant 96 : i32
    %348 = tpu.dynamic_rotate %346 by %c96_i32_120 dim 1 : vector<2x128xf32>, i32 -> vector<2x128xf32>
    %349 = arith.addf %347, %348 : vector<2x128xf32>
    %350 = arith.mulf %341, %306 : vector<2x128xf32>
    %351 = arith.addf %350, %349 : vector<2x128xf32>
    %352 = math.tanh %351 : vector<2x128xf32>
    %c64_i32_121 = arith.constant 64 : i32
    %353 = tpu.dynamic_rotate %352 by %c64_i32_121 dim 1 : vector<2x128xf32>, i32 -> vector<2x128xf32>
    %354 = arith.mulf %341, %353 : vector<2x128xf32>
    %cst_122 = arith.constant dense<0.000000e+00> : vector<2x128xf32>
    %355 = tpu.matmul %354, %9, %cst_122 {dimension_numbers = #tpu.dot_dimension_numbers<[1], [0], [0], [1], [0, 0, 1, 1], [], []>} : vector<2x128xf32>, vector<128x128xf32>, vector<2x128xf32> -> vector<2x128xf32>
    %356 = vector.broadcast %10 : vector<1x128xf32> to vector<2x128xf32>
    %357 = arith.addf %355, %356 : vector<2x128xf32>
    %cst_123 = arith.constant dense<0.000000e+00> : vector<2x128xf32>
    %358 = tpu.matmul %332, %8, %cst_123 {dimension_numbers = #tpu.dot_dimension_numbers<[1], [0], [0], [1], [0, 0, 1, 1], [], []>} : vector<2x128xf32>, vector<128x128xf32>, vector<2x128xf32> -> vector<2x128xf32>
    %359 = arith.addf %357, %358 : vector<2x128xf32>
    %360 = arith.negf %359 : vector<2x128xf32>
    %361 = math.exp %360 : vector<2x128xf32>
    %cst_124 = arith.constant 1.000000e+00 : f32
    %362 = vector.broadcast %cst_124 : f32 to vector<2x128xf32>
    %363 = arith.addf %362, %361 : vector<2x128xf32>
    %364 = arith.divf %362, %363 : vector<2x128xf32>
    %365 = math.tanh %359 : vector<2x128xf32>
    %c64_i32_125 = arith.constant 64 : i32
    %366 = tpu.dynamic_rotate %365 by %c64_i32_125 dim 1 : vector<2x128xf32>, i32 -> vector<2x128xf32>
    %367 = arith.mulf %364, %366 : vector<2x128xf32>
    %cst_126 = arith.constant 0.000000e+00 : f32
    %368 = vector.broadcast %cst_126 : f32 to vector<2x128xf32>
    %369 = arith.select %17, %367, %368 : vector<2x128xi1>, vector<2x128xf32>
    %c32_i32_127 = arith.constant 32 : i32
    %370 = tpu.dynamic_rotate %369 by %c32_i32_127 dim 1 : vector<2x128xf32>, i32 -> vector<2x128xf32>
    %c96_i32_128 = arith.constant 96 : i32
    %371 = tpu.dynamic_rotate %369 by %c96_i32_128 dim 1 : vector<2x128xf32>, i32 -> vector<2x128xf32>
    %372 = arith.addf %370, %371 : vector<2x128xf32>
    %373 = arith.mulf %364, %329 : vector<2x128xf32>
    %374 = arith.addf %373, %372 : vector<2x128xf32>
    %375 = math.tanh %374 : vector<2x128xf32>
    %c64_i32_129 = arith.constant 64 : i32
    %376 = tpu.dynamic_rotate %375 by %c64_i32_129 dim 1 : vector<2x128xf32>, i32 -> vector<2x128xf32>
    %377 = arith.mulf %364, %376 : vector<2x128xf32>
    %c416 = arith.constant 416 : index
    %c0_130 = arith.constant 0 : index
    %378 = vector.load %arg1[%c416, %c0_130] : memref<552x128xf32, #tpu.memory_space<vmem>>, vector<128x128xf32>
    %c544 = arith.constant 544 : index
    %c0_131 = arith.constant 0 : index
    %379 = vector.load %arg1[%c544, %c0_131] : memref<552x128xf32, #tpu.memory_space<vmem>>, vector<1x128xf32>
    %cst_132 = arith.constant dense<0.000000e+00> : vector<2x128xf32>
    %380 = tpu.matmul %377, %378, %cst_132 {dimension_numbers = #tpu.dot_dimension_numbers<[1], [0], [0], [1], [0, 0, 1, 1], [], []>} : vector<2x128xf32>, vector<128x128xf32>, vector<2x128xf32> -> vector<2x128xf32>
    %381 = vector.broadcast %379 : vector<1x128xf32> to vector<2x128xf32>
    %382 = arith.addf %380, %381 : vector<2x128xf32>
    %383 = vector.extract_strided_slice %382 {offsets = [0, 0], sizes = [2, 4], strides = [1, 1]} : vector<2x128xf32> to vector<2x4xf32>
    %c0_133 = arith.constant 0 : index
    %c0_134 = arith.constant 0 : index
    %384 = vector.load %arg2[%c0_133, %c0_134] : memref<2x4xf32, #tpu.memory_space<vmem>>, vector<2x4xf32>
    tpu.vector_store %arg2[%c0_133, %c0_134], %383 {strides = array<i32>} : memref<2x4xf32, #tpu.memory_space<vmem>>, vector<2x4xf32>,
    return
  }
}

</mosaic_0001>

<llo_original>
// kernel: lstm_kf_forward.1
$region0: #{lstm_kf_forward.1}
  #allocation0 [shape = 'u32[]', space=smem, size = 0x4, offset = 0x4, fixed_abs, tag = 'smem constant byte address 0x4 - core index']
  #allocation1 [shape = 'u32[144,128]{1,0:T(1,128)}', space=vmem, size = 0x12000, scoped, tag = 'internal scratch']
  %s0 = inlined_call_operand.hbm [shape: f32[16,16], index: 0, kind: input, shape index: {}]
  %s1 = inlined_call_operand.hbm [shape: f32[552,128], index: 1, kind: input, shape index: {}]
  %s2 = inlined_call_operand.hbm [shape: f32[2,4], index: 2, kind: output, shape index: {}]
  %s3 = sld [smem:[#allocation0]]
  $region26: #{lstm_kf_forward.1} parent=0
    _
  %s5 = ssub.s32 1, %s3
  %s6 = scalar_select 0, %s5, %s3
  $region1: #{lstm_kf_forward.1} parent=0
    #allocation2 [shape = 'u8[8192]{0}', space=vmem, size = 0x2000, scoped, tag = 'input window, operand 0, single buffered']
    #allocation3 [shape = 's32[1]{0}', space=sflag, size = 0x4, scoped, tag = 'scoped memory for lstm_kf_forward.1']
    #allocation4 [shape = 's32[1]{0}', space=sflag, size = 0x4, scoped, tag = 'scoped memory for lstm_kf_forward.1']
    #allocation5 [shape = 'u8[282624]{0}', space=vmem, size = 0x45000, scoped, tag = 'input window, operand 1, single buffered']
    #allocation6 [shape = 's32[1]{0}', space=sflag, size = 0x4, scoped, tag = 'scoped memory for lstm_kf_forward.1']
    #allocation7 [shape = 'u8[1024]{0}', space=vmem, size = 0x400, scoped, tag = 'output window, operand 0, single buffered']
    %7 = vsyncpa [#allocation3], 0
    %8 = vsyncpa [#allocation6], 0
    %9 = vsyncpa [#allocation4], 0
    // Predicated region
    $region2: #{lstm_kf_forward.1} parent=1 // pred_check
      _
    $region3: #{lstm_kf_forward.1} parent=1 // pred_check_branch
      %11 = sbr.rel (0) target = $region5
    $region4: #{lstm_kf_forward.1} parent=1 // pred_region
      %s13 = ssub.s32 256, 256
      %14 = vsyncadd [#allocation3], %s13
      %s15 = sshll.u32 [#allocation2], 4
      %s16 = int_to_ptr.vmem [resolvable:$true] %s15
      %21 = dma.hbm_to_vmem [thread:$0]  %s0, 256, %s16, [#allocation3], 128, 128, 8
    $region5: #{lstm_kf_forward.1} parent=1 // pred_fallthru
      _
    // Predicated region
    $region6: #{lstm_kf_forward.1} parent=1 // pred_check
      _
    $region7: #{lstm_kf_forward.1} parent=1 // pred_check_branch
      %23 = sbr.rel (0) target = $region9
    $region8: #{lstm_kf_forward.1} parent=1 // pred_region
      %s25 = ssub.s32 8832, 8832
      %26 = vsyncadd [#allocation6], %s25
      %s27 = sshll.u32 [#allocation5], 4
      %s28 = int_to_ptr.vmem [resolvable:$true] %s27
      %33 = dma.hbm_to_vmem [thread:$0]  %s1, 8832, %s28, [#allocation6], 128, 128, 8
    $region9: #{lstm_kf_forward.1} parent=1 // pred_fallthru
      _
    // Predicated region
    $region10: #{lstm_kf_forward.1} parent=1 // pred_check
      _
    $region11: #{lstm_kf_forward.1} parent=1 // pred_check_branch
      %35 = sbr.rel (0) target = $region13
    $region12: #{lstm_kf_forward.1} parent=1 // pred_region
      %36 = dma.done [#allocation3], 256
    $region13: #{lstm_kf_forward.1} parent=1 // pred_fallthru
      _
    // Predicated region
    $region14: #{lstm_kf_forward.1} parent=1 // pred_check
      _
    $region15: #{lstm_kf_forward.1} parent=1 // pred_check_branch
      %38 = sbr.rel (0) target = $region17
    $region16: #{lstm_kf_forward.1} parent=1 // pred_region
      %39 = dma.done [#allocation6], 8832
    $region17: #{lstm_kf_forward.1} parent=1 // pred_fallthru
      _
    %v40 = vld [vmem:[#allocation2] sm:$0xff]
    %v41 = vld [vmem:[#allocation2 + $0x8] sm:$0xff]
    %v42 = vld [vmem:[#allocation5] sm:$0xff]
    %v43 = vld [vmem:[#allocation5 + $0x8] sm:$0xff]
    %v44 = vld [vmem:[#allocation5 + $0x90] sm:$0x1]
    %v45 = vlaneseq
    %v46 = vshrl.u32 %v45, 7
    %v47 = vsub.s32 0, %v46
    %v48 = vrot.slane %v44, %v47
    %vm49 = vcmask 130048
    %v51 = vsel %vm49, %v40, 0
    %v54 = vsel %vm49, %v41, 0
    %56 = vmatprep.subr.mxu0 0.0
    %57 = vmatpush1.msra.mxu0 %v42
    %58 = vmatprep.subr.mxu0 0.0
    %59 = vmatpush1.msra.mxu0 %v43
    %60 = vmatprep.subr.mxu0 0.0
    %61 = vmatpush1.msra.mxu0 0.0
    %62 = vmatprep.subr.mxu0 0.0
    %63 = vmatpush1.msra.mxu0 0.0
    %64 = vmatprep.subr.mxu0 0.0
    %65 = vmatpush1.msra.mxu0 0.0
    %66 = vmatprep.subr.mxu0 0.0
    %67 = vmatpush1.msra.mxu0 0.0
    %68 = vmatprep.subr.mxu0 0.0
    %69 = vmatpush1.msra.mxu0 0.0
    %70 = vmatprep.subr.mxu0 0.0
    %71 = vmatpush1.msra.mxu0 0.0
    %72 = vmatprep.subr.mxu0 0.0
    %73 = vmatpush1.msra.mxu0 0.0
    %74 = vmatprep.subr.mxu0 0.0
    %75 = vmatpush1.msra.mxu0 0.0
    %76 = vmatprep.subr.mxu0 0.0
    %77 = vmatpush1.msra.mxu0 0.0
    %78 = vmatprep.subr.mxu0 0.0
    %79 = vmatpush1.msra.mxu0 0.0
    %80 = vmatprep.subr.mxu0 0.0
    %81 = vmatpush1.msra.mxu0 0.0
    %82 = vmatprep.subr.mxu0 0.0
    %83 = vmatpush1.msra.mxu0 0.0
    %84 = vmatprep.subr.mxu0 0.0
    %85 = vmatpush1.msra.mxu0 0.0
    %86 = vmatprep.subr.mxu0 0.0
    %87 = vmatpush1.msra.mxu0 0.0
    %88 = vmatprep.subr.mxu0 0.0
    %89 = vmatpush1.msra.mxu0 0.0
    %90 = vmatprep.subr.mxu0 0.0
    %91 = vmatpush1.msra.mxu0 0.0
    %92 = vmatprep.subr.mxu0 0.0
    %93 = vmatpush1.msra.mxu0 0.0
    %94 = vmatprep.subr.mxu0 0.0
    %95 = vmatpush1.msra.mxu0 0.0
    %96 = vmatprep.subr.mxu0 0.0
    %97 = vmatpush1.msra.mxu0 0.0
    %98 = vmatprep.subr.mxu0 0.0
    %99 = vmatpush1.msra.mxu0 0.0
    %100 = vmatprep.subr.mxu0 0.0
    %101 = vmatpush1.msra.mxu0 0.0
    %102 = vmatprep.subr.mxu0 0.0
    %103 = vmatpush1.msra.mxu0 0.0
    %104 = vmatprep.subr.mxu0 0.0
    %105 = vmatpush1.msra.mxu0 0.0
    %106 = vmatprep.subr.mxu0 0.0
    %107 = vmatpush1.msra.mxu0 0.0
    %108 = vmatprep.subr.mxu0 0.0
    %109 = vmatpush1.msra.mxu0 0.0
    %110 = vmatprep.subr.mxu0 0.0
    %111 = vmatpush1.msra.mxu0 0.0
    %112 = vmatprep.subr.mxu0 0.0
    %113 = vmatpush1.msra.mxu0 0.0
    %114 = vmatprep.subr.mxu0 0.0
    %115 = vmatpush1.msra.mxu0 0.0
    %116 = vmatprep.subr.mxu0 0.0
    %117 = vmatpush1.msra.mxu0 0.0
    %118 = vmatprep.subr.mxu0 0.0
    %119 = vmatpush1.msra.mxu0 0.0
    %120 = vmatprep.mubr.f32.mxu0 0.0
    %121 = vmatmul.mubr.f32.gmra.mrb[0].mxu0 %v51
    %v122 = vpop.f32.mrb[0].mxu0
    %v123 = vadd.f32 %v48, %v122
    %v124 = vpop.f32.mrb[0].mxu0
    %125 = vmatprep.mubr.f32.mxu0 0.0
    %126 = vmatmul.mubr.f32.gmra.mrb[0].mxu0 %v54
    %v127 = vpop.f32.mrb[0].mxu0
    %v128 = vadd.f32 %v48, %v127
    %v129 = vpop.f32.mrb[0].mxu0
    %130 = vdwg.mxu0
    %v131 = vld [vmem:[#allocation5 + $0x10] sm:$0xff]
    %v132 = vld [vmem:[#allocation5 + $0x18] sm:$0xff]
    %v133 = vld [vmem:[#allocation5 + $0x20] sm:$0xff]
    %v134 = vld [vmem:[#allocation5 + $0x28] sm:$0xff]
    %v135 = vld [vmem:[#allocation5 + $0x30] sm:$0xff]
    %v136 = vld [vmem:[#allocation5 + $0x38] sm:$0xff]
    %v137 = vld [vmem:[#allocation5 + $0x40] sm:$0xff]
    %v138 = vld [vmem:[#allocation5 + $0x48] sm:$0xff]
    %v139 = vld [vmem:[#allocation5 + $0x50] sm:$0xff]
    %v140 = vld [vmem:[#allocation5 + $0x58] sm:$0xff]
    %v141 = vld [vmem:[#allocation5 + $0x60] sm:$0xff]
    %v142 = vld [vmem:[#allocation5 + $0x68] sm:$0xff]
    %v143 = vld [vmem:[#allocation5 + $0x70] sm:$0xff]
    %v144 = vld [vmem:[#allocation5 + $0x78] sm:$0xff]
    %v145 = vld [vmem:[#allocation5 + $0x80] sm:$0xff]
    %v146 = vld [vmem:[#allocation5 + $0x88] sm:$0xff]
    %v147 = vld [vmem:[#allocation5 + $0x118] sm:$0xff]
    %v148 = vld [vmem:[#allocation5 + $0x120] sm:$0xff]
    %v149 = vld [vmem:[#allocation5 + $0x128] sm:$0xff]
    %v150 = vld [vmem:[#allocation5 + $0x130] sm:$0xff]
    %v151 = vld [vmem:[#allocation5 + $0x138] sm:$0xff]
    %v152 = vld [vmem:[#allocation5 + $0x140] sm:$0xff]
    %v153 = vld [vmem:[#allocation5 + $0x148] sm:$0xff]
    %v154 = vld [vmem:[#allocation5 + $0x150] sm:$0xff]
    %v155 = vld [vmem:[#allocation5 + $0x158] sm:$0xff]
    %v156 = vld [vmem:[#allocation5 + $0x160] sm:$0xff]
    %v157 = vld [vmem:[#allocation5 + $0x168] sm:$0xff]
    %v158 = vld [vmem:[#allocation5 + $0x170] sm:$0xff]
    %v159 = vld [vmem:[#allocation5 + $0x178] sm:$0xff]
    %v160 = vld [vmem:[#allocation5 + $0x180] sm:$0xff]
    %v161 = vld [vmem:[#allocation5 + $0x188] sm:$0xff]
    %v162 = vld [vmem:[#allocation5 + $0x190] sm:$0xff]
    %v163 = vld [vmem:[#allocation5 + $0x98] sm:$0xff]
    %v164 = vld [vmem:[#allocation5 + $0xa0] sm:$0xff]
    %v165 = vld [vmem:[#allocation5 + $0xa8] sm:$0xff]
    %v166 = vld [vmem:[#allocation5 + $0xb0] sm:$0xff]
    %v167 = vld [vmem:[#allocation5 + $0xb8] sm:$0xff]
    %v168 = vld [vmem:[#allocation5 + $0xc0] sm:$0xff]
    %v169 = vld [vmem:[#allocation5 + $0xc8] sm:$0xff]
    %v170 = vld [vmem:[#allocation5 + $0xd0] sm:$0xff]
    %v171 = vld [vmem:[#allocation5 + $0xd8] sm:$0xff]
    %v172 = vld [vmem:[#allocation5 + $0xe0] sm:$0xff]
    %v173 = vld [vmem:[#allocation5 + $0xe8] sm:$0xff]
    %v174 = vld [vmem:[#allocation5 + $0xf0] sm:$0xff]
    %v175 = vld [vmem:[#allocation5 + $0xf8] sm:$0xff]
    %v176 = vld [vmem:[#allocation5 + $0x100] sm:$0xff]
    %v177 = vld [vmem:[#allocation5 + $0x108] sm:$0xff]
    %v178 = vld [vmem:[#allocation5 + $0x110] sm:$0xff]
    %v179 = vld [vmem:[#allocation5 + $0x198] sm:$0x1]
    %v180 = vlaneseq
    %v181 = vand.u32 %v180, 127
    %vm182 = vcmp.lt.s32.totalorder %v181, 32
    %183 = vmatprep.subr.mxu0 0.0
    %184 = vmatpush1.msra.mxu0 %v131
    %185 = vmatprep.subr.mxu0 0.0
    %186 = vmatpush1.msra.mxu0 %v132
    %187 = vmatprep.subr.mxu0 0.0
    %188 = vmatpush1.msra.mxu0 %v133
    %189 = vmatprep.subr.mxu0 0.0
    %190 = vmatpush1.msra.mxu0 %v134
    %191 = vmatprep.subr.mxu0 0.0
    %192 = vmatpush1.msra.mxu0 %v135
    %193 = vmatprep.subr.mxu0 0.0
    %194 = vmatpush1.msra.mxu0 %v136
    %195 = vmatprep.subr.mxu0 0.0
    %196 = vmatpush1.msra.mxu0 %v137
    %197 = vmatprep.subr.mxu0 0.0
    %198 = vmatpush1.msra.mxu0 %v138
    %199 = vmatprep.subr.mxu0 0.0
    %200 = vmatpush1.msra.mxu0 %v139
    %201 = vmatprep.subr.mxu0 0.0
    %202 = vmatpush1.msra.mxu0 %v140
    %203 = vmatprep.subr.mxu0 0.0
    %204 = vmatpush1.msra.mxu0 %v141
    %205 = vmatprep.subr.mxu0 0.0
    %206 = vmatpush1.msra.mxu0 %v142
    %207 = vmatprep.subr.mxu0 0.0
    %208 = vmatpush1.msra.mxu0 %v143
    %209 = vmatprep.subr.mxu0 0.0
    %210 = vmatpush1.msra.mxu0 %v144
    %211 = vmatprep.subr.mxu0 0.0
    %212 = vmatpush1.msra.mxu0 %v145
    %213 = vmatprep.subr.mxu0 0.0
    %214 = vmatpush1.msra.mxu0 %v146
    %215 = vmatprep.subr.mxu0 0.0
    %216 = vmatpush1.msra.mxu0 0.0
    %217 = vmatprep.subr.mxu0 0.0
    %218 = vmatpush1.msra.mxu0 0.0
    %219 = vmatprep.subr.mxu0 0.0
    %220 = vmatpush1.msra.mxu0 0.0
    %221 = vmatprep.subr.mxu0 0.0
    %222 = vmatpush1.msra.mxu0 0.0
    %223 = vmatprep.subr.mxu0 0.0
    %224 = vmatpush1.msra.mxu0 0.0
    %225 = vmatprep.subr.mxu0 0.0
    %226 = vmatpush1.msra.mxu0 0.0
    %227 = vmatprep.subr.mxu0 0.0
    %228 = vmatpush1.msra.mxu0 0.0
    %229 = vmatprep.subr.mxu0 0.0
    %230 = vmatpush1.msra.mxu0 0.0
    %231 = vmatprep.subr.mxu0 0.0
    %232 = vmatpush1.msra.mxu0 0.0
    %233 = vmatprep.subr.mxu0 0.0
    %234 = vmatpush1.msra.mxu0 0.0
    %235 = vmatprep.subr.mxu0 0.0
    %236 = vmatpush1.msra.mxu0 0.0
    %237 = vmatprep.subr.mxu0 0.0
    %238 = vmatpush1.msra.mxu0 0.0
    %239 = vmatprep.subr.mxu0 0.0
    %240 = vmatpush1.msra.mxu0 0.0
    %241 = vmatprep.subr.mxu0 0.0
    %242 = vmatpush1.msra.mxu0 0.0
    %243 = vmatprep.subr.mxu0 0.0
    %244 = vmatpush1.msra.mxu0 0.0
    %245 = vmatprep.subr.mxu0 0.0
    %246 = vmatpush1.msra.mxu0 0.0
    %247 = vmatprep.mubr.f32.mxu0 0.0
    %248 = vmatmul.mubr.f32.gmra.mrb[0].mxu0 0.0
    %v249 = vpop.f32.mrb[0].mxu0
    %v250 = vadd.f32 0.0, %v249
    %v251 = vpop.f32.mrb[0].mxu0
    %252 = vdwg.mxu0
    %v254 = vrot.slane %v250, 1
    %v257 = vadd.f32 %v123, %v250
    %v258 = vadd.f32 %v128, %v254
    %v259 = vxor.u32 %v257, 2147483648
    %v260 = vxor.u32 %v258, 2147483648
    %v261 = vmul.f32 %v259, 1.442695
    %v262 = vpow.pop %v261
    %v263 = vmul.f32 %v260, 1.442695
    %v264 = vpow.pop %v263
    %v265 = vadd.f32 %v262, 1.0
    %v266 = vadd.f32 %v264, 1.0
    %v267 = vrcp.pop %v265
    %v268 = vmul.f32 1.0, %v267
    %v269 = vrcp.pop %v266
    %v270 = vmul.f32 1.0, %v269
    %v271 = vtanh.pop %v257
    %v272 = vtanh.pop %v258
    %v275 = vrot.slane %v272, 7
    %vm276 = vcmask 1041409
    %v277 = vsel %vm276, %v275, %v271
    %279 = vrot.lane.b32.xlu0 %v277, 64
    %v280 = vpop.permute.xlu0 %279
    %v282 = vrot.slane %v280, 1
    %v285 = vmul.f32 %v268, %v280
    %v286 = vmul.f32 %v270, %v282
    %v289 = vrot.slane %v286, 7
    %v290 = vsel %vm276, %v289, %v285
    %v292 = vsel %vm182, %v290, 0.0
    %293 = vrot.lane.b32.xlu0 %v292, 32
    %v294 = vpop.permute.xlu0 %293
    %295 = vrot.lane.b32.xlu0 %v292, 96
    %v296 = vpop.permute.xlu0 %295
    %v297 = vadd.f32 %v294, %v296
    %v298 = vmul.f32 %v268, 0.0
    %v299 = vmul.f32 %v270, 0.0
    %v301 = vrot.slane %v297, 1
    %v304 = vadd.f32 %v298, %v297
    %v305 = vadd.f32 %v299, %v301
    %v306 = vtanh.pop %v304
    %v307 = vtanh.pop %v305
    %v310 = vrot.slane %v307, 7
    %v311 = vsel %vm276, %v310, %v306
    %313 = vrot.lane.b32.xlu0 %v311, 64
    %v314 = vpop.permute.xlu0 %313
    %v316 = vrot.slane %v314, 1
    %v319 = vmul.f32 %v268, %v314
    %v320 = vmul.f32 %v270, %v316
    %v321 = vlaneseq
    %v322 = vshrl.u32 %v321, 7
    %v323 = vsub.s32 0, %v322
    %v324 = vrot.slane %v179, %v323
    %v327 = vrot.slane %v320, 7
    %v328 = vsel %vm276, %v327, %v319
    %330 = vmatprep.subr.mxu0 0.0
    %331 = vmatpush1.msra.mxu0 %v163
    %332 = vmatprep.subr.mxu0 0.0
    %333 = vmatpush1.msra.mxu0 %v164
    %334 = vmatprep.subr.mxu0 0.0
    %335 = vmatpush1.msra.mxu0 %v165
    %336 = vmatprep.subr.mxu0 0.0
    %337 = vmatpush1.msra.mxu0 %v166
    %338 = vmatprep.subr.mxu0 0.0
    %339 = vmatpush1.msra.mxu0 %v167
    %340 = vmatprep.subr.mxu0 0.0
    %341 = vmatpush1.msra.mxu0 %v168
    %342 = vmatprep.subr.mxu0 0.0
    %343 = vmatpush1.msra.mxu0 %v169
    %344 = vmatprep.subr.mxu0 0.0
    %345 = vmatpush1.msra.mxu0 %v170
    %346 = vmatprep.subr.mxu0 0.0
    %347 = vmatpush1.msra.mxu0 %v171
    %348 = vmatprep.subr.mxu0 0.0
    %349 = vmatpush1.msra.mxu0 %v172
    %350 = vmatprep.subr.mxu0 0.0
    %351 = vmatpush1.msra.mxu0 %v173
    %352 = vmatprep.subr.mxu0 0.0
    %353 = vmatpush1.msra.mxu0 %v174
    %354 = vmatprep.subr.mxu0 0.0
    %355 = vmatpush1.msra.mxu0 %v175
    %356 = vmatprep.subr.mxu0 0.0
    %357 = vmatpush1.msra.mxu0 %v176
    %358 = vmatprep.subr.mxu0 0.0
    %359 = vmatpush1.msra.mxu0 %v177
    %360 = vmatprep.subr.mxu0 0.0
    %361 = vmatpush1.msra.mxu0 %v178
    %362 = vmatprep.subr.mxu0 0.0
    %363 = vmatpush1.msra.mxu0 0.0
    %364 = vmatprep.subr.mxu0 0.0
    %365 = vmatpush1.msra.mxu0 0.0
    %366 = vmatprep.subr.mxu0 0.0
    %367 = vmatpush1.msra.mxu0 0.0
    %368 = vmatprep.subr.mxu0 0.0
    %369 = vmatpush1.msra.mxu0 0.0
    %370 = vmatprep.subr.mxu0 0.0
    %371 = vmatpush1.msra.mxu0 0.0
    %372 = vmatprep.subr.mxu0 0.0
    %373 = vmatpush1.msra.mxu0 0.0
    %374 = vmatprep.subr.mxu0 0.0
    %375 = vmatpush1.msra.mxu0 0.0
    %376 = vmatprep.subr.mxu0 0.0
    %377 = vmatpush1.msra.mxu0 0.0
    %378 = vmatprep.subr.mxu0 0.0
    %379 = vmatpush1.msra.mxu0 0.0
    %380 = vmatprep.subr.mxu0 0.0
    %381 = vmatpush1.msra.mxu0 0.0
    %382 = vmatprep.subr.mxu0 0.0
    %383 = vmatpush1.msra.mxu0 0.0
    %384 = vmatprep.subr.mxu0 0.0
    %385 = vmatpush1.msra.mxu0 0.0
    %386 = vmatprep.subr.mxu0 0.0
    %387 = vmatpush1.msra.mxu0 0.0
    %388 = vmatprep.subr.mxu0 0.0
    %389 = vmatpush1.msra.mxu0 0.0
    %390 = vmatprep.subr.mxu0 0.0
    %391 = vmatpush1.msra.mxu0 0.0
    %392 = vmatprep.subr.mxu0 0.0
    %393 = vmatpush1.msra.mxu0 0.0
    %394 = vmatprep.mubr.f32.mxu0 0.0
    %395 = vmatmul.mubr.f32.gmra.mrb[0].mxu0 %v328
    %v396 = vpop.f32.mrb[0].mxu0
    %v397 = vadd.f32 %v324, %v396
    %v398 = vpop.f32.mrb[0].mxu0
    %399 = vdwg.mxu0
    %400 = vmatprep.subr.mxu0 0.0
    %401 = vmatpush1.msra.mxu0 %v147
    %402 = vmatprep.subr.mxu0 0.0
    %403 = vmatpush1.msra.mxu0 %v148
    %404 = vmatprep.subr.mxu0 0.0
    %405 = vmatpush1.msra.mxu0 %v149
    %406 = vmatprep.subr.mxu0 0.0
    %407 = vmatpush1.msra.mxu0 %v150
    %408 = vmatprep.subr.mxu0 0.0
    %409 = vmatpush1.msra.mxu0 %v151
    %410 = vmatprep.subr.mxu0 0.0
    %411 = vmatpush1.msra.mxu0 %v152
    %412 = vmatprep.subr.mxu0 0.0
    %413 = vmatpush1.msra.mxu0 %v153
    %414 = vmatprep.subr.mxu0 0.0
    %415 = vmatpush1.msra.mxu0 %v154
    %416 = vmatprep.subr.mxu0 0.0
    %417 = vmatpush1.msra.mxu0 %v155
    %418 = vmatprep.subr.mxu0 0.0
    %419 = vmatpush1.msra.mxu0 %v156
    %420 = vmatprep.subr.mxu0 0.0
    %421 = vmatpush1.msra.mxu0 %v157
    %422 = vmatprep.subr.mxu0 0.0
    %423 = vmatpush1.msra.mxu0 %v158
    %424 = vmatprep.subr.mxu0 0.0
    %425 = vmatpush1.msra.mxu0 %v159
    %426 = vmatprep.subr.mxu0 0.0
    %427 = vmatpush1.msra.mxu0 %v160
    %428 = vmatprep.subr.mxu0 0.0
    %429 = vmatpush1.msra.mxu0 %v161
    %430 = vmatprep.subr.mxu0 0.0
    %431 = vmatpush1.msra.mxu0 %v162
    %432 = vmatprep.subr.mxu0 0.0
    %433 = vmatpush1.msra.mxu0 0.0
    %434 = vmatprep.subr.mxu0 0.0
    %435 = vmatpush1.msra.mxu0 0.0
    %436 = vmatprep.subr.mxu0 0.0
    %437 = vmatpush1.msra.mxu0 0.0
    %438 = vmatprep.subr.mxu0 0.0
    %439 = vmatpush1.msra.mxu0 0.0
    %440 = vmatprep.subr.mxu0 0.0
    %441 = vmatpush1.msra.mxu0 0.0
    %442 = vmatprep.subr.mxu0 0.0
    %443 = vmatpush1.msra.mxu0 0.0
    %444 = vmatprep.subr.mxu0 0.0
    %445 = vmatpush1.msra.mxu0 0.0
    %446 = vmatprep.subr.mxu0 0.0
    %447 = vmatpush1.msra.mxu0 0.0
    %448 = vmatprep.subr.mxu0 0.0
    %449 = vmatpush1.msra.mxu0 0.0
    %450 = vmatprep.subr.mxu0 0.0
    %451 = vmatpush1.msra.mxu0 0.0
    %452 = vmatprep.subr.mxu0 0.0
    %453 = vmatpush1.msra.mxu0 0.0
    %454 = vmatprep.subr.mxu0 0.0
    %455 = vmatpush1.msra.mxu0 0.0
    %456 = vmatprep.subr.mxu0 0.0
    %457 = vmatpush1.msra.mxu0 0.0
    %458 = vmatprep.subr.mxu0 0.0
    %459 = vmatpush1.msra.mxu0 0.0
    %460 = vmatprep.subr.mxu0 0.0
    %461 = vmatpush1.msra.mxu0 0.0
    %462 = vmatprep.subr.mxu0 0.0
    %463 = vmatpush1.msra.mxu0 0.0
    %464 = vmatprep.mubr.f32.mxu0 0.0
    %465 = vmatmul.mubr.f32.gmra.mrb[0].mxu0 0.0
    %v466 = vpop.f32.mrb[0].mxu0
    %v467 = vadd.f32 0.0, %v466
    %v468 = vpop.f32.mrb[0].mxu0
    %469 = vdwg.mxu0
    %v470 = vadd.f32 %v397, %v467
    %v471 = vxor.u32 %v470, 2147483648
    %v472 = vmul.f32 %v471, 1.442695
    %v473 = vpow.pop %v472
    %v474 = vadd.f32 %v473, 1.0
    %v475 = vrcp.pop %v474
    %v476 = vmul.f32 1.0, %v475
    %v477 = vtanh.pop %v470
    %478 = vrot.lane.b32.xlu0 %v477, 64
    %v479 = vpop.permute.xlu0 %478
    %v480 = vmul.f32 %v476, %v479
    %v481 = vsel %vm182, %v480, 0.0
    %482 = vrot.lane.b32.xlu0 %v481, 32
    %v483 = vpop.permute.xlu0 %482
    %484 = vrot.lane.b32.xlu0 %v481, 96
    %v485 = vpop.permute.xlu0 %484
    %v486 = vadd.f32 %v483, %v485
    %v487 = vmul.f32 %v476, 0.0
    %v488 = vadd.f32 %v487, %v486
    %v489 = vtanh.pop %v488
    %490 = vrot.lane.b32.xlu0 %v489, 64
    %v491 = vpop.permute.xlu0 %490
    %v492 = vmul.f32 %v476, %v491
    %493 = vmatprep.subr.mxu0 0.0
    %494 = vmatpush1.msra.mxu0 %v131
    %495 = vmatprep.subr.mxu0 0.0
    %496 = vmatpush1.msra.mxu0 %v132
    %497 = vmatprep.subr.mxu0 0.0
    %498 = vmatpush1.msra.mxu0 %v133
    %499 = vmatprep.subr.mxu0 0.0
    %500 = vmatpush1.msra.mxu0 %v134
    %501 = vmatprep.subr.mxu0 0.0
    %502 = vmatpush1.msra.mxu0 %v135
    %503 = vmatprep.subr.mxu0 0.0
    %504 = vmatpush1.msra.mxu0 %v136
    %505 = vmatprep.subr.mxu0 0.0
    %506 = vmatpush1.msra.mxu0 %v137
    %507 = vmatprep.subr.mxu0 0.0
    %508 = vmatpush1.msra.mxu0 %v138
    %509 = vmatprep.subr.mxu0 0.0
    %510 = vmatpush1.msra.mxu0 %v139
    %511 = vmatprep.subr.mxu0 0.0
    %512 = vmatpush1.msra.mxu0 %v140
    %513 = vmatprep.subr.mxu0 0.0
    %514 = vmatpush1.msra.mxu0 %v141
    %515 = vmatprep.subr.mxu0 0.0
    %516 = vmatpush1.msra.mxu0 %v142
    %517 = vmatprep.subr.mxu0 0.0
    %518 = vmatpush1.msra.mxu0 %v143
    %519 = vmatprep.subr.mxu0 0.0
    %520 = vmatpush1.msra.mxu0 %v144
    %521 = vmatprep.subr.mxu0 0.0
    %522 = vmatpush1.msra.mxu0 %v145
    %523 = vmatprep.subr.mxu0 0.0
    %524 = vmatpush1.msra.mxu0 %v146
    %525 = vmatprep.subr.mxu0 0.0
    %526 = vmatpush1.msra.mxu0 0.0
    %527 = vmatprep.subr.mxu0 0.0
    %528 = vmatpush1.msra.mxu0 0.0
    %529 = vmatprep.subr.mxu0 0.0
    %530 = vmatpush1.msra.mxu0 0.0
    %531 = vmatprep.subr.mxu0 0.0
    %532 = vmatpush1.msra.mxu0 0.0
    %533 = vmatprep.subr.mxu0 0.0
    %534 = vmatpush1.msra.mxu0 0.0
    %535 = vmatprep.subr.mxu0 0.0
    %536 = vmatpush1.msra.mxu0 0.0
    %537 = vmatprep.subr.mxu0 0.0
    %538 = vmatpush1.msra.mxu0 0.0
    %539 = vmatprep.subr.mxu0 0.0
    %540 = vmatpush1.msra.mxu0 0.0
    %541 = vmatprep.subr.mxu0 0.0
    %542 = vmatpush1.msra.mxu0 0.0
    %543 = vmatprep.subr.mxu0 0.0
    %544 = vmatpush1.msra.mxu0 0.0
    %545 = vmatprep.subr.mxu0 0.0
    %546 = vmatpush1.msra.mxu0 0.0
    %547 = vmatprep.subr.mxu0 0.0
    %548 = vmatpush1.msra.mxu0 0.0
    %549 = vmatprep.subr.mxu0 0.0
    %550 = vmatpush1.msra.mxu0 0.0
    %551 = vmatprep.subr.mxu0 0.0
    %552 = vmatpush1.msra.mxu0 0.0
    %553 = vmatprep.subr.mxu0 0.0
    %554 = vmatpush1.msra.mxu0 0.0
    %555 = vmatprep.subr.mxu0 0.0
    %556 = vmatpush1.msra.mxu0 0.0
    %557 = vmatprep.mubr.f32.mxu0 0.0
    %558 = vmatmul.mubr.f32.gmra.mrb[0].mxu0 %v328
    %v559 = vpop.f32.mrb[0].mxu0
    %v560 = vadd.f32 0.0, %v559
    %v561 = vpop.f32.mrb[0].mxu0
    %562 = vdwg.mxu0
    %v564 = vrot.slane %v560, 7
    %v567 = vadd.f32 %v123, %v564
    %v568 = vadd.f32 %v128, %v560
    %v569 = vxor.u32 %v567, 2147483648
    %v570 = vxor.u32 %v568, 2147483648
    %v571 = vmul.f32 %v569, 1.442695
    %v572 = vpow.pop %v571
    %v573 = vmul.f32 %v570, 1.442695
    %v574 = vpow.pop %v573
    %v575 = vadd.f32 %v572, 1.0
    %v576 = vadd.f32 %v574, 1.0
    %v577 = vrcp.pop %v575
    %v578 = vmul.f32 1.0, %v577
    %v579 = vrcp.pop %v576
    %v580 = vmul.f32 1.0, %v579
    %v581 = vtanh.pop %v567
    %v582 = vtanh.pop %v568
    %v585 = vrot.slane %v581, 1
    %v586 = vsel %vm276, %v582, %v585
    %588 = vrot.lane.b32.xlu0 %v586, 64
    %v589 = vpop.permute.xlu0 %588
    %v591 = vrot.slane %v589, 7
    %v594 = vmul.f32 %v578, %v591
    %v595 = vmul.f32 %v580, %v589
    %v598 = vrot.slane %v594, 1
    %v599 = vsel %vm276, %v595, %v598
    %v601 = vsel %vm182, %v599, 0.0
    %602 = vrot.lane.b32.xlu0 %v601, 32
    %v603 = vpop.permute.xlu0 %602
    %604 = vrot.lane.b32.xlu0 %v601, 96
    %v605 = vpop.permute.xlu0 %604
    %v606 = vadd.f32 %v603, %v605
    %v609 = vrot.slane %v304, 7
    %v610 = vrot.slane %v305, 7
    %v613 = vmul.f32 %v578, %v609
    %v614 = vmul.f32 %v580, %v610
    %v616 = vrot.slane %v606, 7
    %v619 = vadd.f32 %v613, %v616
    %v620 = vadd.f32 %v614, %v606
    %v621 = vtanh.pop %v619
    %v622 = vtanh.pop %v620
    %v625 = vrot.slane %v621, 1
    %v626 = vsel %vm276, %v622, %v625
    %628 = vrot.lane.b32.xlu0 %v626, 64
    %v629 = vpop.permute.xlu0 %628
    %v631 = vrot.slane %v629, 7
    %v634 = vmul.f32 %v578, %v631
    %v635 = vmul.f32 %v580, %v629
    %v638 = vrot.slane %v634, 1
    %v639 = vsel %vm276, %v635, %v638
    %641 = vmatprep.subr.mxu0 0.0
    %642 = vmatpush1.msra.mxu0 %v163
    %643 = vmatprep.subr.mxu0 0.0
    %644 = vmatpush1.msra.mxu0 %v164
    %645 = vmatprep.subr.mxu0 0.0
    %646 = vmatpush1.msra.mxu0 %v165
    %647 = vmatprep.subr.mxu0 0.0
    %648 = vmatpush1.msra.mxu0 %v166
    %649 = vmatprep.subr.mxu0 0.0
    %650 = vmatpush1.msra.mxu0 %v167
    %651 = vmatprep.subr.mxu0 0.0
    %652 = vmatpush1.msra.mxu0 %v168
    %653 = vmatprep.subr.mxu0 0.0
    %654 = vmatpush1.msra.mxu0 %v169
    %655 = vmatprep.subr.mxu0 0.0
    %656 = vmatpush1.msra.mxu0 %v170
    %657 = vmatprep.subr.mxu0 0.0
    %658 = vmatpush1.msra.mxu0 %v171
    %659 = vmatprep.subr.mxu0 0.0
    %660 = vmatpush1.msra.mxu0 %v172
    %661 = vmatprep.subr.mxu0 0.0
    %662 = vmatpush1.msra.mxu0 %v173
    %663 = vmatprep.subr.mxu0 0.0
    %664 = vmatpush1.msra.mxu0 %v174
    %665 = vmatprep.subr.mxu0 0.0
    %666 = vmatpush1.msra.mxu0 %v175
    %667 = vmatprep.subr.mxu0 0.0
    %668 = vmatpush1.msra.mxu0 %v176
    %669 = vmatprep.subr.mxu0 0.0
    %670 = vmatpush1.msra.mxu0 %v177
    %671 = vmatprep.subr.mxu0 0.0
    %672 = vmatpush1.msra.mxu0 %v178
    %673 = vmatprep.subr.mxu0 0.0
    %674 = vmatpush1.msra.mxu0 0.0
    %675 = vmatprep.subr.mxu0 0.0
    %676 = vmatpush1.msra.mxu0 0.0
    %677 = vmatprep.subr.mxu0 0.0
    %678 = vmatpush1.msra.mxu0 0.0
    %679 = vmatprep.subr.mxu0 0.0
    %680 = vmatpush1.msra.mxu0 0.0
    %681 = vmatprep.subr.mxu0 0.0
    %682 = vmatpush1.msra.mxu0 0.0
    %683 = vmatprep.subr.mxu0 0.0
    %684 = vmatpush1.msra.mxu0 0.0
    %685 = vmatprep.subr.mxu0 0.0
    %686 = vmatpush1.msra.mxu0 0.0
    %687 = vmatprep.subr.mxu0 0.0
    %688 = vmatpush1.msra.mxu0 0.0
    %689 = vmatprep.subr.mxu0 0.0
    %690 = vmatpush1.msra.mxu0 0.0
    %691 = vmatprep.subr.mxu0 0.0
    %692 = vmatpush1.msra.mxu0 0.0
    %693 = vmatprep.subr.mxu0 0.0
    %694 = vmatpush1.msra.mxu0 0.0
    %695 = vmatprep.subr.mxu0 0.0
    %696 = vmatpush1.msra.mxu0 0.0
    %697 = vmatprep.subr.mxu0 0.0
    %698 = vmatpush1.msra.mxu0 0.0
    %699 = vmatprep.subr.mxu0 0.0
    %700 = vmatpush1.msra.mxu0 0.0
    %701 = vmatprep.subr.mxu0 0.0
    %702 = vmatpush1.msra.mxu0 0.0
    %703 = vmatprep.subr.mxu0 0.0
    %704 = vmatpush1.msra.mxu0 0.0
    %705 = vmatprep.mubr.f32.mxu0 0.0
    %706 = vmatmul.mubr.f32.gmra.mrb[0].mxu0 %v639
    %v707 = vpop.f32.mrb[0].mxu0
    %v708 = vadd.f32 %v324, %v707
    %v709 = vpop.f32.mrb[0].mxu0
    %710 = vdwg.mxu0
    %711 = vmatprep.subr.mxu0 0.0
    %712 = vmatpush1.msra.mxu0 %v147
    %713 = vmatprep.subr.mxu0 0.0
    %714 = vmatpush1.msra.mxu0 %v148
    %715 = vmatprep.subr.mxu0 0.0
    %716 = vmatpush1.msra.mxu0 %v149
    %717 = vmatprep.subr.mxu0 0.0
    %718 = vmatpush1.msra.mxu0 %v150
    %719 = vmatprep.subr.mxu0 0.0
    %720 = vmatpush1.msra.mxu0 %v151
    %721 = vmatprep.subr.mxu0 0.0
    %722 = vmatpush1.msra.mxu0 %v152
    %723 = vmatprep.subr.mxu0 0.0
    %724 = vmatpush1.msra.mxu0 %v153
    %725 = vmatprep.subr.mxu0 0.0
    %726 = vmatpush1.msra.mxu0 %v154
    %727 = vmatprep.subr.mxu0 0.0
    %728 = vmatpush1.msra.mxu0 %v155
    %729 = vmatprep.subr.mxu0 0.0
    %730 = vmatpush1.msra.mxu0 %v156
    %731 = vmatprep.subr.mxu0 0.0
    %732 = vmatpush1.msra.mxu0 %v157
    %733 = vmatprep.subr.mxu0 0.0
    %734 = vmatpush1.msra.mxu0 %v158
    %735 = vmatprep.subr.mxu0 0.0
    %736 = vmatpush1.msra.mxu0 %v159
    %737 = vmatprep.subr.mxu0 0.0
    %738 = vmatpush1.msra.mxu0 %v160
    %739 = vmatprep.subr.mxu0 0.0
    %740 = vmatpush1.msra.mxu0 %v161
    %741 = vmatprep.subr.mxu0 0.0
    %742 = vmatpush1.msra.mxu0 %v162
    %743 = vmatprep.subr.mxu0 0.0
    %744 = vmatpush1.msra.mxu0 0.0
    %745 = vmatprep.subr.mxu0 0.0
    %746 = vmatpush1.msra.mxu0 0.0
    %747 = vmatprep.subr.mxu0 0.0
    %748 = vmatpush1.msra.mxu0 0.0
    %749 = vmatprep.subr.mxu0 0.0
    %750 = vmatpush1.msra.mxu0 0.0
    %751 = vmatprep.subr.mxu0 0.0
    %752 = vmatpush1.msra.mxu0 0.0
    %753 = vmatprep.subr.mxu0 0.0
    %754 = vmatpush1.msra.mxu0 0.0
    %755 = vmatprep.subr.mxu0 0.0
    %756 = vmatpush1.msra.mxu0 0.0
    %757 = vmatprep.subr.mxu0 0.0
    %758 = vmatpush1.msra.mxu0 0.0
    %759 = vmatprep.subr.mxu0 0.0
    %760 = vmatpush1.msra.mxu0 0.0
    %761 = vmatprep.subr.mxu0 0.0
    %762 = vmatpush1.msra.mxu0 0.0
    %763 = vmatprep.subr.mxu0 0.0
    %764 = vmatpush1.msra.mxu0 0.0
    %765 = vmatprep.subr.mxu0 0.0
    %766 = vmatpush1.msra.mxu0 0.0
    %767 = vmatprep.subr.mxu0 0.0
    %768 = vmatpush1.msra.mxu0 0.0
    %769 = vmatprep.subr.mxu0 0.0
    %770 = vmatpush1.msra.mxu0 0.0
    %771 = vmatprep.subr.mxu0 0.0
    %772 = vmatpush1.msra.mxu0 0.0
    %773 = vmatprep.subr.mxu0 0.0
    %774 = vmatpush1.msra.mxu0 0.0
    %775 = vmatprep.mubr.f32.mxu0 0.0
    %776 = vmatmul.mubr.f32.gmra.mrb[0].mxu0 %v492
    %v777 = vpop.f32.mrb[0].mxu0
    %v778 = vadd.f32 0.0, %v777
    %v779 = vpop.f32.mrb[0].mxu0
    %780 = vdwg.mxu0
    %v781 = vadd.f32 %v708, %v778
    %v782 = vxor.u32 %v781, 2147483648
    %v783 = vmul.f32 %v782, 1.442695
    %v784 = vpow.pop %v783
    %v785 = vadd.f32 %v784, 1.0
    %v786 = vrcp.pop %v785
    %v787 = vmul.f32 1.0, %v786
    %v788 = vtanh.pop %v781
    %789 = vrot.lane.b32.xlu0 %v788, 64
    %v790 = vpop.permute.xlu0 %789
    %v791 = vmul.f32 %v787, %v790
    %v792 = vsel %vm182, %v791, 0.0
    %793 = vrot.lane.b32.xlu0 %v792, 32
    %v794 = vpop.permute.xlu0 %793
    %795 = vrot.lane.b32.xlu0 %v792, 96
    %v796 = vpop.permute.xlu0 %795
    %v797 = vadd.f32 %v794, %v796
    %v798 = vmul.f32 %v787, %v488
    %v799 = vadd.f32 %v798, %v797
    %v800 = vtanh.pop %v799
    %801 = vrot.lane.b32.xlu0 %v800, 64
    %v802 = vpop.permute.xlu0 %801
    %v803 = vmul.f32 %v787, %v802
    %804 = vmatprep.subr.mxu0 0.0
    %805 = vmatpush1.msra.mxu0 %v131
    %806 = vmatprep.subr.mxu0 0.0
    %807 = vmatpush1.msra.mxu0 %v132
    %808 = vmatprep.subr.mxu0 0.0
    %809 = vmatpush1.msra.mxu0 %v133
    %810 = vmatprep.subr.mxu0 0.0
    %811 = vmatpush1.msra.mxu0 %v134
    %812 = vmatprep.subr.mxu0 0.0
    %813 = vmatpush1.msra.mxu0 %v135
    %814 = vmatprep.subr.mxu0 0.0
    %815 = vmatpush1.msra.mxu0 %v136
    %816 = vmatprep.subr.mxu0 0.0
    %817 = vmatpush1.msra.mxu0 %v137
    %818 = vmatprep.subr.mxu0 0.0
    %819 = vmatpush1.msra.mxu0 %v138
    %820 = vmatprep.subr.mxu0 0.0
    %821 = vmatpush1.msra.mxu0 %v139
    %822 = vmatprep.subr.mxu0 0.0
    %823 = vmatpush1.msra.mxu0 %v140
    %824 = vmatprep.subr.mxu0 0.0
    %825 = vmatpush1.msra.mxu0 %v141
    %826 = vmatprep.subr.mxu0 0.0
    %827 = vmatpush1.msra.mxu0 %v142
    %828 = vmatprep.subr.mxu0 0.0
    %829 = vmatpush1.msra.mxu0 %v143
    %830 = vmatprep.subr.mxu0 0.0
    %831 = vmatpush1.msra.mxu0 %v144
    %832 = vmatprep.subr.mxu0 0.0
    %833 = vmatpush1.msra.mxu0 %v145
    %834 = vmatprep.subr.mxu0 0.0
    %835 = vmatpush1.msra.mxu0 %v146
    %836 = vmatprep.subr.mxu0 0.0
    %837 = vmatpush1.msra.mxu0 0.0
    %838 = vmatprep.subr.mxu0 0.0
    %839 = vmatpush1.msra.mxu0 0.0
    %840 = vmatprep.subr.mxu0 0.0
    %841 = vmatpush1.msra.mxu0 0.0
    %842 = vmatprep.subr.mxu0 0.0
    %843 = vmatpush1.msra.mxu0 0.0
    %844 = vmatprep.subr.mxu0 0.0
    %845 = vmatpush1.msra.mxu0 0.0
    %846 = vmatprep.subr.mxu0 0.0
    %847 = vmatpush1.msra.mxu0 0.0
    %848 = vmatprep.subr.mxu0 0.0
    %849 = vmatpush1.msra.mxu0 0.0
    %850 = vmatprep.subr.mxu0 0.0
    %851 = vmatpush1.msra.mxu0 0.0
    %852 = vmatprep.subr.mxu0 0.0
    %853 = vmatpush1.msra.mxu0 0.0
    %854 = vmatprep.subr.mxu0 0.0
    %855 = vmatpush1.msra.mxu0 0.0
    %856 = vmatprep.subr.mxu0 0.0
    %857 = vmatpush1.msra.mxu0 0.0
    %858 = vmatprep.subr.mxu0 0.0
    %859 = vmatpush1.msra.mxu0 0.0
    %860 = vmatprep.subr.mxu0 0.0
    %861 = vmatpush1.msra.mxu0 0.0
    %862 = vmatprep.subr.mxu0 0.0
    %863 = vmatpush1.msra.mxu0 0.0
    %864 = vmatprep.subr.mxu0 0.0
    %865 = vmatpush1.msra.mxu0 0.0
    %866 = vmatprep.subr.mxu0 0.0
    %867 = vmatpush1.msra.mxu0 0.0
    %868 = vmatprep.mubr.f32.mxu0 0.0
    %869 = vmatmul.mubr.f32.gmra.mrb[0].mxu0 %v639
    %v870 = vpop.f32.mrb[0].mxu0
    %v871 = vadd.f32 0.0, %v870
    %v872 = vpop.f32.mrb[0].mxu0
    %873 = vdwg.mxu0
    %v875 = vrot.slane %v871, 6
    %v876 = vrot.slane %v871, 7
    %v879 = vadd.f32 %v123, %v875
    %v880 = vadd.f32 %v128, %v876
    %v881 = vxor.u32 %v879, 2147483648
    %v882 = vxor.u32 %v880, 2147483648
    %v883 = vmul.f32 %v881, 1.442695
    %v884 = vpow.pop %v883
    %v885 = vmul.f32 %v882, 1.442695
    %v886 = vpow.pop %v885
    %v887 = vadd.f32 %v884, 1.0
    %v888 = vadd.f32 %v886, 1.0
    %v889 = vrcp.pop %v887
    %v890 = vmul.f32 1.0, %v889
    %v891 = vrcp.pop %v888
    %v892 = vmul.f32 1.0, %v891
    %v893 = vtanh.pop %v879
    %v894 = vtanh.pop %v880
    %v897 = vrot.slane %v893, 2
    %v898 = vrot.slane %v894, 1
    %v899 = vsel %vm276, %v898, %v897
    %901 = vrot.lane.b32.xlu0 %v899, 64
    %v902 = vpop.permute.xlu0 %901
    %v904 = vrot.slane %v902, 6
    %v905 = vrot.slane %v902, 7
    %v908 = vmul.f32 %v890, %v904
    %v909 = vmul.f32 %v892, %v905
    %v912 = vrot.slane %v908, 2
    %v913 = vrot.slane %v909, 1
    %v914 = vsel %vm276, %v913, %v912
    %v916 = vsel %vm182, %v914, 0.0
    %917 = vrot.lane.b32.xlu0 %v916, 32
    %v918 = vpop.permute.xlu0 %917
    %919 = vrot.lane.b32.xlu0 %v916, 96
    %v920 = vpop.permute.xlu0 %919
    %v921 = vadd.f32 %v918, %v920
    %v924 = vrot.slane %v619, 7
    %v925 = vrot.slane %v620, 7
    %v928 = vmul.f32 %v890, %v924
    %v929 = vmul.f32 %v892, %v925
    %v931 = vrot.slane %v921, 6
    %v932 = vrot.slane %v921, 7
    %v935 = vadd.f32 %v928, %v931
    %v936 = vadd.f32 %v929, %v932
    %v937 = vtanh.pop %v935
    %v938 = vtanh.pop %v936
    %v941 = vrot.slane %v937, 2
    %v942 = vrot.slane %v938, 1
    %v943 = vsel %vm276, %v942, %v941
    %945 = vrot.lane.b32.xlu0 %v943, 64
    %v946 = vpop.permute.xlu0 %945
    %v948 = vrot.slane %v946, 6
    %v949 = vrot.slane %v946, 7
    %v952 = vmul.f32 %v890, %v948
    %v953 = vmul.f32 %v892, %v949
    %v956 = vrot.slane %v952, 2
    %v957 = vrot.slane %v953, 1
    %v958 = vsel %vm276, %v957, %v956
    %960 = vmatprep.subr.mxu0 0.0
    %961 = vmatpush1.msra.mxu0 %v163
    %962 = vmatprep.subr.mxu0 0.0
    %963 = vmatpush1.msra.mxu0 %v164
    %964 = vmatprep.subr.mxu0 0.0
    %965 = vmatpush1.msra.mxu0 %v165
    %966 = vmatprep.subr.mxu0 0.0
    %967 = vmatpush1.msra.mxu0 %v166
    %968 = vmatprep.subr.mxu0 0.0
    %969 = vmatpush1.msra.mxu0 %v167
    %970 = vmatprep.subr.mxu0 0.0
    %971 = vmatpush1.msra.mxu0 %v168
    %972 = vmatprep.subr.mxu0 0.0
    %973 = vmatpush1.msra.mxu0 %v169
    %974 = vmatprep.subr.mxu0 0.0
    %975 = vmatpush1.msra.mxu0 %v170
    %976 = vmatprep.subr.mxu0 0.0
    %977 = vmatpush1.msra.mxu0 %v171
    %978 = vmatprep.subr.mxu0 0.0
    %979 = vmatpush1.msra.mxu0 %v172
    %980 = vmatprep.subr.mxu0 0.0
    %981 = vmatpush1.msra.mxu0 %v173
    %982 = vmatprep.subr.mxu0 0.0
    %983 = vmatpush1.msra.mxu0 %v174
    %984 = vmatprep.subr.mxu0 0.0
    %985 = vmatpush1.msra.mxu0 %v175
    %986 = vmatprep.subr.mxu0 0.0
    %987 = vmatpush1.msra.mxu0 %v176
    %988 = vmatprep.subr.mxu0 0.0
    %989 = vmatpush1.msra.mxu0 %v177
    %990 = vmatprep.subr.mxu0 0.0
    %991 = vmatpush1.msra.mxu0 %v178
    %992 = vmatprep.subr.mxu0 0.0
    %993 = vmatpush1.msra.mxu0 0.0
    %994 = vmatprep.subr.mxu0 0.0
    %995 = vmatpush1.msra.mxu0 0.0
    %996 = vmatprep.subr.mxu0 0.0
    %997 = vmatpush1.msra.mxu0 0.0
    %998 = vmatprep.subr.mxu0 0.0
    %999 = vmatpush1.msra.mxu0 0.0
    %1000 = vmatprep.subr.mxu0 0.0
    %1001 = vmatpush1.msra.mxu0 0.0
    %1002 = vmatprep.subr.mxu0 0.0
    %1003 = vmatpush1.msra.mxu0 0.0
    %1004 = vmatprep.subr.mxu0 0.0
    %1005 = vmatpush1.msra.mxu0 0.0
    %1006 = vmatprep.subr.mxu0 0.0
    %1007 = vmatpush1.msra.mxu0 0.0
    %1008 = vmatprep.subr.mxu0 0.0
    %1009 = vmatpush1.msra.mxu0 0.0
    %1010 = vmatprep.subr.mxu0 0.0
    %1011 = vmatpush1.msra.mxu0 0.0
    %1012 = vmatprep.subr.mxu0 0.0
    %1013 = vmatpush1.msra.mxu0 0.0
    %1014 = vmatprep.subr.mxu0 0.0
    %1015 = vmatpush1.msra.mxu0 0.0
    %1016 = vmatprep.subr.mxu0 0.0
    %1017 = vmatpush1.msra.mxu0 0.0
    %1018 = vmatprep.subr.mxu0 0.0
    %1019 = vmatpush1.msra.mxu0 0.0
    %1020 = vmatprep.subr.mxu0 0.0
    %1021 = vmatpush1.msra.mxu0 0.0
    %1022 = vmatprep.subr.mxu0 0.0
    %1023 = vmatpush1.msra.mxu0 0.0
    %1024 = vmatprep.mubr.f32.mxu0 0.0
    %1025 = vmatmul.mubr.f32.gmra.mrb[0].mxu0 %v958
    %v1026 = vpop.f32.mrb[0].mxu0
    %v1027 = vadd.f32 %v324, %v1026
    %v1028 = vpop.f32.mrb[0].mxu0
    %1029 = vdwg.mxu0
    %1030 = vmatprep.subr.mxu0 0.0
    %1031 = vmatpush1.msra.mxu0 %v147
    %1032 = vmatprep.subr.mxu0 0.0
    %1033 = vmatpush1.msra.mxu0 %v148
    %1034 = vmatprep.subr.mxu0 0.0
    %1035 = vmatpush1.msra.mxu0 %v149
    %1036 = vmatprep.subr.mxu0 0.0
    %1037 = vmatpush1.msra.mxu0 %v150
    %1038 = vmatprep.subr.mxu0 0.0
    %1039 = vmatpush1.msra.mxu0 %v151
    %1040 = vmatprep.subr.mxu0 0.0
    %1041 = vmatpush1.msra.mxu0 %v152
    %1042 = vmatprep.subr.mxu0 0.0
    %1043 = vmatpush1.msra.mxu0 %v153
    %1044 = vmatprep.subr.mxu0 0.0
    %1045 = vmatpush1.msra.mxu0 %v154
    %1046 = vmatprep.subr.mxu0 0.0
    %1047 = vmatpush1.msra.mxu0 %v155
    %1048 = vmatprep.subr.mxu0 0.0
    %1049 = vmatpush1.msra.mxu0 %v156
    %1050 = vmatprep.subr.mxu0 0.0
    %1051 = vmatpush1.msra.mxu0 %v157
    %1052 = vmatprep.subr.mxu0 0.0
    %1053 = vmatpush1.msra.mxu0 %v158
    %1054 = vmatprep.subr.mxu0 0.0
    %1055 = vmatpush1.msra.mxu0 %v159
    %1056 = vmatprep.subr.mxu0 0.0
    %1057 = vmatpush1.msra.mxu0 %v160
    %1058 = vmatprep.subr.mxu0 0.0
    %1059 = vmatpush1.msra.mxu0 %v161
    %1060 = vmatprep.subr.mxu0 0.0
    %1061 = vmatpush1.msra.mxu0 %v162
    %1062 = vmatprep.subr.mxu0 0.0
    %1063 = vmatpush1.msra.mxu0 0.0
    %1064 = vmatprep.subr.mxu0 0.0
    %1065 = vmatpush1.msra.mxu0 0.0
    %1066 = vmatprep.subr.mxu0 0.0
    %1067 = vmatpush1.msra.mxu0 0.0
    %1068 = vmatprep.subr.mxu0 0.0
    %1069 = vmatpush1.msra.mxu0 0.0
    %1070 = vmatprep.subr.mxu0 0.0
    %1071 = vmatpush1.msra.mxu0 0.0
    %1072 = vmatprep.subr.mxu0 0.0
    %1073 = vmatpush1.msra.mxu0 0.0
    %1074 = vmatprep.subr.mxu0 0.0
    %1075 = vmatpush1.msra.mxu0 0.0
    %1076 = vmatprep.subr.mxu0 0.0
    %1077 = vmatpush1.msra.mxu0 0.0
    %1078 = vmatprep.subr.mxu0 0.0
    %1079 = vmatpush1.msra.mxu0 0.0
    %1080 = vmatprep.subr.mxu0 0.0
    %1081 = vmatpush1.msra.mxu0 0.0
    %1082 = vmatprep.subr.mxu0 0.0
    %1083 = vmatpush1.msra.mxu0 0.0
    %1084 = vmatprep.subr.mxu0 0.0
    %1085 = vmatpush1.msra.mxu0 0.0
    %1086 = vmatprep.subr.mxu0 0.0
    %1087 = vmatpush1.msra.mxu0 0.0
    %1088 = vmatprep.subr.mxu0 0.0
    %1089 = vmatpush1.msra.mxu0 0.0
    %1090 = vmatprep.subr.mxu0 0.0
    %1091 = vmatpush1.msra.mxu0 0.0
    %1092 = vmatprep.subr.mxu0 0.0
    %1093 = vmatpush1.msra.mxu0 0.0
    %1094 = vmatprep.mubr.f32.mxu0 0.0
    %1095 = vmatmul.mubr.f32.gmra.mrb[0].mxu0 %v803
    %v1096 = vpop.f32.mrb[0].mxu0
    %v1097 = vadd.f32 0.0, %v1096
    %v1098 = vpop.f32.mrb[0].mxu0
    %1099 = vdwg.mxu0
    %v1100 = vadd.f32 %v1027, %v1097
    %v1101 = vxor.u32 %v1100, 2147483648
    %v1102 = vmul.f32 %v1101, 1.442695
    %v1103 = vpow.pop %v1102
    %v1104 = vadd.f32 %v1103, 1.0
    %v1105 = vrcp.pop %v1104
    %v1106 = vmul.f32 1.0, %v1105
    %v1107 = vtanh.pop %v1100
    %1108 = vrot.lane.b32.xlu0 %v1107, 64
    %v1109 = vpop.permute.xlu0 %1108
    %v1110 = vmul.f32 %v1106, %v1109
    %v1111 = vsel %vm182, %v1110, 0.0
    %1112 = vrot.lane.b32.xlu0 %v1111, 32
    %v1113 = vpop.permute.xlu0 %1112
    %1114 = vrot.lane.b32.xlu0 %v1111, 96
    %v1115 = vpop.permute.xlu0 %1114
    %v1116 = vadd.f32 %v1113, %v1115
    %v1117 = vmul.f32 %v1106, %v799
    %v1118 = vadd.f32 %v1117, %v1116
    %v1119 = vtanh.pop %v1118
    %1120 = vrot.lane.b32.xlu0 %v1119, 64
    %v1121 = vpop.permute.xlu0 %1120
    %v1122 = vmul.f32 %v1106, %v1121
    %1123 = vmatprep.subr.mxu0 0.0
    %1124 = vmatpush1.msra.mxu0 %v131
    %1125 = vmatprep.subr.mxu0 0.0
    %1126 = vmatpush1.msra.mxu0 %v132
    %1127 = vmatprep.subr.mxu0 0.0
    %1128 = vmatpush1.msra.mxu0 %v133
    %1129 = vmatprep.subr.mxu0 0.0
    %1130 = vmatpush1.msra.mxu0 %v134
    %1131 = vmatprep.subr.mxu0 0.0
    %1132 = vmatpush1.msra.mxu0 %v135
    %1133 = vmatprep.subr.mxu0 0.0
    %1134 = vmatpush1.msra.mxu0 %v136
    %1135 = vmatprep.subr.mxu0 0.0
    %1136 = vmatpush1.msra.mxu0 %v137
    %1137 = vmatprep.subr.mxu0 0.0
    %1138 = vmatpush1.msra.mxu0 %v138
    %1139 = vmatprep.subr.mxu0 0.0
    %1140 = vmatpush1.msra.mxu0 %v139
    %1141 = vmatprep.subr.mxu0 0.0
    %1142 = vmatpush1.msra.mxu0 %v140
    %1143 = vmatprep.subr.mxu0 0.0
    %1144 = vmatpush1.msra.mxu0 %v141
    %1145 = vmatprep.subr.mxu0 0.0
    %1146 = vmatpush1.msra.mxu0 %v142
    %1147 = vmatprep.subr.mxu0 0.0
    %1148 = vmatpush1.msra.mxu0 %v143
    %1149 = vmatprep.subr.mxu0 0.0
    %1150 = vmatpush1.msra.mxu0 %v144
    %1151 = vmatprep.subr.mxu0 0.0
    %1152 = vmatpush1.msra.mxu0 %v145
    %1153 = vmatprep.subr.mxu0 0.0
    %1154 = vmatpush1.msra.mxu0 %v146
    %1155 = vmatprep.subr.mxu0 0.0
    %1156 = vmatpush1.msra.mxu0 0.0
    %1157 = vmatprep.subr.mxu0 0.0
    %1158 = vmatpush1.msra.mxu0 0.0
    %1159 = vmatprep.subr.mxu0 0.0
    %1160 = vmatpush1.msra.mxu0 0.0
    %1161 = vmatprep.subr.mxu0 0.0
    %1162 = vmatpush1.msra.mxu0 0.0
    %1163 = vmatprep.subr.mxu0 0.0
    %1164 = vmatpush1.msra.mxu0 0.0
    %1165 = vmatprep.subr.mxu0 0.0
    %1166 = vmatpush1.msra.mxu0 0.0
    %1167 = vmatprep.subr.mxu0 0.0
    %1168 = vmatpush1.msra.mxu0 0.0
    %1169 = vmatprep.subr.mxu0 0.0
    %1170 = vmatpush1.msra.mxu0 0.0
    %1171 = vmatprep.subr.mxu0 0.0
    %1172 = vmatpush1.msra.mxu0 0.0
    %1173 = vmatprep.subr.mxu0 0.0
    %1174 = vmatpush1.msra.mxu0 0.0
    %1175 = vmatprep.subr.mxu0 0.0
    %1176 = vmatpush1.msra.mxu0 0.0
    %1177 = vmatprep.subr.mxu0 0.0
    %1178 = vmatpush1.msra.mxu0 0.0
    %1179 = vmatprep.subr.mxu0 0.0
    %1180 = vmatpush1.msra.mxu0 0.0
    %1181 = vmatprep.subr.mxu0 0.0
    %1182 = vmatpush1.msra.mxu0 0.0
    %1183 = vmatprep.subr.mxu0 0.0
    %1184 = vmatpush1.msra.mxu0 0.0
    %1185 = vmatprep.subr.mxu0 0.0
    %1186 = vmatpush1.msra.mxu0 0.0
    %1187 = vmatprep.mubr.f32.mxu0 0.0
    %1188 = vmatmul.mubr.f32.gmra.mrb[0].mxu0 %v958
    %v1189 = vpop.f32.mrb[0].mxu0
    %v1190 = vadd.f32 0.0, %v1189
    %v1191 = vpop.f32.mrb[0].mxu0
    %1192 = vdwg.mxu0
    %v1194 = vrot.slane %v1190, 5
    %v1195 = vrot.slane %v1190, 6
    %v1198 = vadd.f32 %v123, %v1194
    %v1199 = vadd.f32 %v128, %v1195
    %v1200 = vxor.u32 %v1198, 2147483648
    %v1201 = vxor.u32 %v1199, 2147483648
    %v1202 = vmul.f32 %v1200, 1.442695
    %v1203 = vpow.pop %v1202
    %v1204 = vmul.f32 %v1201, 1.442695
    %v1205 = vpow.pop %v1204
    %v1206 = vadd.f32 %v1203, 1.0
    %v1207 = vadd.f32 %v1205, 1.0
    %v1208 = vrcp.pop %v1206
    %v1209 = vmul.f32 1.0, %v1208
    %v1210 = vrcp.pop %v1207
    %v1211 = vmul.f32 1.0, %v1210
    %v1212 = vtanh.pop %v1198
    %v1213 = vtanh.pop %v1199
    %v1216 = vrot.slane %v1212, 3
    %v1217 = vrot.slane %v1213, 2
    %v1218 = vsel %vm276, %v1217, %v1216
    %1220 = vrot.lane.b32.xlu0 %v1218, 64
    %v1221 = vpop.permute.xlu0 %1220
    %v1223 = vrot.slane %v1221, 5
    %v1224 = vrot.slane %v1221, 6
    %v1227 = vmul.f32 %v1209, %v1223
    %v1228 = vmul.f32 %v1211, %v1224
    %v1231 = vrot.slane %v1227, 3
    %v1232 = vrot.slane %v1228, 2
    %v1233 = vsel %vm276, %v1232, %v1231
    %v1235 = vsel %vm182, %v1233, 0.0
    %1236 = vrot.lane.b32.xlu0 %v1235, 32
    %v1237 = vpop.permute.xlu0 %1236
    %1238 = vrot.lane.b32.xlu0 %v1235, 96
    %v1239 = vpop.permute.xlu0 %1238
    %v1240 = vadd.f32 %v1237, %v1239
    %v1243 = vrot.slane %v935, 7
    %v1244 = vrot.slane %v936, 7
    %v1247 = vmul.f32 %v1209, %v1243
    %v1248 = vmul.f32 %v1211, %v1244
    %v1250 = vrot.slane %v1240, 5
    %v1251 = vrot.slane %v1240, 6
    %v1254 = vadd.f32 %v1247, %v1250
    %v1255 = vadd.f32 %v1248, %v1251
    %v1256 = vtanh.pop %v1254
    %v1257 = vtanh.pop %v1255
    %v1260 = vrot.slane %v1256, 3
    %v1261 = vrot.slane %v1257, 2
    %v1262 = vsel %vm276, %v1261, %v1260
    %1264 = vrot.lane.b32.xlu0 %v1262, 64
    %v1265 = vpop.permute.xlu0 %1264
    %v1267 = vrot.slane %v1265, 5
    %v1268 = vrot.slane %v1265, 6
    %v1271 = vmul.f32 %v1209, %v1267
    %v1272 = vmul.f32 %v1211, %v1268
    %v1275 = vrot.slane %v1271, 3
    %v1276 = vrot.slane %v1272, 2
    %v1277 = vsel %vm276, %v1276, %v1275
    %1279 = vmatprep.subr.mxu0 0.0
    %1280 = vmatpush1.msra.mxu0 %v163
    %1281 = vmatprep.subr.mxu0 0.0
    %1282 = vmatpush1.msra.mxu0 %v164
    %1283 = vmatprep.subr.mxu0 0.0
    %1284 = vmatpush1.msra.mxu0 %v165
    %1285 = vmatprep.subr.mxu0 0.0
    %1286 = vmatpush1.msra.mxu0 %v166
    %1287 = vmatprep.subr.mxu0 0.0
    %1288 = vmatpush1.msra.mxu0 %v167
    %1289 = vmatprep.subr.mxu0 0.0
    %1290 = vmatpush1.msra.mxu0 %v168
    %1291 = vmatprep.subr.mxu0 0.0
    %1292 = vmatpush1.msra.mxu0 %v169
    %1293 = vmatprep.subr.mxu0 0.0
    %1294 = vmatpush1.msra.mxu0 %v170
    %1295 = vmatprep.subr.mxu0 0.0
    %1296 = vmatpush1.msra.mxu0 %v171
    %1297 = vmatprep.subr.mxu0 0.0
    %1298 = vmatpush1.msra.mxu0 %v172
    %1299 = vmatprep.subr.mxu0 0.0
    %1300 = vmatpush1.msra.mxu0 %v173
    %1301 = vmatprep.subr.mxu0 0.0
    %1302 = vmatpush1.msra.mxu0 %v174
    %1303 = vmatprep.subr.mxu0 0.0
    %1304 = vmatpush1.msra.mxu0 %v175
    %1305 = vmatprep.subr.mxu0 0.0
    %1306 = vmatpush1.msra.mxu0 %v176
    %1307 = vmatprep.subr.mxu0 0.0
    %1308 = vmatpush1.msra.mxu0 %v177
    %1309 = vmatprep.subr.mxu0 0.0
    %1310 = vmatpush1.msra.mxu0 %v178
    %1311 = vmatprep.subr.mxu0 0.0
    %1312 = vmatpush1.msra.mxu0 0.0
    %1313 = vmatprep.subr.mxu0 0.0
    %1314 = vmatpush1.msra.mxu0 0.0
    %1315 = vmatprep.subr.mxu0 0.0
    %1316 = vmatpush1.msra.mxu0 0.0
    %1317 = vmatprep.subr.mxu0 0.0
    %1318 = vmatpush1.msra.mxu0 0.0
    %1319 = vmatprep.subr.mxu0 0.0
    %1320 = vmatpush1.msra.mxu0 0.0
    %1321 = vmatprep.subr.mxu0 0.0
    %1322 = vmatpush1.msra.mxu0 0.0
    %1323 = vmatprep.subr.mxu0 0.0
    %1324 = vmatpush1.msra.mxu0 0.0
    %1325 = vmatprep.subr.mxu0 0.0
    %1326 = vmatpush1.msra.mxu0 0.0
    %1327 = vmatprep.subr.mxu0 0.0
    %1328 = vmatpush1.msra.mxu0 0.0
    %1329 = vmatprep.subr.mxu0 0.0
    %1330 = vmatpush1.msra.mxu0 0.0
    %1331 = vmatprep.subr.mxu0 0.0
    %1332 = vmatpush1.msra.mxu0 0.0
    %1333 = vmatprep.subr.mxu0 0.0
    %1334 = vmatpush1.msra.mxu0 0.0
    %1335 = vmatprep.subr.mxu0 0.0
    %1336 = vmatpush1.msra.mxu0 0.0
    %1337 = vmatprep.subr.mxu0 0.0
    %1338 = vmatpush1.msra.mxu0 0.0
    %1339 = vmatprep.subr.mxu0 0.0
    %1340 = vmatpush1.msra.mxu0 0.0
    %1341 = vmatprep.subr.mxu0 0.0
    %1342 = vmatpush1.msra.mxu0 0.0
    %1343 = vmatprep.mubr.f32.mxu0 0.0
    %1344 = vmatmul.mubr.f32.gmra.mrb[0].mxu0 %v1277
    %v1345 = vpop.f32.mrb[0].mxu0
    %v1346 = vadd.f32 %v324, %v1345
    %v1347 = vpop.f32.mrb[0].mxu0
    %1348 = vdwg.mxu0
    %1349 = vmatprep.subr.mxu0 0.0
    %1350 = vmatpush1.msra.mxu0 %v147
    %1351 = vmatprep.subr.mxu0 0.0
    %1352 = vmatpush1.msra.mxu0 %v148
    %1353 = vmatprep.subr.mxu0 0.0
    %1354 = vmatpush1.msra.mxu0 %v149
    %1355 = vmatprep.subr.mxu0 0.0
    %1356 = vmatpush1.msra.mxu0 %v150
    %1357 = vmatprep.subr.mxu0 0.0
    %1358 = vmatpush1.msra.mxu0 %v151
    %1359 = vmatprep.subr.mxu0 0.0
    %1360 = vmatpush1.msra.mxu0 %v152
    %1361 = vmatprep.subr.mxu0 0.0
    %1362 = vmatpush1.msra.mxu0 %v153
    %1363 = vmatprep.subr.mxu0 0.0
    %1364 = vmatpush1.msra.mxu0 %v154
    %1365 = vmatprep.subr.mxu0 0.0
    %1366 = vmatpush1.msra.mxu0 %v155
    %1367 = vmatprep.subr.mxu0 0.0
    %1368 = vmatpush1.msra.mxu0 %v156
    %1369 = vmatprep.subr.mxu0 0.0
    %1370 = vmatpush1.msra.mxu0 %v157
    %1371 = vmatprep.subr.mxu0 0.0
    %1372 = vmatpush1.msra.mxu0 %v158
    %1373 = vmatprep.subr.mxu0 0.0
    %1374 = vmatpush1.msra.mxu0 %v159
    %1375 = vmatprep.subr.mxu0 0.0
    %1376 = vmatpush1.msra.mxu0 %v160
    %1377 = vmatprep.subr.mxu0 0.0
    %1378 = vmatpush1.msra.mxu0 %v161
    %1379 = vmatprep.subr.mxu0 0.0
    %1380 = vmatpush1.msra.mxu0 %v162
    %1381 = vmatprep.subr.mxu0 0.0
    %1382 = vmatpush1.msra.mxu0 0.0
    %1383 = vmatprep.subr.mxu0 0.0
    %1384 = vmatpush1.msra.mxu0 0.0
    %1385 = vmatprep.subr.mxu0 0.0
    %1386 = vmatpush1.msra.mxu0 0.0
    %1387 = vmatprep.subr.mxu0 0.0
    %1388 = vmatpush1.msra.mxu0 0.0
    %1389 = vmatprep.subr.mxu0 0.0
    %1390 = vmatpush1.msra.mxu0 0.0
    %1391 = vmatprep.subr.mxu0 0.0
    %1392 = vmatpush1.msra.mxu0 0.0
    %1393 = vmatprep.subr.mxu0 0.0
    %1394 = vmatpush1.msra.mxu0 0.0
    %1395 = vmatprep.subr.mxu0 0.0
    %1396 = vmatpush1.msra.mxu0 0.0
    %1397 = vmatprep.subr.mxu0 0.0
    %1398 = vmatpush1.msra.mxu0 0.0
    %1399 = vmatprep.subr.mxu0 0.0
    %1400 = vmatpush1.msra.mxu0 0.0
    %1401 = vmatprep.subr.mxu0 0.0
    %1402 = vmatpush1.msra.mxu0 0.0
    %1403 = vmatprep.subr.mxu0 0.0
    %1404 = vmatpush1.msra.mxu0 0.0
    %1405 = vmatprep.subr.mxu0 0.0
    %1406 = vmatpush1.msra.mxu0 0.0
    %1407 = vmatprep.subr.mxu0 0.0
    %1408 = vmatpush1.msra.mxu0 0.0
    %1409 = vmatprep.subr.mxu0 0.0
    %1410 = vmatpush1.msra.mxu0 0.0
    %1411 = vmatprep.subr.mxu0 0.0
    %1412 = vmatpush1.msra.mxu0 0.0
    %1413 = vmatprep.mubr.f32.mxu0 0.0
    %1414 = vmatmul.mubr.f32.gmra.mrb[0].mxu0 %v1122
    %v1415 = vpop.f32.mrb[0].mxu0
    %v1416 = vadd.f32 0.0, %v1415
    %v1417 = vpop.f32.mrb[0].mxu0
    %1418 = vdwg.mxu0
    %v1419 = vadd.f32 %v1346, %v1416
    %v1420 = vxor.u32 %v1419, 2147483648
    %v1421 = vmul.f32 %v1420, 1.442695
    %v1422 = vpow.pop %v1421
    %v1423 = vadd.f32 %v1422, 1.0
    %v1424 = vrcp.pop %v1423
    %v1425 = vmul.f32 1.0, %v1424
    %v1426 = vtanh.pop %v1419
    %1427 = vrot.lane.b32.xlu0 %v1426, 64
    %v1428 = vpop.permute.xlu0 %1427
    %v1429 = vmul.f32 %v1425, %v1428
    %v1430 = vsel %vm182, %v1429, 0.0
    %1431 = vrot.lane.b32.xlu0 %v1430, 32
    %v1432 = vpop.permute.xlu0 %1431
    %1433 = vrot.lane.b32.xlu0 %v1430, 96
    %v1434 = vpop.permute.xlu0 %1433
    %v1435 = vadd.f32 %v1432, %v1434
    %v1436 = vmul.f32 %v1425, %v1118
    %v1437 = vadd.f32 %v1436, %v1435
    %v1438 = vtanh.pop %v1437
    %1439 = vrot.lane.b32.xlu0 %v1438, 64
    %v1440 = vpop.permute.xlu0 %1439
    %v1441 = vmul.f32 %v1425, %v1440
    %1442 = vmatprep.subr.mxu0 0.0
    %1443 = vmatpush1.msra.mxu0 %v131
    %1444 = vmatprep.subr.mxu0 0.0
    %1445 = vmatpush1.msra.mxu0 %v132
    %1446 = vmatprep.subr.mxu0 0.0
    %1447 = vmatpush1.msra.mxu0 %v133
    %1448 = vmatprep.subr.mxu0 0.0
    %1449 = vmatpush1.msra.mxu0 %v134
    %1450 = vmatprep.subr.mxu0 0.0
    %1451 = vmatpush1.msra.mxu0 %v135
    %1452 = vmatprep.subr.mxu0 0.0
    %1453 = vmatpush1.msra.mxu0 %v136
    %1454 = vmatprep.subr.mxu0 0.0
    %1455 = vmatpush1.msra.mxu0 %v137
    %1456 = vmatprep.subr.mxu0 0.0
    %1457 = vmatpush1.msra.mxu0 %v138
    %1458 = vmatprep.subr.mxu0 0.0
    %1459 = vmatpush1.msra.mxu0 %v139
    %1460 = vmatprep.subr.mxu0 0.0
    %1461 = vmatpush1.msra.mxu0 %v140
    %1462 = vmatprep.subr.mxu0 0.0
    %1463 = vmatpush1.msra.mxu0 %v141
    %1464 = vmatprep.subr.mxu0 0.0
    %1465 = vmatpush1.msra.mxu0 %v142
    %1466 = vmatprep.subr.mxu0 0.0
    %1467 = vmatpush1.msra.mxu0 %v143
    %1468 = vmatprep.subr.mxu0 0.0
    %1469 = vmatpush1.msra.mxu0 %v144
    %1470 = vmatprep.subr.mxu0 0.0
    %1471 = vmatpush1.msra.mxu0 %v145
    %1472 = vmatprep.subr.mxu0 0.0
    %1473 = vmatpush1.msra.mxu0 %v146
    %1474 = vmatprep.subr.mxu0 0.0
    %1475 = vmatpush1.msra.mxu0 0.0
    %1476 = vmatprep.subr.mxu0 0.0
    %1477 = vmatpush1.msra.mxu0 0.0
    %1478 = vmatprep.subr.mxu0 0.0
    %1479 = vmatpush1.msra.mxu0 0.0
    %1480 = vmatprep.subr.mxu0 0.0
    %1481 = vmatpush1.msra.mxu0 0.0
    %1482 = vmatprep.subr.mxu0 0.0
    %1483 = vmatpush1.msra.mxu0 0.0
    %1484 = vmatprep.subr.mxu0 0.0
    %1485 = vmatpush1.msra.mxu0 0.0
    %1486 = vmatprep.subr.mxu0 0.0
    %1487 = vmatpush1.msra.mxu0 0.0
    %1488 = vmatprep.subr.mxu0 0.0
    %1489 = vmatpush1.msra.mxu0 0.0
    %1490 = vmatprep.subr.mxu0 0.0
    %1491 = vmatpush1.msra.mxu0 0.0
    %1492 = vmatprep.subr.mxu0 0.0
    %1493 = vmatpush1.msra.mxu0 0.0
    %1494 = vmatprep.subr.mxu0 0.0
    %1495 = vmatpush1.msra.mxu0 0.0
    %1496 = vmatprep.subr.mxu0 0.0
    %1497 = vmatpush1.msra.mxu0 0.0
    %1498 = vmatprep.subr.mxu0 0.0
    %1499 = vmatpush1.msra.mxu0 0.0
    %1500 = vmatprep.subr.mxu0 0.0
    %1501 = vmatpush1.msra.mxu0 0.0
    %1502 = vmatprep.subr.mxu0 0.0
    %1503 = vmatpush1.msra.mxu0 0.0
    %1504 = vmatprep.subr.mxu0 0.0
    %1505 = vmatpush1.msra.mxu0 0.0
    %1506 = vmatprep.mubr.f32.mxu0 0.0
    %1507 = vmatmul.mubr.f32.gmra.mrb[0].mxu0 %v1277
    %v1508 = vpop.f32.mrb[0].mxu0
    %v1509 = vadd.f32 0.0, %v1508
    %v1510 = vpop.f32.mrb[0].mxu0
    %1511 = vdwg.mxu0
    %v1513 = vrot.slane %v1509, 4
    %v1514 = vrot.slane %v1509, 5
    %v1517 = vadd.f32 %v123, %v1513
    %v1518 = vadd.f32 %v128, %v1514
    %v1519 = vxor.u32 %v1517, 2147483648
    %v1520 = vxor.u32 %v1518, 2147483648
    %v1521 = vmul.f32 %v1519, 1.442695
    %v1522 = vpow.pop %v1521
    %v1523 = vmul.f32 %v1520, 1.442695
    %v1524 = vpow.pop %v1523
    %v1525 = vadd.f32 %v1522, 1.0
    %v1526 = vadd.f32 %v1524, 1.0
    %v1527 = vrcp.pop %v1525
    %v1528 = vmul.f32 1.0, %v1527
    %v1529 = vrcp.pop %v1526
    %v1530 = vmul.f32 1.0, %v1529
    %v1531 = vtanh.pop %v1517
    %v1532 = vtanh.pop %v1518
    %v1535 = vrot.slane %v1531, 4
    %v1536 = vrot.slane %v1532, 3
    %v1537 = vsel %vm276, %v1536, %v1535
    %1539 = vrot.lane.b32.xlu0 %v1537, 64
    %v1540 = vpop.permute.xlu0 %1539
    %v1542 = vrot.slane %v1540, 4
    %v1543 = vrot.slane %v1540, 5
    %v1546 = vmul.f32 %v1528, %v1542
    %v1547 = vmul.f32 %v1530, %v1543
    %v1550 = vrot.slane %v1546, 4
    %v1551 = vrot.slane %v1547, 3
    %v1552 = vsel %vm276, %v1551, %v1550
    %v1554 = vsel %vm182, %v1552, 0.0
    %1555 = vrot.lane.b32.xlu0 %v1554, 32
    %v1556 = vpop.permute.xlu0 %1555
    %1557 = vrot.lane.b32.xlu0 %v1554, 96
    %v1558 = vpop.permute.xlu0 %1557
    %v1559 = vadd.f32 %v1556, %v1558
    %v1562 = vrot.slane %v1254, 7
    %v1563 = vrot.slane %v1255, 7
    %v1566 = vmul.f32 %v1528, %v1562
    %v1567 = vmul.f32 %v1530, %v1563
    %v1569 = vrot.slane %v1559, 4
    %v1570 = vrot.slane %v1559, 5
    %v1573 = vadd.f32 %v1566, %v1569
    %v1574 = vadd.f32 %v1567, %v1570
    %v1575 = vtanh.pop %v1573
    %v1576 = vtanh.pop %v1574
    %v1579 = vrot.slane %v1575, 4
    %v1580 = vrot.slane %v1576, 3
    %v1581 = vsel %vm276, %v1580, %v1579
    %1583 = vrot.lane.b32.xlu0 %v1581, 64
    %v1584 = vpop.permute.xlu0 %1583
    %v1586 = vrot.slane %v1584, 4
    %v1587 = vrot.slane %v1584, 5
    %v1590 = vmul.f32 %v1528, %v1586
    %v1591 = vmul.f32 %v1530, %v1587
    %v1594 = vrot.slane %v1590, 4
    %v1595 = vrot.slane %v1591, 3
    %v1596 = vsel %vm276, %v1595, %v1594
    %1598 = vmatprep.subr.mxu0 0.0
    %1599 = vmatpush1.msra.mxu0 %v163
    %1600 = vmatprep.subr.mxu0 0.0
    %1601 = vmatpush1.msra.mxu0 %v164
    %1602 = vmatprep.subr.mxu0 0.0
    %1603 = vmatpush1.msra.mxu0 %v165
    %1604 = vmatprep.subr.mxu0 0.0
    %1605 = vmatpush1.msra.mxu0 %v166
    %1606 = vmatprep.subr.mxu0 0.0
    %1607 = vmatpush1.msra.mxu0 %v167
    %1608 = vmatprep.subr.mxu0 0.0
    %1609 = vmatpush1.msra.mxu0 %v168
    %1610 = vmatprep.subr.mxu0 0.0
    %1611 = vmatpush1.msra.mxu0 %v169
    %1612 = vmatprep.subr.mxu0 0.0
    %1613 = vmatpush1.msra.mxu0 %v170
    %1614 = vmatprep.subr.mxu0 0.0
    %1615 = vmatpush1.msra.mxu0 %v171
    %1616 = vmatprep.subr.mxu0 0.0
    %1617 = vmatpush1.msra.mxu0 %v172
    %1618 = vmatprep.subr.mxu0 0.0
    %1619 = vmatpush1.msra.mxu0 %v173
    %1620 = vmatprep.subr.mxu0 0.0
    %1621 = vmatpush1.msra.mxu0 %v174
    %1622 = vmatprep.subr.mxu0 0.0
    %1623 = vmatpush1.msra.mxu0 %v175
    %1624 = vmatprep.subr.mxu0 0.0
    %1625 = vmatpush1.msra.mxu0 %v176
    %1626 = vmatprep.subr.mxu0 0.0
    %1627 = vmatpush1.msra.mxu0 %v177
    %1628 = vmatprep.subr.mxu0 0.0
    %1629 = vmatpush1.msra.mxu0 %v178
    %1630 = vmatprep.subr.mxu0 0.0
    %1631 = vmatpush1.msra.mxu0 0.0
    %1632 = vmatprep.subr.mxu0 0.0
    %1633 = vmatpush1.msra.mxu0 0.0
    %1634 = vmatprep.subr.mxu0 0.0
    %1635 = vmatpush1.msra.mxu0 0.0
    %1636 = vmatprep.subr.mxu0 0.0
    %1637 = vmatpush1.msra.mxu0 0.0
    %1638 = vmatprep.subr.mxu0 0.0
    %1639 = vmatpush1.msra.mxu0 0.0
    %1640 = vmatprep.subr.mxu0 0.0
    %1641 = vmatpush1.msra.mxu0 0.0
    %1642 = vmatprep.subr.mxu0 0.0
    %1643 = vmatpush1.msra.mxu0 0.0
    %1644 = vmatprep.subr.mxu0 0.0
    %1645 = vmatpush1.msra.mxu0 0.0
    %1646 = vmatprep.subr.mxu0 0.0
    %1647 = vmatpush1.msra.mxu0 0.0
    %1648 = vmatprep.subr.mxu0 0.0
    %1649 = vmatpush1.msra.mxu0 0.0
    %1650 = vmatprep.subr.mxu0 0.0
    %1651 = vmatpush1.msra.mxu0 0.0
    %1652 = vmatprep.subr.mxu0 0.0
    %1653 = vmatpush1.msra.mxu0 0.0
    %1654 = vmatprep.subr.mxu0 0.0
    %1655 = vmatpush1.msra.mxu0 0.0
    %1656 = vmatprep.subr.mxu0 0.0
    %1657 = vmatpush1.msra.mxu0 0.0
    %1658 = vmatprep.subr.mxu0 0.0
    %1659 = vmatpush1.msra.mxu0 0.0
    %1660 = vmatprep.subr.mxu0 0.0
    %1661 = vmatpush1.msra.mxu0 0.0
    %1662 = vmatprep.mubr.f32.mxu0 0.0
    %1663 = vmatmul.mubr.f32.gmra.mrb[0].mxu0 %v1596
    %v1664 = vpop.f32.mrb[0].mxu0
    %v1665 = vadd.f32 %v324, %v1664
    %v1666 = vpop.f32.mrb[0].mxu0
    %1667 = vdwg.mxu0
    %1668 = vmatprep.subr.mxu0 0.0
    %1669 = vmatpush1.msra.mxu0 %v147
    %1670 = vmatprep.subr.mxu0 0.0
    %1671 = vmatpush1.msra.mxu0 %v148
    %1672 = vmatprep.subr.mxu0 0.0
    %1673 = vmatpush1.msra.mxu0 %v149
    %1674 = vmatprep.subr.mxu0 0.0
    %1675 = vmatpush1.msra.mxu0 %v150
    %1676 = vmatprep.subr.mxu0 0.0
    %1677 = vmatpush1.msra.mxu0 %v151
    %1678 = vmatprep.subr.mxu0 0.0
    %1679 = vmatpush1.msra.mxu0 %v152
    %1680 = vmatprep.subr.mxu0 0.0
    %1681 = vmatpush1.msra.mxu0 %v153
    %1682 = vmatprep.subr.mxu0 0.0
    %1683 = vmatpush1.msra.mxu0 %v154
    %1684 = vmatprep.subr.mxu0 0.0
    %1685 = vmatpush1.msra.mxu0 %v155
    %1686 = vmatprep.subr.mxu0 0.0
    %1687 = vmatpush1.msra.mxu0 %v156
    %1688 = vmatprep.subr.mxu0 0.0
    %1689 = vmatpush1.msra.mxu0 %v157
    %1690 = vmatprep.subr.mxu0 0.0
    %1691 = vmatpush1.msra.mxu0 %v158
    %1692 = vmatprep.subr.mxu0 0.0
    %1693 = vmatpush1.msra.mxu0 %v159
    %1694 = vmatprep.subr.mxu0 0.0
    %1695 = vmatpush1.msra.mxu0 %v160
    %1696 = vmatprep.subr.mxu0 0.0
    %1697 = vmatpush1.msra.mxu0 %v161
    %1698 = vmatprep.subr.mxu0 0.0
    %1699 = vmatpush1.msra.mxu0 %v162
    %1700 = vmatprep.subr.mxu0 0.0
    %1701 = vmatpush1.msra.mxu0 0.0
    %1702 = vmatprep.subr.mxu0 0.0
    %1703 = vmatpush1.msra.mxu0 0.0
    %1704 = vmatprep.subr.mxu0 0.0
    %1705 = vmatpush1.msra.mxu0 0.0
    %1706 = vmatprep.subr.mxu0 0.0
    %1707 = vmatpush1.msra.mxu0 0.0
    %1708 = vmatprep.subr.mxu0 0.0
    %1709 = vmatpush1.msra.mxu0 0.0
    %1710 = vmatprep.subr.mxu0 0.0
    %1711 = vmatpush1.msra.mxu0 0.0
    %1712 = vmatprep.subr.mxu0 0.0
    %1713 = vmatpush1.msra.mxu0 0.0
    %1714 = vmatprep.subr.mxu0 0.0
    %1715 = vmatpush1.msra.mxu0 0.0
    %1716 = vmatprep.subr.mxu0 0.0
    %1717 = vmatpush1.msra.mxu0 0.0
    %1718 = vmatprep.subr.mxu0 0.0
    %1719 = vmatpush1.msra.mxu0 0.0
    %1720 = vmatprep.subr.mxu0 0.0
    %1721 = vmatpush1.msra.mxu0 0.0
    %1722 = vmatprep.subr.mxu0 0.0
    %1723 = vmatpush1.msra.mxu0 0.0
    %1724 = vmatprep.subr.mxu0 0.0
    %1725 = vmatpush1.msra.mxu0 0.0
    %1726 = vmatprep.subr.mxu0 0.0
    %1727 = vmatpush1.msra.mxu0 0.0
    %1728 = vmatprep.subr.mxu0 0.0
    %1729 = vmatpush1.msra.mxu0 0.0
    %1730 = vmatprep.subr.mxu0 0.0
    %1731 = vmatpush1.msra.mxu0 0.0
    %1732 = vmatprep.mubr.f32.mxu0 0.0
    %1733 = vmatmul.mubr.f32.gmra.mrb[0].mxu0 %v1441
    %v1734 = vpop.f32.mrb[0].mxu0
    %v1735 = vadd.f32 0.0, %v1734
    %v1736 = vpop.f32.mrb[0].mxu0
    %1737 = vdwg.mxu0
    %v1738 = vadd.f32 %v1665, %v1735
    %v1739 = vxor.u32 %v1738, 2147483648
    %v1740 = vmul.f32 %v1739, 1.442695
    %v1741 = vpow.pop %v1740
    %v1742 = vadd.f32 %v1741, 1.0
    %v1743 = vrcp.pop %v1742
    %v1744 = vmul.f32 1.0, %v1743
    %v1745 = vtanh.pop %v1738
    %1746 = vrot.lane.b32.xlu0 %v1745, 64
    %v1747 = vpop.permute.xlu0 %1746
    %v1748 = vmul.f32 %v1744, %v1747
    %v1749 = vsel %vm182, %v1748, 0.0
    %1750 = vrot.lane.b32.xlu0 %v1749, 32
    %v1751 = vpop.permute.xlu0 %1750
    %1752 = vrot.lane.b32.xlu0 %v1749, 96
    %v1753 = vpop.permute.xlu0 %1752
    %v1754 = vadd.f32 %v1751, %v1753
    %v1755 = vmul.f32 %v1744, %v1437
    %v1756 = vadd.f32 %v1755, %v1754
    %v1757 = vtanh.pop %v1756
    %1758 = vrot.lane.b32.xlu0 %v1757, 64
    %v1759 = vpop.permute.xlu0 %1758
    %v1760 = vmul.f32 %v1744, %v1759
    %1761 = vmatprep.subr.mxu0 0.0
    %1762 = vmatpush1.msra.mxu0 %v131
    %1763 = vmatprep.subr.mxu0 0.0
    %1764 = vmatpush1.msra.mxu0 %v132
    %1765 = vmatprep.subr.mxu0 0.0
    %1766 = vmatpush1.msra.mxu0 %v133
    %1767 = vmatprep.subr.mxu0 0.0
    %1768 = vmatpush1.msra.mxu0 %v134
    %1769 = vmatprep.subr.mxu0 0.0
    %1770 = vmatpush1.msra.mxu0 %v135
    %1771 = vmatprep.subr.mxu0 0.0
    %1772 = vmatpush1.msra.mxu0 %v136
    %1773 = vmatprep.subr.mxu0 0.0
    %1774 = vmatpush1.msra.mxu0 %v137
    %1775 = vmatprep.subr.mxu0 0.0
    %1776 = vmatpush1.msra.mxu0 %v138
    %1777 = vmatprep.subr.mxu0 0.0
    %1778 = vmatpush1.msra.mxu0 %v139
    %1779 = vmatprep.subr.mxu0 0.0
    %1780 = vmatpush1.msra.mxu0 %v140
    %1781 = vmatprep.subr.mxu0 0.0
    %1782 = vmatpush1.msra.mxu0 %v141
    %1783 = vmatprep.subr.mxu0 0.0
    %1784 = vmatpush1.msra.mxu0 %v142
    %1785 = vmatprep.subr.mxu0 0.0
    %1786 = vmatpush1.msra.mxu0 %v143
    %1787 = vmatprep.subr.mxu0 0.0
    %1788 = vmatpush1.msra.mxu0 %v144
    %1789 = vmatprep.subr.mxu0 0.0
    %1790 = vmatpush1.msra.mxu0 %v145
    %1791 = vmatprep.subr.mxu0 0.0
    %1792 = vmatpush1.msra.mxu0 %v146
    %1793 = vmatprep.subr.mxu0 0.0
    %1794 = vmatpush1.msra.mxu0 0.0
    %1795 = vmatprep.subr.mxu0 0.0
    %1796 = vmatpush1.msra.mxu0 0.0
    %1797 = vmatprep.subr.mxu0 0.0
    %1798 = vmatpush1.msra.mxu0 0.0
    %1799 = vmatprep.subr.mxu0 0.0
    %1800 = vmatpush1.msra.mxu0 0.0
    %1801 = vmatprep.subr.mxu0 0.0
    %1802 = vmatpush1.msra.mxu0 0.0
    %1803 = vmatprep.subr.mxu0 0.0
    %1804 = vmatpush1.msra.mxu0 0.0
    %1805 = vmatprep.subr.mxu0 0.0
    %1806 = vmatpush1.msra.mxu0 0.0
    %1807 = vmatprep.subr.mxu0 0.0
    %1808 = vmatpush1.msra.mxu0 0.0
    %1809 = vmatprep.subr.mxu0 0.0
    %1810 = vmatpush1.msra.mxu0 0.0
    %1811 = vmatprep.subr.mxu0 0.0
    %1812 = vmatpush1.msra.mxu0 0.0
    %1813 = vmatprep.subr.mxu0 0.0
    %1814 = vmatpush1.msra.mxu0 0.0
    %1815 = vmatprep.subr.mxu0 0.0
    %1816 = vmatpush1.msra.mxu0 0.0
    %1817 = vmatprep.subr.mxu0 0.0
    %1818 = vmatpush1.msra.mxu0 0.0
    %1819 = vmatprep.subr.mxu0 0.0
    %1820 = vmatpush1.msra.mxu0 0.0
    %1821 = vmatprep.subr.mxu0 0.0
    %1822 = vmatpush1.msra.mxu0 0.0
    %1823 = vmatprep.subr.mxu0 0.0
    %1824 = vmatpush1.msra.mxu0 0.0
    %1825 = vmatprep.mubr.f32.mxu0 0.0
    %1826 = vmatmul.mubr.f32.gmra.mrb[0].mxu0 %v1596
    %v1827 = vpop.f32.mrb[0].mxu0
    %v1828 = vadd.f32 0.0, %v1827
    %v1829 = vpop.f32.mrb[0].mxu0
    %1830 = vdwg.mxu0
    %v1832 = vrot.slane %v1828, 3
    %v1833 = vrot.slane %v1828, 4
    %v1836 = vadd.f32 %v123, %v1832
    %v1837 = vadd.f32 %v128, %v1833
    %v1838 = vxor.u32 %v1836, 2147483648
    %v1839 = vxor.u32 %v1837, 2147483648
    %v1840 = vmul.f32 %v1838, 1.442695
    %v1841 = vpow.pop %v1840
    %v1842 = vmul.f32 %v1839, 1.442695
    %v1843 = vpow.pop %v1842
    %v1844 = vadd.f32 %v1841, 1.0
    %v1845 = vadd.f32 %v1843, 1.0
    %v1846 = vrcp.pop %v1844
    %v1847 = vmul.f32 1.0, %v1846
    %v1848 = vrcp.pop %v1845
    %v1849 = vmul.f32 1.0, %v1848
    %v1850 = vtanh.pop %v1836
    %v1851 = vtanh.pop %v1837
    %v1854 = vrot.slane %v1850, 5
    %v1855 = vrot.slane %v1851, 4
    %v1856 = vsel %vm276, %v1855, %v1854
    %1858 = vrot.lane.b32.xlu0 %v1856, 64
    %v1859 = vpop.permute.xlu0 %1858
    %v1861 = vrot.slane %v1859, 3
    %v1862 = vrot.slane %v1859, 4
    %v1865 = vmul.f32 %v1847, %v1861
    %v1866 = vmul.f32 %v1849, %v1862
    %v1869 = vrot.slane %v1865, 5
    %v1870 = vrot.slane %v1866, 4
    %v1871 = vsel %vm276, %v1870, %v1869
    %v1873 = vsel %vm182, %v1871, 0.0
    %1874 = vrot.lane.b32.xlu0 %v1873, 32
    %v1875 = vpop.permute.xlu0 %1874
    %1876 = vrot.lane.b32.xlu0 %v1873, 96
    %v1877 = vpop.permute.xlu0 %1876
    %v1878 = vadd.f32 %v1875, %v1877
    %v1881 = vrot.slane %v1573, 7
    %v1882 = vrot.slane %v1574, 7
    %v1885 = vmul.f32 %v1847, %v1881
    %v1886 = vmul.f32 %v1849, %v1882
    %v1888 = vrot.slane %v1878, 3
    %v1889 = vrot.slane %v1878, 4
    %v1892 = vadd.f32 %v1885, %v1888
    %v1893 = vadd.f32 %v1886, %v1889
    %v1894 = vtanh.pop %v1892
    %v1895 = vtanh.pop %v1893
    %v1898 = vrot.slane %v1894, 5
    %v1899 = vrot.slane %v1895, 4
    %v1900 = vsel %vm276, %v1899, %v1898
    %1902 = vrot.lane.b32.xlu0 %v1900, 64
    %v1903 = vpop.permute.xlu0 %1902
    %v1905 = vrot.slane %v1903, 3
    %v1906 = vrot.slane %v1903, 4
    %v1909 = vmul.f32 %v1847, %v1905
    %v1910 = vmul.f32 %v1849, %v1906
    %v1913 = vrot.slane %v1909, 5
    %v1914 = vrot.slane %v1910, 4
    %v1915 = vsel %vm276, %v1914, %v1913
    %1917 = vmatprep.subr.mxu0 0.0
    %1918 = vmatpush1.msra.mxu0 %v163
    %1919 = vmatprep.subr.mxu0 0.0
    %1920 = vmatpush1.msra.mxu0 %v164
    %1921 = vmatprep.subr.mxu0 0.0
    %1922 = vmatpush1.msra.mxu0 %v165
    %1923 = vmatprep.subr.mxu0 0.0
    %1924 = vmatpush1.msra.mxu0 %v166
    %1925 = vmatprep.subr.mxu0 0.0
    %1926 = vmatpush1.msra.mxu0 %v167
    %1927 = vmatprep.subr.mxu0 0.0
    %1928 = vmatpush1.msra.mxu0 %v168
    %1929 = vmatprep.subr.mxu0 0.0
    %1930 = vmatpush1.msra.mxu0 %v169
    %1931 = vmatprep.subr.mxu0 0.0
    %1932 = vmatpush1.msra.mxu0 %v170
    %1933 = vmatprep.subr.mxu0 0.0
    %1934 = vmatpush1.msra.mxu0 %v171
    %1935 = vmatprep.subr.mxu0 0.0
    %1936 = vmatpush1.msra.mxu0 %v172
    %1937 = vmatprep.subr.mxu0 0.0
    %1938 = vmatpush1.msra.mxu0 %v173
    %1939 = vmatprep.subr.mxu0 0.0
    %1940 = vmatpush1.msra.mxu0 %v174
    %1941 = vmatprep.subr.mxu0 0.0
    %1942 = vmatpush1.msra.mxu0 %v175
    %1943 = vmatprep.subr.mxu0 0.0
    %1944 = vmatpush1.msra.mxu0 %v176
    %1945 = vmatprep.subr.mxu0 0.0
    %1946 = vmatpush1.msra.mxu0 %v177
    %1947 = vmatprep.subr.mxu0 0.0
    %1948 = vmatpush1.msra.mxu0 %v178
    %1949 = vmatprep.subr.mxu0 0.0
    %1950 = vmatpush1.msra.mxu0 0.0
    %1951 = vmatprep.subr.mxu0 0.0
    %1952 = vmatpush1.msra.mxu0 0.0
    %1953 = vmatprep.subr.mxu0 0.0
    %1954 = vmatpush1.msra.mxu0 0.0
    %1955 = vmatprep.subr.mxu0 0.0
    %1956 = vmatpush1.msra.mxu0 0.0
    %1957 = vmatprep.subr.mxu0 0.0
    %1958 = vmatpush1.msra.mxu0 0.0
    %1959 = vmatprep.subr.mxu0 0.0
    %1960 = vmatpush1.msra.mxu0 0.0
    %1961 = vmatprep.subr.mxu0 0.0
    %1962 = vmatpush1.msra.mxu0 0.0
    %1963 = vmatprep.subr.mxu0 0.0
    %1964 = vmatpush1.msra.mxu0 0.0
    %1965 = vmatprep.subr.mxu0 0.0
    %1966 = vmatpush1.msra.mxu0 0.0
    %1967 = vmatprep.subr.mxu0 0.0
    %1968 = vmatpush1.msra.mxu0 0.0
    %1969 = vmatprep.subr.mxu0 0.0
    %1970 = vmatpush1.msra.mxu0 0.0
    %1971 = vmatprep.subr.mxu0 0.0
    %1972 = vmatpush1.msra.mxu0 0.0
    %1973 = vmatprep.subr.mxu0 0.0
    %1974 = vmatpush1.msra.mxu0 0.0
    %1975 = vmatprep.subr.mxu0 0.0
    %1976 = vmatpush1.msra.mxu0 0.0
    %1977 = vmatprep.subr.mxu0 0.0
    %1978 = vmatpush1.msra.mxu0 0.0
    %1979 = vmatprep.subr.mxu0 0.0
    %1980 = vmatpush1.msra.mxu0 0.0
    %1981 = vmatprep.mubr.f32.mxu0 0.0
    %1982 = vmatmul.mubr.f32.gmra.mrb[0].mxu0 %v1915
    %v1983 = vpop.f32.mrb[0].mxu0
    %v1984 = vadd.f32 %v324, %v1983
    %v1985 = vpop.f32.mrb[0].mxu0
    %1986 = vdwg.mxu0
    %1987 = vmatprep.subr.mxu0 0.0
    %1988 = vmatpush1.msra.mxu0 %v147
    %1989 = vmatprep.subr.mxu0 0.0
    %1990 = vmatpush1.msra.mxu0 %v148
    %1991 = vmatprep.subr.mxu0 0.0
    %1992 = vmatpush1.msra.mxu0 %v149
    %1993 = vmatprep.subr.mxu0 0.0
    %1994 = vmatpush1.msra.mxu0 %v150
    %1995 = vmatprep.subr.mxu0 0.0
    %1996 = vmatpush1.msra.mxu0 %v151
    %1997 = vmatprep.subr.mxu0 0.0
    %1998 = vmatpush1.msra.mxu0 %v152
    %1999 = vmatprep.subr.mxu0 0.0
    %2000 = vmatpush1.msra.mxu0 %v153
    %2001 = vmatprep.subr.mxu0 0.0
    %2002 = vmatpush1.msra.mxu0 %v154
    %2003 = vmatprep.subr.mxu0 0.0
    %2004 = vmatpush1.msra.mxu0 %v155
    %2005 = vmatprep.subr.mxu0 0.0
    %2006 = vmatpush1.msra.mxu0 %v156
    %2007 = vmatprep.subr.mxu0 0.0
    %2008 = vmatpush1.msra.mxu0 %v157
    %2009 = vmatprep.subr.mxu0 0.0
    %2010 = vmatpush1.msra.mxu0 %v158
    %2011 = vmatprep.subr.mxu0 0.0
    %2012 = vmatpush1.msra.mxu0 %v159
    %2013 = vmatprep.subr.mxu0 0.0
    %2014 = vmatpush1.msra.mxu0 %v160
    %2015 = vmatprep.subr.mxu0 0.0
    %2016 = vmatpush1.msra.mxu0 %v161
    %2017 = vmatprep.subr.mxu0 0.0
    %2018 = vmatpush1.msra.mxu0 %v162
    %2019 = vmatprep.subr.mxu0 0.0
    %2020 = vmatpush1.msra.mxu0 0.0
    %2021 = vmatprep.subr.mxu0 0.0
    %2022 = vmatpush1.msra.mxu0 0.0
    %2023 = vmatprep.subr.mxu0 0.0
    %2024 = vmatpush1.msra.mxu0 0.0
    %2025 = vmatprep.subr.mxu0 0.0
    %2026 = vmatpush1.msra.mxu0 0.0
    %2027 = vmatprep.subr.mxu0 0.0
    %2028 = vmatpush1.msra.mxu0 0.0
    %2029 = vmatprep.subr.mxu0 0.0
    %2030 = vmatpush1.msra.mxu0 0.0
    %2031 = vmatprep.subr.mxu0 0.0
    %2032 = vmatpush1.msra.mxu0 0.0
    %2033 = vmatprep.subr.mxu0 0.0
    %2034 = vmatpush1.msra.mxu0 0.0
    %2035 = vmatprep.subr.mxu0 0.0
    %2036 = vmatpush1.msra.mxu0 0.0
    %2037 = vmatprep.subr.mxu0 0.0
    %2038 = vmatpush1.msra.mxu0 0.0
    %2039 = vmatprep.subr.mxu0 0.0
    %2040 = vmatpush1.msra.mxu0 0.0
    %2041 = vmatprep.subr.mxu0 0.0
    %2042 = vmatpush1.msra.mxu0 0.0
    %2043 = vmatprep.subr.mxu0 0.0
    %2044 = vmatpush1.msra.mxu0 0.0
    %2045 = vmatprep.subr.mxu0 0.0
    %2046 = vmatpush1.msra.mxu0 0.0
    %2047 = vmatprep.subr.mxu0 0.0
    %2048 = vmatpush1.msra.mxu0 0.0
    %2049 = vmatprep.subr.mxu0 0.0
    %2050 = vmatpush1.msra.mxu0 0.0
    %2051 = vmatprep.mubr.f32.mxu0 0.0
    %2052 = vmatmul.mubr.f32.gmra.mrb[0].mxu0 %v1760
    %v2053 = vpop.f32.mrb[0].mxu0
    %v2054 = vadd.f32 0.0, %v2053
    %v2055 = vpop.f32.mrb[0].mxu0
    %2056 = vdwg.mxu0
    %v2057 = vadd.f32 %v1984, %v2054
    %v2058 = vxor.u32 %v2057, 2147483648
    %v2059 = vmul.f32 %v2058, 1.442695
    %v2060 = vpow.pop %v2059
    %v2061 = vadd.f32 %v2060, 1.0
    %v2062 = vrcp.pop %v2061
    %v2063 = vmul.f32 1.0, %v2062
    %v2064 = vtanh.pop %v2057
    %2065 = vrot.lane.b32.xlu0 %v2064, 64
    %v2066 = vpop.permute.xlu0 %2065
    %v2067 = vmul.f32 %v2063, %v2066
    %v2068 = vsel %vm182, %v2067, 0.0
    %2069 = vrot.lane.b32.xlu0 %v2068, 32
    %v2070 = vpop.permute.xlu0 %2069
    %2071 = vrot.lane.b32.xlu0 %v2068, 96
    %v2072 = vpop.permute.xlu0 %2071
    %v2073 = vadd.f32 %v2070, %v2072
    %v2074 = vmul.f32 %v2063, %v1756
    %v2075 = vadd.f32 %v2074, %v2073
    %v2076 = vtanh.pop %v2075
    %2077 = vrot.lane.b32.xlu0 %v2076, 64
    %v2078 = vpop.permute.xlu0 %2077
    %v2079 = vmul.f32 %v2063, %v2078
    %2080 = vmatprep.subr.mxu0 0.0
    %2081 = vmatpush1.msra.mxu0 %v131
    %2082 = vmatprep.subr.mxu0 0.0
    %2083 = vmatpush1.msra.mxu0 %v132
    %2084 = vmatprep.subr.mxu0 0.0
    %2085 = vmatpush1.msra.mxu0 %v133
    %2086 = vmatprep.subr.mxu0 0.0
    %2087 = vmatpush1.msra.mxu0 %v134
    %2088 = vmatprep.subr.mxu0 0.0
    %2089 = vmatpush1.msra.mxu0 %v135
    %2090 = vmatprep.subr.mxu0 0.0
    %2091 = vmatpush1.msra.mxu0 %v136
    %2092 = vmatprep.subr.mxu0 0.0
    %2093 = vmatpush1.msra.mxu0 %v137
    %2094 = vmatprep.subr.mxu0 0.0
    %2095 = vmatpush1.msra.mxu0 %v138
    %2096 = vmatprep.subr.mxu0 0.0
    %2097 = vmatpush1.msra.mxu0 %v139
    %2098 = vmatprep.subr.mxu0 0.0
    %2099 = vmatpush1.msra.mxu0 %v140
    %2100 = vmatprep.subr.mxu0 0.0
    %2101 = vmatpush1.msra.mxu0 %v141
    %2102 = vmatprep.subr.mxu0 0.0
    %2103 = vmatpush1.msra.mxu0 %v142
    %2104 = vmatprep.subr.mxu0 0.0
    %2105 = vmatpush1.msra.mxu0 %v143
    %2106 = vmatprep.subr.mxu0 0.0
    %2107 = vmatpush1.msra.mxu0 %v144
    %2108 = vmatprep.subr.mxu0 0.0
    %2109 = vmatpush1.msra.mxu0 %v145
    %2110 = vmatprep.subr.mxu0 0.0
    %2111 = vmatpush1.msra.mxu0 %v146
    %2112 = vmatprep.subr.mxu0 0.0
    %2113 = vmatpush1.msra.mxu0 0.0
    %2114 = vmatprep.subr.mxu0 0.0
    %2115 = vmatpush1.msra.mxu0 0.0
    %2116 = vmatprep.subr.mxu0 0.0
    %2117 = vmatpush1.msra.mxu0 0.0
    %2118 = vmatprep.subr.mxu0 0.0
    %2119 = vmatpush1.msra.mxu0 0.0
    %2120 = vmatprep.subr.mxu0 0.0
    %2121 = vmatpush1.msra.mxu0 0.0
    %2122 = vmatprep.subr.mxu0 0.0
    %2123 = vmatpush1.msra.mxu0 0.0
    %2124 = vmatprep.subr.mxu0 0.0
    %2125 = vmatpush1.msra.mxu0 0.0
    %2126 = vmatprep.subr.mxu0 0.0
    %2127 = vmatpush1.msra.mxu0 0.0
    %2128 = vmatprep.subr.mxu0 0.0
    %2129 = vmatpush1.msra.mxu0 0.0
    %2130 = vmatprep.subr.mxu0 0.0
    %2131 = vmatpush1.msra.mxu0 0.0
    %2132 = vmatprep.subr.mxu0 0.0
    %2133 = vmatpush1.msra.mxu0 0.0
    %2134 = vmatprep.subr.mxu0 0.0
    %2135 = vmatpush1.msra.mxu0 0.0
    %2136 = vmatprep.subr.mxu0 0.0
    %2137 = vmatpush1.msra.mxu0 0.0
    %2138 = vmatprep.subr.mxu0 0.0
    %2139 = vmatpush1.msra.mxu0 0.0
    %2140 = vmatprep.subr.mxu0 0.0
    %2141 = vmatpush1.msra.mxu0 0.0
    %2142 = vmatprep.subr.mxu0 0.0
    %2143 = vmatpush1.msra.mxu0 0.0
    %2144 = vmatprep.mubr.f32.mxu0 0.0
    %2145 = vmatmul.mubr.f32.gmra.mrb[0].mxu0 %v1915
    %v2146 = vpop.f32.mrb[0].mxu0
    %v2147 = vadd.f32 0.0, %v2146
    %v2148 = vpop.f32.mrb[0].mxu0
    %2149 = vdwg.mxu0
    %v2151 = vrot.slane %v2147, 2
    %v2152 = vrot.slane %v2147, 3
    %v2155 = vadd.f32 %v123, %v2151
    %v2156 = vadd.f32 %v128, %v2152
    %v2157 = vxor.u32 %v2155, 2147483648
    %v2158 = vxor.u32 %v2156, 2147483648
    %v2159 = vmul.f32 %v2157, 1.442695
    %v2160 = vpow.pop %v2159
    %v2161 = vmul.f32 %v2158, 1.442695
    %v2162 = vpow.pop %v2161
    %v2163 = vadd.f32 %v2160, 1.0
    %v2164 = vadd.f32 %v2162, 1.0
    %v2165 = vrcp.pop %v2163
    %v2166 = vmul.f32 1.0, %v2165
    %v2167 = vrcp.pop %v2164
    %v2168 = vmul.f32 1.0, %v2167
    %v2169 = vtanh.pop %v2155
    %v2170 = vtanh.pop %v2156
    %v2173 = vrot.slane %v2169, 6
    %v2174 = vrot.slane %v2170, 5
    %v2175 = vsel %vm276, %v2174, %v2173
    %2177 = vrot.lane.b32.xlu0 %v2175, 64
    %v2178 = vpop.permute.xlu0 %2177
    %v2180 = vrot.slane %v2178, 2
    %v2181 = vrot.slane %v2178, 3
    %v2184 = vmul.f32 %v2166, %v2180
    %v2185 = vmul.f32 %v2168, %v2181
    %v2188 = vrot.slane %v2184, 6
    %v2189 = vrot.slane %v2185, 5
    %v2190 = vsel %vm276, %v2189, %v2188
    %v2192 = vsel %vm182, %v2190, 0.0
    %2193 = vrot.lane.b32.xlu0 %v2192, 32
    %v2194 = vpop.permute.xlu0 %2193
    %2195 = vrot.lane.b32.xlu0 %v2192, 96
    %v2196 = vpop.permute.xlu0 %2195
    %v2197 = vadd.f32 %v2194, %v2196
    %v2200 = vrot.slane %v1892, 7
    %v2201 = vrot.slane %v1893, 7
    %v2204 = vmul.f32 %v2166, %v2200
    %v2205 = vmul.f32 %v2168, %v2201
    %v2207 = vrot.slane %v2197, 2
    %v2208 = vrot.slane %v2197, 3
    %v2211 = vadd.f32 %v2204, %v2207
    %v2212 = vadd.f32 %v2205, %v2208
    %v2213 = vtanh.pop %v2211
    %v2214 = vtanh.pop %v2212
    %v2217 = vrot.slane %v2213, 6
    %v2218 = vrot.slane %v2214, 5
    %v2219 = vsel %vm276, %v2218, %v2217
    %2221 = vrot.lane.b32.xlu0 %v2219, 64
    %v2222 = vpop.permute.xlu0 %2221
    %v2224 = vrot.slane %v2222, 2
    %v2225 = vrot.slane %v2222, 3
    %v2228 = vmul.f32 %v2166, %v2224
    %v2229 = vmul.f32 %v2168, %v2225
    %v2232 = vrot.slane %v2228, 6
    %v2233 = vrot.slane %v2229, 5
    %v2234 = vsel %vm276, %v2233, %v2232
    %2236 = vmatprep.subr.mxu0 0.0
    %2237 = vmatpush1.msra.mxu0 %v163
    %2238 = vmatprep.subr.mxu0 0.0
    %2239 = vmatpush1.msra.mxu0 %v164
    %2240 = vmatprep.subr.mxu0 0.0
    %2241 = vmatpush1.msra.mxu0 %v165
    %2242 = vmatprep.subr.mxu0 0.0
    %2243 = vmatpush1.msra.mxu0 %v166
    %2244 = vmatprep.subr.mxu0 0.0
    %2245 = vmatpush1.msra.mxu0 %v167
    %2246 = vmatprep.subr.mxu0 0.0
    %2247 = vmatpush1.msra.mxu0 %v168
    %2248 = vmatprep.subr.mxu0 0.0
    %2249 = vmatpush1.msra.mxu0 %v169
    %2250 = vmatprep.subr.mxu0 0.0
    %2251 = vmatpush1.msra.mxu0 %v170
    %2252 = vmatprep.subr.mxu0 0.0
    %2253 = vmatpush1.msra.mxu0 %v171
    %2254 = vmatprep.subr.mxu0 0.0
    %2255 = vmatpush1.msra.mxu0 %v172
    %2256 = vmatprep.subr.mxu0 0.0
    %2257 = vmatpush1.msra.mxu0 %v173
    %2258 = vmatprep.subr.mxu0 0.0
    %2259 = vmatpush1.msra.mxu0 %v174
    %2260 = vmatprep.subr.mxu0 0.0
    %2261 = vmatpush1.msra.mxu0 %v175
    %2262 = vmatprep.subr.mxu0 0.0
    %2263 = vmatpush1.msra.mxu0 %v176
    %2264 = vmatprep.subr.mxu0 0.0
    %2265 = vmatpush1.msra.mxu0 %v177
    %2266 = vmatprep.subr.mxu0 0.0
    %2267 = vmatpush1.msra.mxu0 %v178
    %2268 = vmatprep.subr.mxu0 0.0
    %2269 = vmatpush1.msra.mxu0 0.0
    %2270 = vmatprep.subr.mxu0 0.0
    %2271 = vmatpush1.msra.mxu0 0.0
    %2272 = vmatprep.subr.mxu0 0.0
    %2273 = vmatpush1.msra.mxu0 0.0
    %2274 = vmatprep.subr.mxu0 0.0
    %2275 = vmatpush1.msra.mxu0 0.0
    %2276 = vmatprep.subr.mxu0 0.0
    %2277 = vmatpush1.msra.mxu0 0.0
    %2278 = vmatprep.subr.mxu0 0.0
    %2279 = vmatpush1.msra.mxu0 0.0
    %2280 = vmatprep.subr.mxu0 0.0
    %2281 = vmatpush1.msra.mxu0 0.0
    %2282 = vmatprep.subr.mxu0 0.0
    %2283 = vmatpush1.msra.mxu0 0.0
    %2284 = vmatprep.subr.mxu0 0.0
    %2285 = vmatpush1.msra.mxu0 0.0
    %2286 = vmatprep.subr.mxu0 0.0
    %2287 = vmatpush1.msra.mxu0 0.0
    %2288 = vmatprep.subr.mxu0 0.0
    %2289 = vmatpush1.msra.mxu0 0.0
    %2290 = vmatprep.subr.mxu0 0.0
    %2291 = vmatpush1.msra.mxu0 0.0
    %2292 = vmatprep.subr.mxu0 0.0
    %2293 = vmatpush1.msra.mxu0 0.0
    %2294 = vmatprep.subr.mxu0 0.0
    %2295 = vmatpush1.msra.mxu0 0.0
    %2296 = vmatprep.subr.mxu0 0.0
    %2297 = vmatpush1.msra.mxu0 0.0
    %2298 = vmatprep.subr.mxu0 0.0
    %2299 = vmatpush1.msra.mxu0 0.0
    %2300 = vmatprep.mubr.f32.mxu0 0.0
    %2301 = vmatmul.mubr.f32.gmra.mrb[0].mxu0 %v2234
    %v2302 = vpop.f32.mrb[0].mxu0
    %v2303 = vadd.f32 %v324, %v2302
    %v2304 = vpop.f32.mrb[0].mxu0
    %2305 = vdwg.mxu0
    %2306 = vmatprep.subr.mxu0 0.0
    %2307 = vmatpush1.msra.mxu0 %v147
    %2308 = vmatprep.subr.mxu0 0.0
    %2309 = vmatpush1.msra.mxu0 %v148
    %2310 = vmatprep.subr.mxu0 0.0
    %2311 = vmatpush1.msra.mxu0 %v149
    %2312 = vmatprep.subr.mxu0 0.0
    %2313 = vmatpush1.msra.mxu0 %v150
    %2314 = vmatprep.subr.mxu0 0.0
    %2315 = vmatpush1.msra.mxu0 %v151
    %2316 = vmatprep.subr.mxu0 0.0
    %2317 = vmatpush1.msra.mxu0 %v152
    %2318 = vmatprep.subr.mxu0 0.0
    %2319 = vmatpush1.msra.mxu0 %v153
    %2320 = vmatprep.subr.mxu0 0.0
    %2321 = vmatpush1.msra.mxu0 %v154
    %2322 = vmatprep.subr.mxu0 0.0
    %2323 = vmatpush1.msra.mxu0 %v155
    %2324 = vmatprep.subr.mxu0 0.0
    %2325 = vmatpush1.msra.mxu0 %v156
    %2326 = vmatprep.subr.mxu0 0.0
    %2327 = vmatpush1.msra.mxu0 %v157
    %2328 = vmatprep.subr.mxu0 0.0
    %2329 = vmatpush1.msra.mxu0 %v158
    %2330 = vmatprep.subr.mxu0 0.0
    %2331 = vmatpush1.msra.mxu0 %v159
    %2332 = vmatprep.subr.mxu0 0.0
    %2333 = vmatpush1.msra.mxu0 %v160
    %2334 = vmatprep.subr.mxu0 0.0
    %2335 = vmatpush1.msra.mxu0 %v161
    %2336 = vmatprep.subr.mxu0 0.0
    %2337 = vmatpush1.msra.mxu0 %v162
    %2338 = vmatprep.subr.mxu0 0.0
    %2339 = vmatpush1.msra.mxu0 0.0
    %2340 = vmatprep.subr.mxu0 0.0
    %2341 = vmatpush1.msra.mxu0 0.0
    %2342 = vmatprep.subr.mxu0 0.0
    %2343 = vmatpush1.msra.mxu0 0.0
    %2344 = vmatprep.subr.mxu0 0.0
    %2345 = vmatpush1.msra.mxu0 0.0
    %2346 = vmatprep.subr.mxu0 0.0
    %2347 = vmatpush1.msra.mxu0 0.0
    %2348 = vmatprep.subr.mxu0 0.0
    %2349 = vmatpush1.msra.mxu0 0.0
    %2350 = vmatprep.subr.mxu0 0.0
    %2351 = vmatpush1.msra.mxu0 0.0
    %2352 = vmatprep.subr.mxu0 0.0
    %2353 = vmatpush1.msra.mxu0 0.0
    %2354 = vmatprep.subr.mxu0 0.0
    %2355 = vmatpush1.msra.mxu0 0.0
    %2356 = vmatprep.subr.mxu0 0.0
    %2357 = vmatpush1.msra.mxu0 0.0
    %2358 = vmatprep.subr.mxu0 0.0
    %2359 = vmatpush1.msra.mxu0 0.0
    %2360 = vmatprep.subr.mxu0 0.0
    %2361 = vmatpush1.msra.mxu0 0.0
    %2362 = vmatprep.subr.mxu0 0.0
    %2363 = vmatpush1.msra.mxu0 0.0
    %2364 = vmatprep.subr.mxu0 0.0
    %2365 = vmatpush1.msra.mxu0 0.0
    %2366 = vmatprep.subr.mxu0 0.0
    %2367 = vmatpush1.msra.mxu0 0.0
    %2368 = vmatprep.subr.mxu0 0.0
    %2369 = vmatpush1.msra.mxu0 0.0
    %2370 = vmatprep.mubr.f32.mxu0 0.0
    %2371 = vmatmul.mubr.f32.gmra.mrb[0].mxu0 %v2079
    %v2372 = vpop.f32.mrb[0].mxu0
    %v2373 = vadd.f32 0.0, %v2372
    %v2374 = vpop.f32.mrb[0].mxu0
    %2375 = vdwg.mxu0
    %v2376 = vadd.f32 %v2303, %v2373
    %v2377 = vxor.u32 %v2376, 2147483648
    %v2378 = vmul.f32 %v2377, 1.442695
    %v2379 = vpow.pop %v2378
    %v2380 = vadd.f32 %v2379, 1.0
    %v2381 = vrcp.pop %v2380
    %v2382 = vmul.f32 1.0, %v2381
    %v2383 = vtanh.pop %v2376
    %2384 = vrot.lane.b32.xlu0 %v2383, 64
    %v2385 = vpop.permute.xlu0 %2384
    %v2386 = vmul.f32 %v2382, %v2385
    %v2387 = vsel %vm182, %v2386, 0.0
    %2388 = vrot.lane.b32.xlu0 %v2387, 32
    %v2389 = vpop.permute.xlu0 %2388
    %2390 = vrot.lane.b32.xlu0 %v2387, 96
    %v2391 = vpop.permute.xlu0 %2390
    %v2392 = vadd.f32 %v2389, %v2391
    %v2393 = vmul.f32 %v2382, %v2075
    %v2394 = vadd.f32 %v2393, %v2392
    %v2395 = vtanh.pop %v2394
    %2396 = vrot.lane.b32.xlu0 %v2395, 64
    %v2397 = vpop.permute.xlu0 %2396
    %v2398 = vmul.f32 %v2382, %v2397
    %2399 = vmatprep.subr.mxu0 0.0
    %2400 = vmatpush1.msra.mxu0 %v131
    %2401 = vmatprep.subr.mxu0 0.0
    %2402 = vmatpush1.msra.mxu0 %v132
    %2403 = vmatprep.subr.mxu0 0.0
    %2404 = vmatpush1.msra.mxu0 %v133
    %2405 = vmatprep.subr.mxu0 0.0
    %2406 = vmatpush1.msra.mxu0 %v134
    %2407 = vmatprep.subr.mxu0 0.0
    %2408 = vmatpush1.msra.mxu0 %v135
    %2409 = vmatprep.subr.mxu0 0.0
    %2410 = vmatpush1.msra.mxu0 %v136
    %2411 = vmatprep.subr.mxu0 0.0
    %2412 = vmatpush1.msra.mxu0 %v137
    %2413 = vmatprep.subr.mxu0 0.0
    %2414 = vmatpush1.msra.mxu0 %v138
    %2415 = vmatprep.subr.mxu0 0.0
    %2416 = vmatpush1.msra.mxu0 %v139
    %2417 = vmatprep.subr.mxu0 0.0
    %2418 = vmatpush1.msra.mxu0 %v140
    %2419 = vmatprep.subr.mxu0 0.0
    %2420 = vmatpush1.msra.mxu0 %v141
    %2421 = vmatprep.subr.mxu0 0.0
    %2422 = vmatpush1.msra.mxu0 %v142
    %2423 = vmatprep.subr.mxu0 0.0
    %2424 = vmatpush1.msra.mxu0 %v143
    %2425 = vmatprep.subr.mxu0 0.0
    %2426 = vmatpush1.msra.mxu0 %v144
    %2427 = vmatprep.subr.mxu0 0.0
    %2428 = vmatpush1.msra.mxu0 %v145
    %2429 = vmatprep.subr.mxu0 0.0
    %2430 = vmatpush1.msra.mxu0 %v146
    %2431 = vmatprep.subr.mxu0 0.0
    %2432 = vmatpush1.msra.mxu0 0.0
    %2433 = vmatprep.subr.mxu0 0.0
    %2434 = vmatpush1.msra.mxu0 0.0
    %2435 = vmatprep.subr.mxu0 0.0
    %2436 = vmatpush1.msra.mxu0 0.0
    %2437 = vmatprep.subr.mxu0 0.0
    %2438 = vmatpush1.msra.mxu0 0.0
    %2439 = vmatprep.subr.mxu0 0.0
    %2440 = vmatpush1.msra.mxu0 0.0
    %2441 = vmatprep.subr.mxu0 0.0
    %2442 = vmatpush1.msra.mxu0 0.0
    %2443 = vmatprep.subr.mxu0 0.0
    %2444 = vmatpush1.msra.mxu0 0.0
    %2445 = vmatprep.subr.mxu0 0.0
    %2446 = vmatpush1.msra.mxu0 0.0
    %2447 = vmatprep.subr.mxu0 0.0
    %2448 = vmatpush1.msra.mxu0 0.0
    %2449 = vmatprep.subr.mxu0 0.0
    %2450 = vmatpush1.msra.mxu0 0.0
    %2451 = vmatprep.subr.mxu0 0.0
    %2452 = vmatpush1.msra.mxu0 0.0
    %2453 = vmatprep.subr.mxu0 0.0
    %2454 = vmatpush1.msra.mxu0 0.0
    %2455 = vmatprep.subr.mxu0 0.0
    %2456 = vmatpush1.msra.mxu0 0.0
    %2457 = vmatprep.subr.mxu0 0.0
    %2458 = vmatpush1.msra.mxu0 0.0
    %2459 = vmatprep.subr.mxu0 0.0
    %2460 = vmatpush1.msra.mxu0 0.0
    %2461 = vmatprep.subr.mxu0 0.0
    %2462 = vmatpush1.msra.mxu0 0.0
    %2463 = vmatprep.mubr.f32.mxu0 0.0
    %2464 = vmatmul.mubr.f32.gmra.mrb[0].mxu0 %v2234
    %v2465 = vpop.f32.mrb[0].mxu0
    %v2466 = vadd.f32 0.0, %v2465
    %v2467 = vpop.f32.mrb[0].mxu0
    %2468 = vdwg.mxu0
    %v2470 = vrot.slane %v2466, 1
    %v2471 = vrot.slane %v2466, 2
    %v2474 = vadd.f32 %v123, %v2470
    %v2475 = vadd.f32 %v128, %v2471
    %v2476 = vxor.u32 %v2474, 2147483648
    %v2477 = vxor.u32 %v2475, 2147483648
    %v2478 = vmul.f32 %v2476, 1.442695
    %v2479 = vpow.pop %v2478
    %v2480 = vmul.f32 %v2477, 1.442695
    %v2481 = vpow.pop %v2480
    %v2482 = vadd.f32 %v2479, 1.0
    %v2483 = vadd.f32 %v2481, 1.0
    %v2484 = vrcp.pop %v2482
    %v2485 = vmul.f32 1.0, %v2484
    %v2486 = vrcp.pop %v2483
    %v2487 = vmul.f32 1.0, %v2486
    %v2488 = vtanh.pop %v2474
    %v2489 = vtanh.pop %v2475
    %v2492 = vrot.slane %v2488, 7
    %v2493 = vrot.slane %v2489, 6
    %v2494 = vsel %vm276, %v2493, %v2492
    %2496 = vrot.lane.b32.xlu0 %v2494, 64
    %v2497 = vpop.permute.xlu0 %2496
    %v2499 = vrot.slane %v2497, 1
    %v2500 = vrot.slane %v2497, 2
    %v2503 = vmul.f32 %v2485, %v2499
    %v2504 = vmul.f32 %v2487, %v2500
    %v2507 = vrot.slane %v2503, 7
    %v2508 = vrot.slane %v2504, 6
    %v2509 = vsel %vm276, %v2508, %v2507
    %v2511 = vsel %vm182, %v2509, 0.0
    %2512 = vrot.lane.b32.xlu0 %v2511, 32
    %v2513 = vpop.permute.xlu0 %2512
    %2514 = vrot.lane.b32.xlu0 %v2511, 96
    %v2515 = vpop.permute.xlu0 %2514
    %v2516 = vadd.f32 %v2513, %v2515
    %v2519 = vrot.slane %v2211, 7
    %v2520 = vrot.slane %v2212, 7
    %v2523 = vmul.f32 %v2485, %v2519
    %v2524 = vmul.f32 %v2487, %v2520
    %v2526 = vrot.slane %v2516, 1
    %v2527 = vrot.slane %v2516, 2
    %v2530 = vadd.f32 %v2523, %v2526
    %v2531 = vadd.f32 %v2524, %v2527
    %v2532 = vtanh.pop %v2530
    %v2533 = vtanh.pop %v2531
    %v2536 = vrot.slane %v2532, 7
    %v2537 = vrot.slane %v2533, 6
    %v2538 = vsel %vm276, %v2537, %v2536
    %2540 = vrot.lane.b32.xlu0 %v2538, 64
    %v2541 = vpop.permute.xlu0 %2540
    %v2543 = vrot.slane %v2541, 1
    %v2544 = vrot.slane %v2541, 2
    %v2547 = vmul.f32 %v2485, %v2543
    %v2548 = vmul.f32 %v2487, %v2544
    %v2551 = vrot.slane %v2547, 7
    %v2552 = vrot.slane %v2548, 6
    %v2553 = vsel %vm276, %v2552, %v2551
    %2555 = vmatprep.subr.mxu0 0.0
    %2556 = vmatpush1.msra.mxu0 %v163
    %2557 = vmatprep.subr.mxu0 0.0
    %2558 = vmatpush1.msra.mxu0 %v164
    %2559 = vmatprep.subr.mxu0 0.0
    %2560 = vmatpush1.msra.mxu0 %v165
    %2561 = vmatprep.subr.mxu0 0.0
    %2562 = vmatpush1.msra.mxu0 %v166
    %2563 = vmatprep.subr.mxu0 0.0
    %2564 = vmatpush1.msra.mxu0 %v167
    %2565 = vmatprep.subr.mxu0 0.0
    %2566 = vmatpush1.msra.mxu0 %v168
    %2567 = vmatprep.subr.mxu0 0.0
    %2568 = vmatpush1.msra.mxu0 %v169
    %2569 = vmatprep.subr.mxu0 0.0
    %2570 = vmatpush1.msra.mxu0 %v170
    %2571 = vmatprep.subr.mxu0 0.0
    %2572 = vmatpush1.msra.mxu0 %v171
    %2573 = vmatprep.subr.mxu0 0.0
    %2574 = vmatpush1.msra.mxu0 %v172
    %2575 = vmatprep.subr.mxu0 0.0
    %2576 = vmatpush1.msra.mxu0 %v173
    %2577 = vmatprep.subr.mxu0 0.0
    %2578 = vmatpush1.msra.mxu0 %v174
    %2579 = vmatprep.subr.mxu0 0.0
    %2580 = vmatpush1.msra.mxu0 %v175
    %2581 = vmatprep.subr.mxu0 0.0
    %2582 = vmatpush1.msra.mxu0 %v176
    %2583 = vmatprep.subr.mxu0 0.0
    %2584 = vmatpush1.msra.mxu0 %v177
    %2585 = vmatprep.subr.mxu0 0.0
    %2586 = vmatpush1.msra.mxu0 %v178
    %2587 = vmatprep.subr.mxu0 0.0
    %2588 = vmatpush1.msra.mxu0 0.0
    %2589 = vmatprep.subr.mxu0 0.0
    %2590 = vmatpush1.msra.mxu0 0.0
    %2591 = vmatprep.subr.mxu0 0.0
    %2592 = vmatpush1.msra.mxu0 0.0
    %2593 = vmatprep.subr.mxu0 0.0
    %2594 = vmatpush1.msra.mxu0 0.0
    %2595 = vmatprep.subr.mxu0 0.0
    %2596 = vmatpush1.msra.mxu0 0.0
    %2597 = vmatprep.subr.mxu0 0.0
    %2598 = vmatpush1.msra.mxu0 0.0
    %2599 = vmatprep.subr.mxu0 0.0
    %2600 = vmatpush1.msra.mxu0 0.0
    %2601 = vmatprep.subr.mxu0 0.0
    %2602 = vmatpush1.msra.mxu0 0.0
    %2603 = vmatprep.subr.mxu0 0.0
    %2604 = vmatpush1.msra.mxu0 0.0
    %2605 = vmatprep.subr.mxu0 0.0
    %2606 = vmatpush1.msra.mxu0 0.0
    %2607 = vmatprep.subr.mxu0 0.0
    %2608 = vmatpush1.msra.mxu0 0.0
    %2609 = vmatprep.subr.mxu0 0.0
    %2610 = vmatpush1.msra.mxu0 0.0
    %2611 = vmatprep.subr.mxu0 0.0
    %2612 = vmatpush1.msra.mxu0 0.0
    %2613 = vmatprep.subr.mxu0 0.0
    %2614 = vmatpush1.msra.mxu0 0.0
    %2615 = vmatprep.subr.mxu0 0.0
    %2616 = vmatpush1.msra.mxu0 0.0
    %2617 = vmatprep.subr.mxu0 0.0
    %2618 = vmatpush1.msra.mxu0 0.0
    %2619 = vmatprep.mubr.f32.mxu0 0.0
    %2620 = vmatmul.mubr.f32.gmra.mrb[0].mxu0 %v2553
    %v2621 = vpop.f32.mrb[0].mxu0
    %v2622 = vadd.f32 %v324, %v2621
    %v2623 = vpop.f32.mrb[0].mxu0
    %2624 = vdwg.mxu0
    %2625 = vmatprep.subr.mxu0 0.0
    %2626 = vmatpush1.msra.mxu0 %v147
    %2627 = vmatprep.subr.mxu0 0.0
    %2628 = vmatpush1.msra.mxu0 %v148
    %2629 = vmatprep.subr.mxu0 0.0
    %2630 = vmatpush1.msra.mxu0 %v149
    %2631 = vmatprep.subr.mxu0 0.0
    %2632 = vmatpush1.msra.mxu0 %v150
    %2633 = vmatprep.subr.mxu0 0.0
    %2634 = vmatpush1.msra.mxu0 %v151
    %2635 = vmatprep.subr.mxu0 0.0
    %2636 = vmatpush1.msra.mxu0 %v152
    %2637 = vmatprep.subr.mxu0 0.0
    %2638 = vmatpush1.msra.mxu0 %v153
    %2639 = vmatprep.subr.mxu0 0.0
    %2640 = vmatpush1.msra.mxu0 %v154
    %2641 = vmatprep.subr.mxu0 0.0
    %2642 = vmatpush1.msra.mxu0 %v155
    %2643 = vmatprep.subr.mxu0 0.0
    %2644 = vmatpush1.msra.mxu0 %v156
    %2645 = vmatprep.subr.mxu0 0.0
    %2646 = vmatpush1.msra.mxu0 %v157
    %2647 = vmatprep.subr.mxu0 0.0
    %2648 = vmatpush1.msra.mxu0 %v158
    %2649 = vmatprep.subr.mxu0 0.0
    %2650 = vmatpush1.msra.mxu0 %v159
    %2651 = vmatprep.subr.mxu0 0.0
    %2652 = vmatpush1.msra.mxu0 %v160
    %2653 = vmatprep.subr.mxu0 0.0
    %2654 = vmatpush1.msra.mxu0 %v161
    %2655 = vmatprep.subr.mxu0 0.0
    %2656 = vmatpush1.msra.mxu0 %v162
    %2657 = vmatprep.subr.mxu0 0.0
    %2658 = vmatpush1.msra.mxu0 0.0
    %2659 = vmatprep.subr.mxu0 0.0
    %2660 = vmatpush1.msra.mxu0 0.0
    %2661 = vmatprep.subr.mxu0 0.0
    %2662 = vmatpush1.msra.mxu0 0.0
    %2663 = vmatprep.subr.mxu0 0.0
    %2664 = vmatpush1.msra.mxu0 0.0
    %2665 = vmatprep.subr.mxu0 0.0
    %2666 = vmatpush1.msra.mxu0 0.0
    %2667 = vmatprep.subr.mxu0 0.0
    %2668 = vmatpush1.msra.mxu0 0.0
    %2669 = vmatprep.subr.mxu0 0.0
    %2670 = vmatpush1.msra.mxu0 0.0
    %2671 = vmatprep.subr.mxu0 0.0
    %2672 = vmatpush1.msra.mxu0 0.0
    %2673 = vmatprep.subr.mxu0 0.0
    %2674 = vmatpush1.msra.mxu0 0.0
    %2675 = vmatprep.subr.mxu0 0.0
    %2676 = vmatpush1.msra.mxu0 0.0
    %2677 = vmatprep.subr.mxu0 0.0
    %2678 = vmatpush1.msra.mxu0 0.0
    %2679 = vmatprep.subr.mxu0 0.0
    %2680 = vmatpush1.msra.mxu0 0.0
    %2681 = vmatprep.subr.mxu0 0.0
    %2682 = vmatpush1.msra.mxu0 0.0
    %2683 = vmatprep.subr.mxu0 0.0
    %2684 = vmatpush1.msra.mxu0 0.0
    %2685 = vmatprep.subr.mxu0 0.0
    %2686 = vmatpush1.msra.mxu0 0.0
    %2687 = vmatprep.subr.mxu0 0.0
    %2688 = vmatpush1.msra.mxu0 0.0
    %2689 = vmatprep.mubr.f32.mxu0 0.0
    %2690 = vmatmul.mubr.f32.gmra.mrb[0].mxu0 %v2398
    %v2691 = vpop.f32.mrb[0].mxu0
    %v2692 = vadd.f32 0.0, %v2691
    %v2693 = vpop.f32.mrb[0].mxu0
    %2694 = vdwg.mxu0
    %v2695 = vadd.f32 %v2622, %v2692
    %v2696 = vxor.u32 %v2695, 2147483648
    %v2697 = vmul.f32 %v2696, 1.442695
    %v2698 = vpow.pop %v2697
    %v2699 = vadd.f32 %v2698, 1.0
    %v2700 = vrcp.pop %v2699
    %v2701 = vmul.f32 1.0, %v2700
    %v2702 = vtanh.pop %v2695
    %2703 = vrot.lane.b32.xlu0 %v2702, 64
    %v2704 = vpop.permute.xlu0 %2703
    %v2705 = vmul.f32 %v2701, %v2704
    %v2706 = vsel %vm182, %v2705, 0.0
    %2707 = vrot.lane.b32.xlu0 %v2706, 32
    %v2708 = vpop.permute.xlu0 %2707
    %2709 = vrot.lane.b32.xlu0 %v2706, 96
    %v2710 = vpop.permute.xlu0 %2709
    %v2711 = vadd.f32 %v2708, %v2710
    %v2712 = vmul.f32 %v2701, %v2394
    %v2713 = vadd.f32 %v2712, %v2711
    %v2714 = vtanh.pop %v2713
    %2715 = vrot.lane.b32.xlu0 %v2714, 64
    %v2716 = vpop.permute.xlu0 %2715
    %v2717 = vmul.f32 %v2701, %v2716
    %v2718 = vld [vmem:[#allocation5 + $0x1a0] sm:$0xff]
    %v2719 = vld [vmem:[#allocation5 + $0x1a8] sm:$0xff]
    %v2720 = vld [vmem:[#allocation5 + $0x1b0] sm:$0xff]
    %v2721 = vld [vmem:[#allocation5 + $0x1b8] sm:$0xff]
    %v2722 = vld [vmem:[#allocation5 + $0x1c0] sm:$0xff]
    %v2723 = vld [vmem:[#allocation5 + $0x1c8] sm:$0xff]
    %v2724 = vld [vmem:[#allocation5 + $0x1d0] sm:$0xff]
    %v2725 = vld [vmem:[#allocation5 + $0x1d8] sm:$0xff]
    %v2726 = vld [vmem:[#allocation5 + $0x1e0] sm:$0xff]
    %v2727 = vld [vmem:[#allocation5 + $0x1e8] sm:$0xff]
    %v2728 = vld [vmem:[#allocation5 + $0x1f0] sm:$0xff]
    %v2729 = vld [vmem:[#allocation5 + $0x1f8] sm:$0xff]
    %v2730 = vld [vmem:[#allocation5 + $0x200] sm:$0xff]
    %v2731 = vld [vmem:[#allocation5 + $0x208] sm:$0xff]
    %v2732 = vld [vmem:[#allocation5 + $0x210] sm:$0xff]
    %v2733 = vld [vmem:[#allocation5 + $0x218] sm:$0xff]
    %v2734 = vld [vmem:[#allocation5 + $0x220] sm:$0x1]
    %v2735 = vlaneseq
    %v2736 = vshrl.u32 %v2735, 7
    %v2737 = vsub.s32 0, %v2736
    %v2738 = vrot.slane %v2734, %v2737
    %2739 = vmatprep.subr.mxu0 0.0
    %2740 = vmatpush1.msra.mxu0 %v2718
    %2741 = vmatprep.subr.mxu0 0.0
    %2742 = vmatpush1.msra.mxu0 %v2719
    %2743 = vmatprep.subr.mxu0 0.0
    %2744 = vmatpush1.msra.mxu0 %v2720
    %2745 = vmatprep.subr.mxu0 0.0
    %2746 = vmatpush1.msra.mxu0 %v2721
    %2747 = vmatprep.subr.mxu0 0.0
    %2748 = vmatpush1.msra.mxu0 %v2722
    %2749 = vmatprep.subr.mxu0 0.0
    %2750 = vmatpush1.msra.mxu0 %v2723
    %2751 = vmatprep.subr.mxu0 0.0
    %2752 = vmatpush1.msra.mxu0 %v2724
    %2753 = vmatprep.subr.mxu0 0.0
    %2754 = vmatpush1.msra.mxu0 %v2725
    %2755 = vmatprep.subr.mxu0 0.0
    %2756 = vmatpush1.msra.mxu0 %v2726
    %2757 = vmatprep.subr.mxu0 0.0
    %2758 = vmatpush1.msra.mxu0 %v2727
    %2759 = vmatprep.subr.mxu0 0.0
    %2760 = vmatpush1.msra.mxu0 %v2728
    %2761 = vmatprep.subr.mxu0 0.0
    %2762 = vmatpush1.msra.mxu0 %v2729
    %2763 = vmatprep.subr.mxu0 0.0
    %2764 = vmatpush1.msra.mxu0 %v2730
    %2765 = vmatprep.subr.mxu0 0.0
    %2766 = vmatpush1.msra.mxu0 %v2731
    %2767 = vmatprep.subr.mxu0 0.0
    %2768 = vmatpush1.msra.mxu0 %v2732
    %2769 = vmatprep.subr.mxu0 0.0
    %2770 = vmatpush1.msra.mxu0 %v2733
    %2771 = vmatprep.subr.mxu0 0.0
    %2772 = vmatpush1.msra.mxu0 0.0
    %2773 = vmatprep.subr.mxu0 0.0
    %2774 = vmatpush1.msra.mxu0 0.0
    %2775 = vmatprep.subr.mxu0 0.0
    %2776 = vmatpush1.msra.mxu0 0.0
    %2777 = vmatprep.subr.mxu0 0.0
    %2778 = vmatpush1.msra.mxu0 0.0
    %2779 = vmatprep.subr.mxu0 0.0
    %2780 = vmatpush1.msra.mxu0 0.0
    %2781 = vmatprep.subr.mxu0 0.0
    %2782 = vmatpush1.msra.mxu0 0.0
    %2783 = vmatprep.subr.mxu0 0.0
    %2784 = vmatpush1.msra.mxu0 0.0
    %2785 = vmatprep.subr.mxu0 0.0
    %2786 = vmatpush1.msra.mxu0 0.0
    %2787 = vmatprep.subr.mxu0 0.0
    %2788 = vmatpush1.msra.mxu0 0.0
    %2789 = vmatprep.subr.mxu0 0.0
    %2790 = vmatpush1.msra.mxu0 0.0
    %2791 = vmatprep.subr.mxu0 0.0
    %2792 = vmatpush1.msra.mxu0 0.0
    %2793 = vmatprep.subr.mxu0 0.0
    %2794 = vmatpush1.msra.mxu0 0.0
    %2795 = vmatprep.subr.mxu0 0.0
    %2796 = vmatpush1.msra.mxu0 0.0
    %2797 = vmatprep.subr.mxu0 0.0
    %2798 = vmatpush1.msra.mxu0 0.0
    %2799 = vmatprep.subr.mxu0 0.0
    %2800 = vmatpush1.msra.mxu0 0.0
    %2801 = vmatprep.subr.mxu0 0.0
    %2802 = vmatpush1.msra.mxu0 0.0
    %2803 = vmatprep.mubr.f32.mxu0 0.0
    %2804 = vmatmul.mubr.f32.gmra.mrb[0].mxu0 %v2717
    %v2805 = vpop.f32.mrb[0].mxu0
    %v2806 = vadd.f32 %v2738, %v2805
    %v2807 = vpop.f32.mrb[0].mxu0
    %2808 = vdwg.mxu0
    %vm2809 = vcmask 25600
    %2810 = vst.msk [vmem:[#allocation7] sm:$0x3] %vm2809, %v2806
    // Predicated region
    $region18: #{lstm_kf_forward.1} parent=1 // pred_check
      _
    $region19: #{lstm_kf_forward.1} parent=1 // pred_check_branch
      %2812 = sbr.rel (0) target = $region21
    $region20: #{lstm_kf_forward.1} parent=1 // pred_region
      %s2814 = ssub.s32 32, 32
      %2815 = vsyncadd [#allocation4], %s2814
      %s2817 = sshll.u32 [#allocation7], 4
      %s2818 = int_to_ptr.vmem [resolvable:$true] %s2817
      %2820 = dma.vmem_to_hbm [thread:$0]  %s2818, 32, %s2, [#allocation4]
    $region21: #{lstm_kf_forward.1} parent=1 // pred_fallthru
      _
    // Predicated region
    $region22: #{lstm_kf_forward.1} parent=1 // pred_check
      _
    $region23: #{lstm_kf_forward.1} parent=1 // pred_check_branch
      %2822 = sbr.rel (0) target = $region25
    $region24: #{lstm_kf_forward.1} parent=1 // pred_region
      %2823 = dma.done [#allocation4], 32
    $region25: #{lstm_kf_forward.1} parent=1 // pred_fallthru
      _
    %2824 = vsyncpa [#allocation3], 1
    %2825 = vsyncpa [#allocation6], 1
    %2826 = vsyncpa [#allocation4], 1

</llo_original>
